<compile_context>
chip_gen: v7x
topology: tpu7x:2x2x1
jax: 0.10.0
libtpu: 0.0.40
codegen_flags: <defaults>
</compile_context>

<pallas_src>
import functools

import jax
import jax.numpy as jnp
from jax.experimental import pallas as pl
from jax.experimental.pallas import tpu as pltpu

# ----------------------------- config -----------------------------
VOCAB = 128
EMBED = 32
NUM_HEADS = 2
HEAD_DIM = EMBED // NUM_HEADS
FFN = 64
NUM_LAYERS = 2
GRU_H = 16
MAX_POS = 64
MASK_ID = 5
LN_EPS = 1e-12

VMEM = pl.BlockSpec(memory_space=pltpu.MemorySpace.VMEM)


def _ln(x, g, b):
    mu = jnp.mean(x, axis=-1, keepdims=True)
    var = jnp.mean((x - mu) ** 2, axis=-1, keepdims=True)
    return (x - mu) * jax.lax.rsqrt(var + LN_EPS) * g + b


# ------------------ kernel 1: emb LayerNorm + GRU input proj ------------------
def _emb_ln_proj_kernel(x_ref, g_ref, b_ref, wih_ref, bih_ref, ln_ref, xp_ref):
    y = _ln(x_ref[...], g_ref[...], b_ref[...])
    ln_ref[...] = y
    xp_ref[...] = (jnp.dot(y, wih_ref[...], preferred_element_type=jnp.float32)
                   + bih_ref[...])


def emb_ln_gru_proj(x_raw, gamma, beta, w_ih_cat, b_cat):
    M, E = x_raw.shape
    N = w_ih_cat.shape[1]
    return pl.pallas_call(
        _emb_ln_proj_kernel,
        out_shape=(jax.ShapeDtypeStruct((M, E), jnp.float32),
                   jax.ShapeDtypeStruct((M, N), jnp.float32)),
        in_specs=[VMEM] * 5,
        out_specs=(VMEM, VMEM),
    )(x_raw, gamma.reshape(1, E), beta.reshape(1, E), w_ih_cat,
      b_cat.reshape(1, N))


# ------------------ kernel 2: bidirectional GRU recurrence ------------------
def _bigru_kernel(xg_ref, whh_ref, bhn_ref, out_ref, h_ref):
    """One direction per grid step. xg: (S, B, 3H) precomputed input gates
    (b_ir+b_hr, b_iz+b_hz, b_in already folded). whh: (H, 3H) recurrent
    weights (transposed, gate-concatenated). bhn: (1, H)."""
    h_ref[...] = jnp.zeros_like(h_ref)
    S = xg_ref.shape[0]
    H = h_ref.shape[1]

    @pl.loop(0, S)
    def _(t):
        h = h_ref[...]
        g = jnp.dot(h, whh_ref[...], preferred_element_type=jnp.float32)  # (B,3H)
        xg = xg_ref[t]                                                    # (B,3H)
        r = jax.nn.sigmoid(xg[:, :H] + g[:, :H])
        z = jax.nn.sigmoid(xg[:, H:2 * H] + g[:, H:2 * H])
        n = jnp.tanh(xg[:, 2 * H:] + r * (g[:, 2 * H:] + bhn_ref[...]))
        h_new = (1.0 - z) * n + z * h
        h_ref[...] = h_new
        out_ref[t] = h_new


def bigru(xg, whh, bhn):
    _, S, B, H3 = xg.shape
    H = whh.shape[1]
    return pl.pallas_call(
        _bigru_kernel,
        out_shape=jax.ShapeDtypeStruct((2, S, B, H), jnp.float32),
        grid=(2,),
        in_specs=[pl.BlockSpec((None, S, B, H3), lambda d: (d, 0, 0, 0)),
                  pl.BlockSpec((None, H, H3), lambda d: (d, 0, 0)),
                  pl.BlockSpec((None, 1, H), lambda d: (d, 0, 0))],
        out_specs=pl.BlockSpec((None, S, B, H), lambda d: (d, 0, 0, 0)),
        scratch_shapes=[pltpu.VMEM((B, H), jnp.float32)],
        compiler_params=pltpu.CompilerParams(
            dimension_semantics=("parallel",)),
    )(xg, whh, bhn)


# ------- kernel 3: detector head + soft mask + encoder stack + output head -------
def _encoder_stack_kernel(o2d_ref, wlin_ref, blin_ref, emb_ref, me_ref,
                          wqkv_ref, bqkv_ref, wo_ref, bo_ref,
                          ln1g_ref, ln1b_ref, w1_ref, b1_ref,
                          w2_ref, b2_ref, ln2g_ref, ln2b_ref,
                          outw_ref, outb_ref,
                          out_ref, p_ref,
                          x_ref, ctx_ref,
                          *, batch, seq, heads, head_dim):
    l = pl.program_id(0)
    E = heads * head_dim

    # detector probability (tiny (M,2H)@(2H,1) matmul); recomputed per layer
    # so the output buffer is written on every grid step.
    p = jax.nn.sigmoid(
        jnp.dot(o2d_ref[...], wlin_ref[...],
                preferred_element_type=jnp.float32) + blin_ref[...])
    p_ref[...] = p

    # soft-mask mix initialises the carried activation at layer 0 only.
    @pl.when(l == 0)
    def _():
        x_ref[...] = p * me_ref[...] + (1.0 - p) * emb_ref[...]

    x = x_ref[...]                                               # (M, E)
    qkv = (jnp.dot(x, wqkv_ref[...], preferred_element_type=jnp.float32)
           + bqkv_ref[...])                                      # (M, 3E)
    q = qkv[:, :E]
    k = qkv[:, E:2 * E]
    v = qkv[:, 2 * E:]

    # per-(batch, head) attention, statically unrolled; 1/sqrt(D) folded into
    # Wq wrapper-side; softmax reciprocal goes to the EUP slot.
    for b in range(batch):
        r0, r1 = b * seq, (b + 1) * seq
        for h in range(heads):
            c0, c1 = h * head_dim, (h + 1) * head_dim
            qh = q[r0:r1, c0:c1]
            kh = k[r0:r1, c0:c1]
            vh = v[r0:r1, c0:c1]
            s = jnp.dot(qh, kh.T, preferred_element_type=jnp.float32)
            m = jnp.max(s, axis=-1, keepdims=True)
            e = jnp.exp(s - m)
            pr = e * pl.reciprocal(jnp.sum(e, axis=-1, keepdims=True),
                                   approx=True)
            ctx_ref[r0:r1, c0:c1] = jnp.dot(
                pr, vh, preferred_element_type=jnp.float32)

    ctx = ctx_ref[...]
    attn = (jnp.dot(ctx, wo_ref[...], preferred_element_type=jnp.float32)
            + bo_ref[...])
    h1 = _ln(attn + x, ln1g_ref[...], ln1b_ref[...])
    # TODO(synk): HF BERT uses exact erf-gelu; tanh approximation kept for
    # robust Mosaic lowering (~1e-3 numeric difference).
    ff = jax.nn.gelu(
        jnp.dot(h1, w1_ref[...], preferred_element_type=jnp.float32)
        + b1_ref[...], approximate=True)
    ff2 = (jnp.dot(ff, w2_ref[...], preferred_element_type=jnp.float32)
           + b2_ref[...])
    x_new = _ln(ff2 + h1, ln2g_ref[...], ln2b_ref[...])
    x_ref[...] = x_new                                           # carry to next layer

    # final residual + vocab linear + log-softmax, only on the last layer.
    @pl.when(l == pl.num_programs(0) - 1)
    def _():
        hfin = x_new + emb_ref[...]
        logits = (jnp.dot(hfin, outw_ref[...],
                          preferred_element_type=jnp.float32) + outb_ref[...])
        m = jnp.max(logits, axis=-1, keepdims=True)
        lse = jnp.log(jnp.sum(jnp.exp(logits - m), axis=-1, keepdims=True)) + m
        out_ref[...] = logits - lse


def encoder_stack(o2d, w_lin, b_lin, emb2d, masked_e,
                  wqkv, bqkv, wo, bo, ln1g, ln1b, w1, b1, w2, b2, ln2g, ln2b,
                  out_w, out_b, batch, seq):
    M = batch * seq
    E = EMBED

    def const2(shape):
        return pl.BlockSpec(shape, lambda l: (0, 0))

    def layer3(shape):
        return pl.BlockSpec((None,) + shape, lambda l: (l, 0, 0))

    in_specs = [
        const2((M, 2 * GRU_H)),        # o2d
        const2((2 * GRU_H, 1)),        # w_lin
        const2((1, 1)),                # b_lin
        const2((M, E)),                # bert_embedding (post-LN)
        const2((1, E)),                # masked_e (post-LN [MASK] row)
        layer3((E, 3 * E)),            # wqkv
        layer3((1, 3 * E)),            # bqkv
        layer3((E, E)),                # wo
        layer3((1, E)),                # bo
        layer3((1, E)),                # ln1_g
        layer3((1, E)),                # ln1_b
        layer3((E, FFN)),              # w1
        layer3((1, FFN)),              # b1
        layer3((FFN, E)),              # w2
        layer3((1, E)),                # b2
        layer3((1, E)),                # ln2_g
        layer3((1, E)),                # ln2_b
        const2((E, VOCAB)),            # out_w
        const2((1, VOCAB)),            # out_b
    ]
    out_specs = (pl.BlockSpec((M, VOCAB), lambda l: (0, 0)),
                 pl.BlockSpec((M, 1), lambda l: (0, 0)))

    return pl.pallas_call(
        functools.partial(_encoder_stack_kernel, batch=batch, seq=seq,
                          heads=NUM_HEADS, head_dim=HEAD_DIM),
        out_shape=(jax.ShapeDtypeStruct((M, VOCAB), jnp.float32),
                   jax.ShapeDtypeStruct((M, 1), jnp.float32)),
        grid=(NUM_LAYERS,),
        in_specs=in_specs,
        out_specs=out_specs,
        scratch_shapes=[pltpu.VMEM((M, E), jnp.float32),     # carried activation
                        pltpu.VMEM((M, E), jnp.float32)],    # attention context
        compiler_params=pltpu.CompilerParams(
            dimension_semantics=("arbitrary",)),
    )(o2d, w_lin, b_lin, emb2d, masked_e,
      wqkv, bqkv, wo, bo, ln1g, ln1b, w1, b1, w2, b2, ln2g, ln2b,
      out_w, out_b)


# ----------------------------- model glue -----------------------------
@jax.jit
def soft_masked_bert_forward(params, input_ids, input_mask, segment_ids):
    # Matching the PyTorch reference forward: input_mask / segment_ids are
    # accepted but not used (embeddings/encoder are called without them).
    del input_mask, segment_ids
    B, S = input_ids.shape
    M = B * S
    H = GRU_H
    E = EMBED

    # raw (pre-LN) embeddings for the B*S tokens + [MASK]-token row appended
    we = params["word_emb"][input_ids]                    # gather (XLA glue)
    pe = params["pos_emb"][:S][None, :, :]
    te = params["type_emb"][0][None, None, :]
    emb_raw = (we + pe + te).reshape(M, E)
    mask_raw = (params["word_emb"][MASK_ID] + params["pos_emb"][0]
                + params["type_emb"][0]).reshape(1, E)
    emb_raw = jnp.concatenate([emb_raw, mask_raw], axis=0)        # (M+1, E)

    dp = params["detector"]
    # both GRU directions' input-gate projections in one (E, 6H) matmul;
    # recurrent biases b_hr/b_hz folded into the precomputed gates.
    w_ih_cat = jnp.concatenate([dp["w_ih_f"].T, dp["w_ih_b"].T], axis=1)
    fold_f = dp["b_ih_f"] + jnp.concatenate(
        [dp["b_hh_f"][:2 * H], jnp.zeros((H,), jnp.float32)])
    fold_b = dp["b_ih_b"] + jnp.concatenate(
        [dp["b_hh_b"][:2 * H], jnp.zeros((H,), jnp.float32)])
    b_cat = jnp.concatenate([fold_f, fold_b])

    ln_all, xp_all = emb_ln_gru_proj(emb_raw, params["emb_ln_g"],
                                     params["emb_ln_b"], w_ih_cat, b_cat)
    bert_embedding = ln_all[:M]                                   # (M, E)
    masked_e = ln_all[M:M + 1]                                    # (1, E)
    xp = xp_all[:M].reshape(B, S, 6 * H)

    xf = xp[..., :3 * H].transpose(1, 0, 2)                       # (S, B, 3H)
    xb = xp[:, ::-1, 3 * H:].transpose(1, 0, 2)                   # time-reversed
    xg = jnp.stack([xf, xb], axis=0)                              # (2, S, B, 3H)
    whh = jnp.stack([dp["w_hh_f"].T, dp["w_hh_b"].T], axis=0)     # (2, H, 3H)
    bhn = jnp.stack([dp["b_hh_f"][2 * H:], dp["b_hh_b"][2 * H:]],
                    axis=0).reshape(2, 1, H)

    hid = bigru(xg, whh, bhn)                                     # (2, S, B, H)
    of = hid[0].transpose(1, 0, 2)                                # (B, S, H)
    ob = hid[1].transpose(1, 0, 2)[:, ::-1, :]                    # (B, S, H)
    o2d = jnp.concatenate([of, ob], axis=-1).reshape(M, 2 * H)

    # stack encoder layer weights along the leading (grid) axis; attention
    # scale folded into Wq / bq.
    scale = 1.0 / (HEAD_DIM ** 0.5)
    layers = params["layers"]
    wqkv = jnp.stack([jnp.concatenate(
        [lp["wq"] * scale, lp["wk"], lp["wv"]], axis=1) for lp in layers])
    bqkv = jnp.stack([jnp.concatenate(
        [lp["bq"] * scale, lp["bk"], lp["bv"]]).reshape(1, 3 * E)
        for lp in layers])
    wo = jnp.stack([lp["wo"] for lp in layers])
    bo = jnp.stack([lp["bo"].reshape(1, E) for lp in layers])
    ln1g = jnp.stack([lp["ln1_g"].reshape(1, E) for lp in layers])
    ln1b = jnp.stack([lp["ln1_b"].reshape(1, E) for lp in layers])
    w1 = jnp.stack([lp["w1"] for lp in layers])
    b1 = jnp.stack([lp["b1"].reshape(1, FFN) for lp in layers])
    w2 = jnp.stack([lp["w2"] for lp in layers])
    b2 = jnp.stack([lp["b2"].reshape(1, E) for lp in layers])
    ln2g = jnp.stack([lp["ln2_g"].reshape(1, E) for lp in layers])
    ln2b = jnp.stack([lp["ln2_b"].reshape(1, E) for lp in layers])

    out2d, p2d = encoder_stack(
        o2d, dp["w_lin"], dp["b_lin"].reshape(1, 1), bert_embedding, masked_e,
        wqkv, bqkv, wo, bo, ln1g, ln1b, w1, b1, w2, b2, ln2g, ln2b,
        params["out_w"], params["out_b"].reshape(1, VOCAB), B, S)

    return out2d.reshape(B, S, VOCAB), p2d.reshape(B, S, 1)


# ----------------------------- params -----------------------------
def init_params(key):
    def nrm(k, shape, s=0.02):
        return jax.random.normal(k, shape, jnp.float32) * s

    keys = iter(jax.random.split(key, 64))
    params = {
        "word_emb": nrm(next(keys), (VOCAB, EMBED)),
        "pos_emb": nrm(next(keys), (MAX_POS, EMBED)),
        "type_emb": nrm(next(keys), (2, EMBED)),
        "emb_ln_g": jnp.ones((EMBED,), jnp.float32),
        "emb_ln_b": jnp.zeros((EMBED,), jnp.float32),
        "out_w": nrm(next(keys), (EMBED, VOCAB)),
        "out_b": jnp.zeros((VOCAB,), jnp.float32),
    }
    det = {
        "w_ih_f": nrm(next(keys), (3 * GRU_H, EMBED), 0.1),
        "w_hh_f": nrm(next(keys), (3 * GRU_H, GRU_H), 0.1),
        "b_ih_f": jnp.zeros((3 * GRU_H,), jnp.float32),
        "b_hh_f": jnp.zeros((3 * GRU_H,), jnp.float32),
        "w_ih_b": nrm(next(keys), (3 * GRU_H, EMBED), 0.1),
        "w_hh_b": nrm(next(keys), (3 * GRU_H, GRU_H), 0.1),
        "b_ih_b": jnp.zeros((3 * GRU_H,), jnp.float32),
        "b_hh_b": jnp.zeros((3 * GRU_H,), jnp.float32),
        "w_lin": nrm(next(keys), (2 * GRU_H, 1), 0.1),
        "b_lin": jnp.zeros((1,), jnp.float32),
    }
    params["detector"] = det
    layers = []
    for _ in range(NUM_LAYERS):
        layers.append({
            "wq": nrm(next(keys), (EMBED, EMBED)),
            "bq": jnp.zeros((EMBED,), jnp.float32),
            "wk": nrm(next(keys), (EMBED, EMBED)),
            "bk": jnp.zeros((EMBED,), jnp.float32),
            "wv": nrm(next(keys), (EMBED, EMBED)),
            "bv": jnp.zeros((EMBED,), jnp.float32),
            "wo": nrm(next(keys), (EMBED, EMBED)),
            "bo": jnp.zeros((EMBED,), jnp.float32),
            "ln1_g": jnp.ones((EMBED,), jnp.float32),
            "ln1_b": jnp.zeros((EMBED,), jnp.float32),
            "w1": nrm(next(keys), (EMBED, FFN)),
            "b1": jnp.zeros((FFN,), jnp.float32),
            "w2": nrm(next(keys), (FFN, EMBED)),
            "b2": jnp.zeros((EMBED,), jnp.float32),
            "ln2_g": jnp.ones((EMBED,), jnp.float32),
            "ln2_b": jnp.zeros((EMBED,), jnp.float32),
        })
    params["layers"] = layers
    return params


# ----------------------------- main -----------------------------
if __name__ == "__main__":
    key = jax.random.PRNGKey(0)
    pkey, dkey = jax.random.split(key)
    params = init_params(pkey)

    B, S = 2, 8
    input_ids = jax.random.randint(dkey, (B, S), 0, VOCAB, dtype=jnp.int32)
    input_mask = jnp.ones((B, S), jnp.int32)
    segment_ids = jnp.zeros((B, S), jnp.int32)

    out, p = soft_masked_bert_forward(params, input_ids, input_mask, segment_ids)
    out, p = jax.block_until_ready((out, p))

    assert out.shape == (B, S, VOCAB)
    assert p.shape == (B, S, 1)
    assert bool(jnp.all(jnp.isfinite(out))) and bool(jnp.all(jnp.isfinite(p)))
    print("KERNEL_OK")
</pallas_src>

<mosaic_0001>
module attributes {stable_mosaic.version = 11 : i64} {
  func.func @_emb_ln_proj_kernel(%arg0: memref<17x32xf32, #tpu.memory_space<vmem>>, %arg1: memref<1x32xf32, #tpu.memory_space<vmem>>, %arg2: memref<1x32xf32, #tpu.memory_space<vmem>>, %arg3: memref<32x96xf32, #tpu.memory_space<vmem>>, %arg4: memref<1x96xf32, #tpu.memory_space<vmem>>, %arg5: memref<17x32xf32, #tpu.memory_space<vmem>>, %arg6: memref<17x96xf32, #tpu.memory_space<vmem>>) attributes {dimension_semantics = [], scalar_prefetch = 0 : i64, scratch_operands = 0 : i64, tpu.core_type = #tpu.core_type<tc>} {
    %c0 = arith.constant 0 : index
    %c0_0 = arith.constant 0 : index
    %0 = vector.load %arg0[%c0, %c0_0] : memref<17x32xf32, #tpu.memory_space<vmem>>, vector<17x32xf32>
    %c0_1 = arith.constant 0 : index
    %c0_2 = arith.constant 0 : index
    %1 = vector.load %arg1[%c0_1, %c0_2] : memref<1x32xf32, #tpu.memory_space<vmem>>, vector<1x32xf32>
    %c0_3 = arith.constant 0 : index
    %c0_4 = arith.constant 0 : index
    %2 = vector.load %arg2[%c0_3, %c0_4] : memref<1x32xf32, #tpu.memory_space<vmem>>, vector<1x32xf32>
    %cst = arith.constant dense<0.000000e+00> : vector<17xf32>
    %3 = vector.multi_reduction <add>, %0, %cst [1] : vector<17x32xf32> to vector<17xf32>
    %4 = vector.shape_cast %3 : vector<17xf32> to vector<17x1xf32>
    %cst_5 = arith.constant 3.200000e+01 : f32
    %5 = vector.broadcast %cst_5 : f32 to vector<17x1xf32>
    %6 = arith.divf %4, %5 : vector<17x1xf32>
    %7 = vector.broadcast %6 : vector<17x1xf32> to vector<17x32xf32>
    %8 = arith.subf %0, %7 : vector<17x32xf32>
    %9 = arith.mulf %8, %8 : vector<17x32xf32>
    %cst_6 = arith.constant dense<0.000000e+00> : vector<17xf32>
    %10 = vector.multi_reduction <add>, %9, %cst_6 [1] : vector<17x32xf32> to vector<17xf32>
    %11 = vector.shape_cast %10 : vector<17xf32> to vector<17x1xf32>
    %cst_7 = arith.constant 3.200000e+01 : f32
    %12 = vector.broadcast %cst_7 : f32 to vector<17x1xf32>
    %13 = arith.divf %11, %12 : vector<17x1xf32>
    %14 = vector.broadcast %6 : vector<17x1xf32> to vector<17x32xf32>
    %15 = arith.subf %0, %14 : vector<17x32xf32>
    %cst_8 = arith.constant 9.99999996E-13 : f32
    %16 = vector.broadcast %cst_8 : f32 to vector<17x1xf32>
    %17 = arith.addf %13, %16 : vector<17x1xf32>
    %18 = math.rsqrt %17 : vector<17x1xf32>
    %19 = vector.broadcast %18 : vector<17x1xf32> to vector<17x32xf32>
    %20 = arith.mulf %15, %19 : vector<17x32xf32>
    %21 = vector.broadcast %1 : vector<1x32xf32> to vector<17x32xf32>
    %22 = arith.mulf %20, %21 : vector<17x32xf32>
    %23 = vector.broadcast %2 : vector<1x32xf32> to vector<17x32xf32>
    %24 = arith.addf %22, %23 : vector<17x32xf32>
    %c0_9 = arith.constant 0 : index
    %c0_10 = arith.constant 0 : index
    %25 = vector.load %arg5[%c0_9, %c0_10] : memref<17x32xf32, #tpu.memory_space<vmem>>, vector<17x32xf32>
    tpu.vector_store %arg5[%c0_9, %c0_10], %24 {strides = array<i32>} : memref<17x32xf32, #tpu.memory_space<vmem>>, vector<17x32xf32>,
    %c0_11 = arith.constant 0 : index
    %c0_12 = arith.constant 0 : index
    %26 = vector.load %arg3[%c0_11, %c0_12] : memref<32x96xf32, #tpu.memory_space<vmem>>, vector<32x96xf32>
    %cst_13 = arith.constant dense<0.000000e+00> : vector<17x96xf32>
    %27 = tpu.matmul %24, %26, %cst_13 {dimension_numbers = #tpu.dot_dimension_numbers<[1], [0], [0], [1], [0, 0, 1, 1], [], []>} : vector<17x32xf32>, vector<32x96xf32>, vector<17x96xf32> -> vector<17x96xf32>
    %c0_14 = arith.constant 0 : index
    %c0_15 = arith.constant 0 : index
    %28 = vector.load %arg4[%c0_14, %c0_15] : memref<1x96xf32, #tpu.memory_space<vmem>>, vector<1x96xf32>
    %29 = vector.broadcast %28 : vector<1x96xf32> to vector<17x96xf32>
    %30 = arith.addf %27, %29 : vector<17x96xf32>
    %c0_16 = arith.constant 0 : index
    %c0_17 = arith.constant 0 : index
    %31 = vector.load %arg6[%c0_16, %c0_17] : memref<17x96xf32, #tpu.memory_space<vmem>>, vector<17x96xf32>
    tpu.vector_store %arg6[%c0_16, %c0_17], %30 {strides = array<i32>} : memref<17x96xf32, #tpu.memory_space<vmem>>, vector<17x96xf32>,
    return
  }
}

module attributes {stable_mosaic.version = 11 : i64} {
  func.func @_bigru_kernel(%arg0: i32, %arg1: memref<1x8x2x48xf32, #tpu.memory_space<vmem>>, %arg2: memref<1x16x48xf32, #tpu.memory_space<vmem>>, %arg3: memref<1x1x16xf32, #tpu.memory_space<vmem>>, %arg4: memref<1x8x2x16xf32, #tpu.memory_space<vmem>>, %arg5: memref<2x16xf32, #tpu.memory_space<vmem>>) attributes {dimension_semantics = [#tpu.dimension_semantics<parallel>], iteration_bounds = array<i64: 2>, scalar_prefetch = 0 : i64, scratch_operands = 1 : i64, tpu.core_type = #tpu.core_type<tc>, window_params = [{transform_indices = @transform_0, window_bounds = array<i64: 1, 8, 2, 48>}, {transform_indices = @transform_1, window_bounds = array<i64: 1, 16, 48>}, {transform_indices = @transform_2, window_bounds = array<i64: 1, 1, 16>}, {transform_indices = @transform_3, window_bounds = array<i64: 1, 8, 2, 16>}]} {
    %cst = arith.constant 0.000000e+00 : f32
    %0 = vector.broadcast %cst : f32 to vector<2x16xf32>
    %c0 = arith.constant 0 : index
    %c0_0 = arith.constant 0 : index
    %1 = vector.load %arg5[%c0, %c0_0] : memref<2x16xf32, #tpu.memory_space<vmem>>, vector<2x16xf32>
    tpu.vector_store %arg5[%c0, %c0_0], %0 {strides = array<i32>} : memref<2x16xf32, #tpu.memory_space<vmem>>, vector<2x16xf32>,
    %c0_i32 = arith.constant 0 : i32
    %c8_i32 = arith.constant 8 : i32
    %2 = arith.addi %c0_i32, %c8_i32 : i32
    %c1_i32 = arith.constant 1 : i32
    scf.for %arg6 = %c0_i32 to %2 step %c1_i32  : i32 {
      %c1_i32_2 = arith.constant 1 : i32
      %3 = arith.muli %arg6, %c1_i32_2 : i32
      %c0_i32_3 = arith.constant 0 : i32
      %4 = arith.addi %c0_i32_3, %3 : i32
      %c0_4 = arith.constant 0 : index
      %c0_5 = arith.constant 0 : index
      %5 = vector.load %arg5[%c0_4, %c0_5] : memref<2x16xf32, #tpu.memory_space<vmem>>, vector<2x16xf32>
      %c0_6 = arith.constant 0 : index
      %c0_7 = arith.constant 0 : index
      %c0_8 = arith.constant 0 : index
      %6 = vector.load %arg2[%c0_6, %c0_7, %c0_8] : memref<1x16x48xf32, #tpu.memory_space<vmem>>, vector<1x16x48xf32>
      %7 = vector.shape_cast %6 : vector<1x16x48xf32> to vector<16x48xf32>
      %cst_9 = arith.constant dense<0.000000e+00> : vector<2x48xf32>
      %8 = tpu.matmul %5, %7, %cst_9 {dimension_numbers = #tpu.dot_dimension_numbers<[1], [0], [0], [1], [0, 0, 1, 1], [], []>} : vector<2x16xf32>, vector<16x48xf32>, vector<2x48xf32> -> vector<2x48xf32>
      %c0_10 = arith.constant 0 : index
      %9 = arith.index_cast %4 : i32 to index
      %c0_11 = arith.constant 0 : index
      %c0_12 = arith.constant 0 : index
      %10 = vector.load %arg1[%c0_10, %9, %c0_11, %c0_12] : memref<1x8x2x48xf32, #tpu.memory_space<vmem>>, vector<1x1x2x48xf32>
      %11 = vector.shape_cast %10 : vector<1x1x2x48xf32> to vector<2x48xf32>
      %12 = vector.extract_strided_slice %11 {offsets = [0, 0], sizes = [2, 16], strides = [1, 1]} : vector<2x48xf32> to vector<2x16xf32>
      %13 = vector.extract_strided_slice %8 {offsets = [0, 0], sizes = [2, 16], strides = [1, 1]} : vector<2x48xf32> to vector<2x16xf32>
      %14 = arith.addf %12, %13 : vector<2x16xf32>
      %15 = arith.negf %14 : vector<2x16xf32>
      %16 = math.exp %15 : vector<2x16xf32>
      %cst_13 = arith.constant 1.000000e+00 : f32
      %17 = vector.broadcast %cst_13 : f32 to vector<2x16xf32>
      %18 = arith.addf %17, %16 : vector<2x16xf32>
      %19 = arith.divf %17, %18 : vector<2x16xf32>
      %20 = vector.extract_strided_slice %11 {offsets = [0, 16], sizes = [2, 16], strides = [1, 1]} : vector<2x48xf32> to vector<2x16xf32>
      %21 = vector.extract_strided_slice %8 {offsets = [0, 16], sizes = [2, 16], strides = [1, 1]} : vector<2x48xf32> to vector<2x16xf32>
      %22 = arith.addf %20, %21 : vector<2x16xf32>
      %23 = arith.negf %22 : vector<2x16xf32>
      %24 = math.exp %23 : vector<2x16xf32>
      %cst_14 = arith.constant 1.000000e+00 : f32
      %25 = vector.broadcast %cst_14 : f32 to vector<2x16xf32>
      %26 = arith.addf %25, %24 : vector<2x16xf32>
      %27 = arith.divf %25, %26 : vector<2x16xf32>
      %28 = vector.extract_strided_slice %11 {offsets = [0, 32], sizes = [2, 16], strides = [1, 1]} : vector<2x48xf32> to vector<2x16xf32>
      %29 = vector.extract_strided_slice %8 {offsets = [0, 32], sizes = [2, 16], strides = [1, 1]} : vector<2x48xf32> to vector<2x16xf32>
      %c0_15 = arith.constant 0 : index
      %c0_16 = arith.constant 0 : index
      %c0_17 = arith.constant 0 : index
      %30 = vector.load %arg3[%c0_15, %c0_16, %c0_17] : memref<1x1x16xf32, #tpu.memory_space<vmem>>, vector<1x1x16xf32>
      %31 = vector.shape_cast %30 : vector<1x1x16xf32> to vector<1x16xf32>
      %32 = vector.broadcast %31 : vector<1x16xf32> to vector<2x16xf32>
      %33 = arith.addf %29, %32 : vector<2x16xf32>
      %34 = arith.mulf %19, %33 : vector<2x16xf32>
      %35 = arith.addf %28, %34 : vector<2x16xf32>
      %36 = math.tanh %35 : vector<2x16xf32>
      %cst_18 = arith.constant 1.000000e+00 : f32
      %37 = vector.broadcast %cst_18 : f32 to vector<2x16xf32>
      %38 = arith.subf %37, %27 : vector<2x16xf32>
      %39 = arith.mulf %38, %36 : vector<2x16xf32>
      %40 = arith.mulf %27, %5 : vector<2x16xf32>
      %41 = arith.addf %39, %40 : vector<2x16xf32>
      %c0_19 = arith.constant 0 : index
      %c0_20 = arith.constant 0 : index
      %42 = vector.load %arg5[%c0_19, %c0_20] : memref<2x16xf32, #tpu.memory_space<vmem>>, vector<2x16xf32>
      tpu.vector_store %arg5[%c0_19, %c0_20], %41 {strides = array<i32>} : memref<2x16xf32, #tpu.memory_space<vmem>>, vector<2x16xf32>,
      %c0_21 = arith.constant 0 : index
      %43 = arith.index_cast %4 : i32 to index
      %c0_22 = arith.constant 0 : index
      %c0_23 = arith.constant 0 : index
      %44 = vector.load %arg4[%c0_21, %43, %c0_22, %c0_23] : memref<1x8x2x16xf32, #tpu.memory_space<vmem>>, vector<1x1x2x16xf32>
      %45 = vector.shape_cast %44 : vector<1x1x2x16xf32> to vector<2x16xf32>
      %46 = vector.shape_cast %41 : vector<2x16xf32> to vector<1x1x2x16xf32>
      tpu.vector_store %arg4[%c0_21, %43, %c0_22, %c0_23], %46 {strides = array<i32>} : memref<1x8x2x16xf32, #tpu.memory_space<vmem>>, vector<1x1x2x16xf32>,
    }
    %c8_i32_1 = arith.constant 8 : i32
    return
  }
  func.func @transform_0(%arg0: i32) -> (i32, i32, i32, i32) {
    %c0_i32 = arith.constant 0 : i32
    %c0_i32_0 = arith.constant 0 : i32
    %c0_i32_1 = arith.constant 0 : i32
    %c0_i32_2 = arith.constant 0 : i32
    return %arg0, %c0_i32, %c0_i32_0, %c0_i32_1 : i32, i32, i32, i32
  }
  func.func @transform_1(%arg0: i32) -> (i32, i32, i32) {
    %c0_i32 = arith.constant 0 : i32
    %c0_i32_0 = arith.constant 0 : i32
    %c0_i32_1 = arith.constant 0 : i32
    return %arg0, %c0_i32, %c0_i32_0 : i32, i32, i32
  }
  func.func @transform_2(%arg0: i32) -> (i32, i32, i32) {
    %c0_i32 = arith.constant 0 : i32
    %c0_i32_0 = arith.constant 0 : i32
    %c0_i32_1 = arith.constant 0 : i32
    return %arg0, %c0_i32, %c0_i32_0 : i32, i32, i32
  }
  func.func @transform_3(%arg0: i32) -> (i32, i32, i32, i32) {
    %c0_i32 = arith.constant 0 : i32
    %c0_i32_0 = arith.constant 0 : i32
    %c0_i32_1 = arith.constant 0 : i32
    %c0_i32_2 = arith.constant 0 : i32
    return %arg0, %c0_i32, %c0_i32_0, %c0_i32_1 : i32, i32, i32, i32
  }
}

module attributes {stable_mosaic.version = 11 : i64} {
  func.func @_encoder_stack_kernel(%arg0: i32, %arg1: memref<16x32xf32, #tpu.memory_space<vmem>>, %arg2: memref<32x1xf32, #tpu.memory_space<vmem>>, %arg3: memref<1x1xf32, #tpu.memory_space<vmem>>, %arg4: memref<16x32xf32, #tpu.memory_space<vmem>>, %arg5: memref<1x32xf32, #tpu.memory_space<vmem>>, %arg6: memref<1x32x96xf32, #tpu.memory_space<vmem>>, %arg7: memref<1x1x96xf32, #tpu.memory_space<vmem>>, %arg8: memref<1x32x32xf32, #tpu.memory_space<vmem>>, %arg9: memref<1x1x32xf32, #tpu.memory_space<vmem>>, %arg10: memref<1x1x32xf32, #tpu.memory_space<vmem>>, %arg11: memref<1x1x32xf32, #tpu.memory_space<vmem>>, %arg12: memref<1x32x64xf32, #tpu.memory_space<vmem>>, %arg13: memref<1x1x64xf32, #tpu.memory_space<vmem>>, %arg14: memref<1x64x32xf32, #tpu.memory_space<vmem>>, %arg15: memref<1x1x32xf32, #tpu.memory_space<vmem>>, %arg16: memref<1x1x32xf32, #tpu.memory_space<vmem>>, %arg17: memref<1x1x32xf32, #tpu.memory_space<vmem>>, %arg18: memref<32x128xf32, #tpu.memory_space<vmem>>, %arg19: memref<1x128xf32, #tpu.memory_space<vmem>>, %arg20: memref<16x128xf32, #tpu.memory_space<vmem>>, %arg21: memref<16x1xf32, #tpu.memory_space<vmem>>, %arg22: memref<16x32xf32, #tpu.memory_space<vmem>>, %arg23: memref<16x32xf32, #tpu.memory_space<vmem>>) attributes {dimension_semantics = [#tpu.dimension_semantics<arbitrary>], iteration_bounds = array<i64: 2>, scalar_prefetch = 0 : i64, scratch_operands = 2 : i64, tpu.core_type = #tpu.core_type<tc>, window_params = [{pipeline_mode = #tpu.pipeline_mode<synchronous>, transform_indices = @transform_0, window_bounds = array<i64: 16, 32>}, {pipeline_mode = #tpu.pipeline_mode<synchronous>, transform_indices = @transform_1, window_bounds = array<i64: 32, 1>}, {pipeline_mode = #tpu.pipeline_mode<synchronous>, transform_indices = @transform_2, window_bounds = array<i64: 1, 1>}, {pipeline_mode = #tpu.pipeline_mode<synchronous>, transform_indices = @transform_3, window_bounds = array<i64: 16, 32>}, {pipeline_mode = #tpu.pipeline_mode<synchronous>, transform_indices = @transform_4, window_bounds = array<i64: 1, 32>}, {transform_indices = @transform_5, window_bounds = array<i64: 1, 32, 96>}, {transform_indices = @transform_6, window_bounds = array<i64: 1, 1, 96>}, {transform_indices = @transform_7, window_bounds = array<i64: 1, 32, 32>}, {transform_indices = @transform_8, window_bounds = array<i64: 1, 1, 32>}, {transform_indices = @transform_9, window_bounds = array<i64: 1, 1, 32>}, {transform_indices = @transform_10, window_bounds = array<i64: 1, 1, 32>}, {transform_indices = @transform_11, window_bounds = array<i64: 1, 32, 64>}, {transform_indices = @transform_12, window_bounds = array<i64: 1, 1, 64>}, {transform_indices = @transform_13, window_bounds = array<i64: 1, 64, 32>}, {transform_indices = @transform_14, window_bounds = array<i64: 1, 1, 32>}, {transform_indices = @transform_15, window_bounds = array<i64: 1, 1, 32>}, {transform_indices = @transform_16, window_bounds = array<i64: 1, 1, 32>}, {pipeline_mode = #tpu.pipeline_mode<synchronous>, transform_indices = @transform_17, window_bounds = array<i64: 32, 128>}, {pipeline_mode = #tpu.pipeline_mode<synchronous>, transform_indices = @transform_18, window_bounds = array<i64: 1, 128>}, {pipeline_mode = #tpu.pipeline_mode<synchronous>, transform_indices = @transform_19, window_bounds = array<i64: 16, 128>}, {pipeline_mode = #tpu.pipeline_mode<synchronous>, transform_indices = @transform_20, window_bounds = array<i64: 16, 1>}]} {
    %c0 = arith.constant 0 : index
    %c0_0 = arith.constant 0 : index
    %0 = vector.load %arg1[%c0, %c0_0] : memref<16x32xf32, #tpu.memory_space<vmem>>, vector<16x32xf32>
    %c0_1 = arith.constant 0 : index
    %c0_2 = arith.constant 0 : index
    %1 = vector.load %arg2[%c0_1, %c0_2] : memref<32x1xf32, #tpu.memory_space<vmem>>, vector<32x1xf32>
    %cst = arith.constant dense<0.000000e+00> : vector<16x1xf32>
    %2 = tpu.matmul %0, %1, %cst {dimension_numbers = #tpu.dot_dimension_numbers<[1], [0], [0], [1], [0, 0, 1, 1], [], []>} : vector<16x32xf32>, vector<32x1xf32>, vector<16x1xf32> -> vector<16x1xf32>
    %c0_3 = arith.constant 0 : index
    %c0_4 = arith.constant 0 : index
    %3 = vector.load %arg3[%c0_3, %c0_4] : memref<1x1xf32, #tpu.memory_space<vmem>>, vector<1x1xf32>
    %4 = vector.broadcast %3 : vector<1x1xf32> to vector<16x1xf32>
    %5 = arith.addf %2, %4 : vector<16x1xf32>
    %6 = arith.negf %5 : vector<16x1xf32>
    %7 = math.exp %6 : vector<16x1xf32>
    %cst_5 = arith.constant 1.000000e+00 : f32
    %8 = vector.broadcast %cst_5 : f32 to vector<16x1xf32>
    %9 = arith.addf %8, %7 : vector<16x1xf32>
    %10 = arith.divf %8, %9 : vector<16x1xf32>
    %c0_6 = arith.constant 0 : index
    %c0_7 = arith.constant 0 : index
    %11 = vector.load %arg21[%c0_6, %c0_7] : memref<16x1xf32, #tpu.memory_space<vmem>>, vector<16x1xf32>
    tpu.vector_store %arg21[%c0_6, %c0_7], %10 {strides = array<i32>} : memref<16x1xf32, #tpu.memory_space<vmem>>, vector<16x1xf32>,
    %c0_i32 = arith.constant 0 : i32
    %12 = arith.cmpi eq, %arg0, %c0_i32 : i32
    %13 = arith.extui %12 : i1 to i32
    %c0_i32_8 = arith.constant 0 : i32
    %14 = arith.cmpi ne, %13, %c0_i32_8 : i32
    scf.if %14 {
      %c0_92 = arith.constant 0 : index
      %c0_93 = arith.constant 0 : index
      %187 = vector.load %arg5[%c0_92, %c0_93] : memref<1x32xf32, #tpu.memory_space<vmem>>, vector<1x32xf32>
      %188 = vector.broadcast %10 : vector<16x1xf32> to vector<16x32xf32>
      %189 = vector.broadcast %187 : vector<1x32xf32> to vector<16x32xf32>
      %190 = arith.mulf %188, %189 : vector<16x32xf32>
      %cst_94 = arith.constant 1.000000e+00 : f32
      %191 = vector.broadcast %cst_94 : f32 to vector<16x1xf32>
      %192 = arith.subf %191, %10 : vector<16x1xf32>
      %c0_95 = arith.constant 0 : index
      %c0_96 = arith.constant 0 : index
      %193 = vector.load %arg4[%c0_95, %c0_96] : memref<16x32xf32, #tpu.memory_space<vmem>>, vector<16x32xf32>
      %194 = vector.broadcast %192 : vector<16x1xf32> to vector<16x32xf32>
      %195 = arith.mulf %194, %193 : vector<16x32xf32>
      %196 = arith.addf %190, %195 : vector<16x32xf32>
      %c0_97 = arith.constant 0 : index
      %c0_98 = arith.constant 0 : index
      %197 = vector.load %arg22[%c0_97, %c0_98] : memref<16x32xf32, #tpu.memory_space<vmem>>, vector<16x32xf32>
      tpu.vector_store %arg22[%c0_97, %c0_98], %196 {strides = array<i32>} : memref<16x32xf32, #tpu.memory_space<vmem>>, vector<16x32xf32>,
    } else {
    }
    %c0_9 = arith.constant 0 : index
    %c0_10 = arith.constant 0 : index
    %15 = vector.load %arg22[%c0_9, %c0_10] : memref<16x32xf32, #tpu.memory_space<vmem>>, vector<16x32xf32>
    %c0_11 = arith.constant 0 : index
    %c0_12 = arith.constant 0 : index
    %c0_13 = arith.constant 0 : index
    %16 = vector.load %arg6[%c0_11, %c0_12, %c0_13] : memref<1x32x96xf32, #tpu.memory_space<vmem>>, vector<1x32x96xf32>
    %17 = vector.shape_cast %16 : vector<1x32x96xf32> to vector<32x96xf32>
    %cst_14 = arith.constant dense<0.000000e+00> : vector<16x96xf32>
    %18 = tpu.matmul %15, %17, %cst_14 {dimension_numbers = #tpu.dot_dimension_numbers<[1], [0], [0], [1], [0, 0, 1, 1], [], []>} : vector<16x32xf32>, vector<32x96xf32>, vector<16x96xf32> -> vector<16x96xf32>
    %c0_15 = arith.constant 0 : index
    %c0_16 = arith.constant 0 : index
    %c0_17 = arith.constant 0 : index
    %19 = vector.load %arg7[%c0_15, %c0_16, %c0_17] : memref<1x1x96xf32, #tpu.memory_space<vmem>>, vector<1x1x96xf32>
    %20 = vector.shape_cast %19 : vector<1x1x96xf32> to vector<1x96xf32>
    %21 = vector.broadcast %20 : vector<1x96xf32> to vector<16x96xf32>
    %22 = arith.addf %18, %21 : vector<16x96xf32>
    %23 = vector.extract_strided_slice %22 {offsets = [0, 0], sizes = [16, 32], strides = [1, 1]} : vector<16x96xf32> to vector<16x32xf32>
    %24 = vector.extract_strided_slice %22 {offsets = [0, 32], sizes = [16, 32], strides = [1, 1]} : vector<16x96xf32> to vector<16x32xf32>
    %25 = vector.extract_strided_slice %22 {offsets = [0, 64], sizes = [16, 32], strides = [1, 1]} : vector<16x96xf32> to vector<16x32xf32>
    %26 = vector.extract_strided_slice %23 {offsets = [0, 0], sizes = [8, 16], strides = [1, 1]} : vector<16x32xf32> to vector<8x16xf32>
    %27 = vector.extract_strided_slice %24 {offsets = [0, 0], sizes = [8, 16], strides = [1, 1]} : vector<16x32xf32> to vector<8x16xf32>
    %28 = vector.extract_strided_slice %25 {offsets = [0, 0], sizes = [8, 16], strides = [1, 1]} : vector<16x32xf32> to vector<8x16xf32>
    %29 = tpu.transpose %27, [1, 0] : vector<8x16xf32> -> vector<16x8xf32>
    %cst_18 = arith.constant dense<0.000000e+00> : vector<8x8xf32>
    %30 = tpu.matmul %26, %29, %cst_18 {dimension_numbers = #tpu.dot_dimension_numbers<[1], [0], [0], [1], [0, 0, 1, 1], [], []>} : vector<8x16xf32>, vector<16x8xf32>, vector<8x8xf32> -> vector<8x8xf32>
    %cst_19 = arith.constant dense<0xFF800000> : vector<8xf32>
    %31 = vector.multi_reduction <maximumf>, %30, %cst_19 [1] : vector<8x8xf32> to vector<8xf32>
    %32 = vector.shape_cast %31 : vector<8xf32> to vector<8x1xf32>
    %33 = vector.broadcast %32 : vector<8x1xf32> to vector<8x8xf32>
    %34 = arith.subf %30, %33 : vector<8x8xf32>
    %35 = math.exp %34 : vector<8x8xf32>
    %cst_20 = arith.constant dense<0.000000e+00> : vector<8xf32>
    %36 = vector.multi_reduction <add>, %35, %cst_20 [1] : vector<8x8xf32> to vector<8xf32>
    %37 = vector.shape_cast %36 : vector<8xf32> to vector<8x1xf32>
    %38 = tpu.reciprocal %37 {approx = true} : vector<8x1xf32> -> vector<8x1xf32>
    %39 = vector.broadcast %38 : vector<8x1xf32> to vector<8x8xf32>
    %40 = arith.mulf %35, %39 : vector<8x8xf32>
    %cst_21 = arith.constant dense<0.000000e+00> : vector<8x16xf32>
    %41 = tpu.matmul %40, %28, %cst_21 {dimension_numbers = #tpu.dot_dimension_numbers<[1], [0], [0], [1], [0, 0, 1, 1], [], []>} : vector<8x8xf32>, vector<8x16xf32>, vector<8x16xf32> -> vector<8x16xf32>
    %c0_22 = arith.constant 0 : index
    %c0_23 = arith.constant 0 : index
    %42 = vector.load %arg23[%c0_22, %c0_23] : memref<16x32xf32, #tpu.memory_space<vmem>>, vector<8x16xf32>
    tpu.vector_store %arg23[%c0_22, %c0_23], %41 {strides = array<i32>} : memref<16x32xf32, #tpu.memory_space<vmem>>, vector<8x16xf32>,
    %43 = vector.extract_strided_slice %23 {offsets = [0, 16], sizes = [8, 16], strides = [1, 1]} : vector<16x32xf32> to vector<8x16xf32>
    %44 = vector.extract_strided_slice %24 {offsets = [0, 16], sizes = [8, 16], strides = [1, 1]} : vector<16x32xf32> to vector<8x16xf32>
    %45 = vector.extract_strided_slice %25 {offsets = [0, 16], sizes = [8, 16], strides = [1, 1]} : vector<16x32xf32> to vector<8x16xf32>
    %46 = tpu.transpose %44, [1, 0] : vector<8x16xf32> -> vector<16x8xf32>
    %cst_24 = arith.constant dense<0.000000e+00> : vector<8x8xf32>
    %47 = tpu.matmul %43, %46, %cst_24 {dimension_numbers = #tpu.dot_dimension_numbers<[1], [0], [0], [1], [0, 0, 1, 1], [], []>} : vector<8x16xf32>, vector<16x8xf32>, vector<8x8xf32> -> vector<8x8xf32>
    %cst_25 = arith.constant dense<0xFF800000> : vector<8xf32>
    %48 = vector.multi_reduction <maximumf>, %47, %cst_25 [1] : vector<8x8xf32> to vector<8xf32>
    %49 = vector.shape_cast %48 : vector<8xf32> to vector<8x1xf32>
    %50 = vector.broadcast %49 : vector<8x1xf32> to vector<8x8xf32>
    %51 = arith.subf %47, %50 : vector<8x8xf32>
    %52 = math.exp %51 : vector<8x8xf32>
    %cst_26 = arith.constant dense<0.000000e+00> : vector<8xf32>
    %53 = vector.multi_reduction <add>, %52, %cst_26 [1] : vector<8x8xf32> to vector<8xf32>
    %54 = vector.shape_cast %53 : vector<8xf32> to vector<8x1xf32>
    %55 = tpu.reciprocal %54 {approx = true} : vector<8x1xf32> -> vector<8x1xf32>
    %56 = vector.broadcast %55 : vector<8x1xf32> to vector<8x8xf32>
    %57 = arith.mulf %52, %56 : vector<8x8xf32>
    %cst_27 = arith.constant dense<0.000000e+00> : vector<8x16xf32>
    %58 = tpu.matmul %57, %45, %cst_27 {dimension_numbers = #tpu.dot_dimension_numbers<[1], [0], [0], [1], [0, 0, 1, 1], [], []>} : vector<8x8xf32>, vector<8x16xf32>, vector<8x16xf32> -> vector<8x16xf32>
    %c0_28 = arith.constant 0 : index
    %c16 = arith.constant 16 : index
    %59 = vector.load %arg23[%c0_28, %c16] : memref<16x32xf32, #tpu.memory_space<vmem>>, vector<8x16xf32>
    tpu.vector_store %arg23[%c0_28, %c16], %58 {strides = array<i32>} : memref<16x32xf32, #tpu.memory_space<vmem>>, vector<8x16xf32>,
    %60 = vector.extract_strided_slice %23 {offsets = [8, 0], sizes = [8, 16], strides = [1, 1]} : vector<16x32xf32> to vector<8x16xf32>
    %61 = vector.extract_strided_slice %24 {offsets = [8, 0], sizes = [8, 16], strides = [1, 1]} : vector<16x32xf32> to vector<8x16xf32>
    %62 = vector.extract_strided_slice %25 {offsets = [8, 0], sizes = [8, 16], strides = [1, 1]} : vector<16x32xf32> to vector<8x16xf32>
    %63 = tpu.transpose %61, [1, 0] : vector<8x16xf32> -> vector<16x8xf32>
    %cst_29 = arith.constant dense<0.000000e+00> : vector<8x8xf32>
    %64 = tpu.matmul %60, %63, %cst_29 {dimension_numbers = #tpu.dot_dimension_numbers<[1], [0], [0], [1], [0, 0, 1, 1], [], []>} : vector<8x16xf32>, vector<16x8xf32>, vector<8x8xf32> -> vector<8x8xf32>
    %cst_30 = arith.constant dense<0xFF800000> : vector<8xf32>
    %65 = vector.multi_reduction <maximumf>, %64, %cst_30 [1] : vector<8x8xf32> to vector<8xf32>
    %66 = vector.shape_cast %65 : vector<8xf32> to vector<8x1xf32>
    %67 = vector.broadcast %66 : vector<8x1xf32> to vector<8x8xf32>
    %68 = arith.subf %64, %67 : vector<8x8xf32>
    %69 = math.exp %68 : vector<8x8xf32>
    %cst_31 = arith.constant dense<0.000000e+00> : vector<8xf32>
    %70 = vector.multi_reduction <add>, %69, %cst_31 [1] : vector<8x8xf32> to vector<8xf32>
    %71 = vector.shape_cast %70 : vector<8xf32> to vector<8x1xf32>
    %72 = tpu.reciprocal %71 {approx = true} : vector<8x1xf32> -> vector<8x1xf32>
    %73 = vector.broadcast %72 : vector<8x1xf32> to vector<8x8xf32>
    %74 = arith.mulf %69, %73 : vector<8x8xf32>
    %cst_32 = arith.constant dense<0.000000e+00> : vector<8x16xf32>
    %75 = tpu.matmul %74, %62, %cst_32 {dimension_numbers = #tpu.dot_dimension_numbers<[1], [0], [0], [1], [0, 0, 1, 1], [], []>} : vector<8x8xf32>, vector<8x16xf32>, vector<8x16xf32> -> vector<8x16xf32>
    %c8 = arith.constant 8 : index
    %c0_33 = arith.constant 0 : index
    %76 = vector.load %arg23[%c8, %c0_33] : memref<16x32xf32, #tpu.memory_space<vmem>>, vector<8x16xf32>
    tpu.vector_store %arg23[%c8, %c0_33], %75 {strides = array<i32>} : memref<16x32xf32, #tpu.memory_space<vmem>>, vector<8x16xf32>,
    %77 = vector.extract_strided_slice %23 {offsets = [8, 16], sizes = [8, 16], strides = [1, 1]} : vector<16x32xf32> to vector<8x16xf32>
    %78 = vector.extract_strided_slice %24 {offsets = [8, 16], sizes = [8, 16], strides = [1, 1]} : vector<16x32xf32> to vector<8x16xf32>
    %79 = vector.extract_strided_slice %25 {offsets = [8, 16], sizes = [8, 16], strides = [1, 1]} : vector<16x32xf32> to vector<8x16xf32>
    %80 = tpu.transpose %78, [1, 0] : vector<8x16xf32> -> vector<16x8xf32>
    %cst_34 = arith.constant dense<0.000000e+00> : vector<8x8xf32>
    %81 = tpu.matmul %77, %80, %cst_34 {dimension_numbers = #tpu.dot_dimension_numbers<[1], [0], [0], [1], [0, 0, 1, 1], [], []>} : vector<8x16xf32>, vector<16x8xf32>, vector<8x8xf32> -> vector<8x8xf32>
    %cst_35 = arith.constant dense<0xFF800000> : vector<8xf32>
    %82 = vector.multi_reduction <maximumf>, %81, %cst_35 [1] : vector<8x8xf32> to vector<8xf32>
    %83 = vector.shape_cast %82 : vector<8xf32> to vector<8x1xf32>
    %84 = vector.broadcast %83 : vector<8x1xf32> to vector<8x8xf32>
    %85 = arith.subf %81, %84 : vector<8x8xf32>
    %86 = math.exp %85 : vector<8x8xf32>
    %cst_36 = arith.constant dense<0.000000e+00> : vector<8xf32>
    %87 = vector.multi_reduction <add>, %86, %cst_36 [1] : vector<8x8xf32> to vector<8xf32>
    %88 = vector.shape_cast %87 : vector<8xf32> to vector<8x1xf32>
    %89 = tpu.reciprocal %88 {approx = true} : vector<8x1xf32> -> vector<8x1xf32>
    %90 = vector.broadcast %89 : vector<8x1xf32> to vector<8x8xf32>
    %91 = arith.mulf %86, %90 : vector<8x8xf32>
    %cst_37 = arith.constant dense<0.000000e+00> : vector<8x16xf32>
    %92 = tpu.matmul %91, %79, %cst_37 {dimension_numbers = #tpu.dot_dimension_numbers<[1], [0], [0], [1], [0, 0, 1, 1], [], []>} : vector<8x8xf32>, vector<8x16xf32>, vector<8x16xf32> -> vector<8x16xf32>
    %c8_38 = arith.constant 8 : index
    %c16_39 = arith.constant 16 : index
    %93 = vector.load %arg23[%c8_38, %c16_39] : memref<16x32xf32, #tpu.memory_space<vmem>>, vector<8x16xf32>
    tpu.vector_store %arg23[%c8_38, %c16_39], %92 {strides = array<i32>} : memref<16x32xf32, #tpu.memory_space<vmem>>, vector<8x16xf32>,
    %c0_40 = arith.constant 0 : index
    %c0_41 = arith.constant 0 : index
    %94 = vector.load %arg23[%c0_40, %c0_41] : memref<16x32xf32, #tpu.memory_space<vmem>>, vector<16x32xf32>
    %c0_42 = arith.constant 0 : index
    %c0_43 = arith.constant 0 : index
    %c0_44 = arith.constant 0 : index
    %95 = vector.load %arg8[%c0_42, %c0_43, %c0_44] : memref<1x32x32xf32, #tpu.memory_space<vmem>>, vector<1x32x32xf32>
    %96 = vector.shape_cast %95 : vector<1x32x32xf32> to vector<32x32xf32>
    %cst_45 = arith.constant dense<0.000000e+00> : vector<16x32xf32>
    %97 = tpu.matmul %94, %96, %cst_45 {dimension_numbers = #tpu.dot_dimension_numbers<[1], [0], [0], [1], [0, 0, 1, 1], [], []>} : vector<16x32xf32>, vector<32x32xf32>, vector<16x32xf32> -> vector<16x32xf32>
    %c0_46 = arith.constant 0 : index
    %c0_47 = arith.constant 0 : index
    %c0_48 = arith.constant 0 : index
    %98 = vector.load %arg9[%c0_46, %c0_47, %c0_48] : memref<1x1x32xf32, #tpu.memory_space<vmem>>, vector<1x1x32xf32>
    %99 = vector.shape_cast %98 : vector<1x1x32xf32> to vector<1x32xf32>
    %100 = vector.broadcast %99 : vector<1x32xf32> to vector<16x32xf32>
    %101 = arith.addf %97, %100 : vector<16x32xf32>
    %102 = arith.addf %101, %15 : vector<16x32xf32>
    %c0_49 = arith.constant 0 : index
    %c0_50 = arith.constant 0 : index
    %c0_51 = arith.constant 0 : index
    %103 = vector.load %arg10[%c0_49, %c0_50, %c0_51] : memref<1x1x32xf32, #tpu.memory_space<vmem>>, vector<1x1x32xf32>
    %104 = vector.shape_cast %103 : vector<1x1x32xf32> to vector<1x32xf32>
    %c0_52 = arith.constant 0 : index
    %c0_53 = arith.constant 0 : index
    %c0_54 = arith.constant 0 : index
    %105 = vector.load %arg11[%c0_52, %c0_53, %c0_54] : memref<1x1x32xf32, #tpu.memory_space<vmem>>, vector<1x1x32xf32>
    %106 = vector.shape_cast %105 : vector<1x1x32xf32> to vector<1x32xf32>
    %cst_55 = arith.constant dense<0.000000e+00> : vector<16xf32>
    %107 = vector.multi_reduction <add>, %102, %cst_55 [1] : vector<16x32xf32> to vector<16xf32>
    %108 = vector.shape_cast %107 : vector<16xf32> to vector<16x1xf32>
    %cst_56 = arith.constant 3.200000e+01 : f32
    %109 = vector.broadcast %cst_56 : f32 to vector<16x1xf32>
    %110 = arith.divf %108, %109 : vector<16x1xf32>
    %111 = vector.broadcast %110 : vector<16x1xf32> to vector<16x32xf32>
    %112 = arith.subf %102, %111 : vector<16x32xf32>
    %113 = arith.mulf %112, %112 : vector<16x32xf32>
    %cst_57 = arith.constant dense<0.000000e+00> : vector<16xf32>
    %114 = vector.multi_reduction <add>, %113, %cst_57 [1] : vector<16x32xf32> to vector<16xf32>
    %115 = vector.shape_cast %114 : vector<16xf32> to vector<16x1xf32>
    %cst_58 = arith.constant 3.200000e+01 : f32
    %116 = vector.broadcast %cst_58 : f32 to vector<16x1xf32>
    %117 = arith.divf %115, %116 : vector<16x1xf32>
    %118 = vector.broadcast %110 : vector<16x1xf32> to vector<16x32xf32>
    %119 = arith.subf %102, %118 : vector<16x32xf32>
    %cst_59 = arith.constant 9.99999996E-13 : f32
    %120 = vector.broadcast %cst_59 : f32 to vector<16x1xf32>
    %121 = arith.addf %117, %120 : vector<16x1xf32>
    %122 = math.rsqrt %121 : vector<16x1xf32>
    %123 = vector.broadcast %122 : vector<16x1xf32> to vector<16x32xf32>
    %124 = arith.mulf %119, %123 : vector<16x32xf32>
    %125 = vector.broadcast %104 : vector<1x32xf32> to vector<16x32xf32>
    %126 = arith.mulf %124, %125 : vector<16x32xf32>
    %127 = vector.broadcast %106 : vector<1x32xf32> to vector<16x32xf32>
    %128 = arith.addf %126, %127 : vector<16x32xf32>
    %c0_60 = arith.constant 0 : index
    %c0_61 = arith.constant 0 : index
    %c0_62 = arith.constant 0 : index
    %129 = vector.load %arg12[%c0_60, %c0_61, %c0_62] : memref<1x32x64xf32, #tpu.memory_space<vmem>>, vector<1x32x64xf32>
    %130 = vector.shape_cast %129 : vector<1x32x64xf32> to vector<32x64xf32>
    %cst_63 = arith.constant dense<0.000000e+00> : vector<16x64xf32>
    %131 = tpu.matmul %128, %130, %cst_63 {dimension_numbers = #tpu.dot_dimension_numbers<[1], [0], [0], [1], [0, 0, 1, 1], [], []>} : vector<16x32xf32>, vector<32x64xf32>, vector<16x64xf32> -> vector<16x64xf32>
    %c0_64 = arith.constant 0 : index
    %c0_65 = arith.constant 0 : index
    %c0_66 = arith.constant 0 : index
    %132 = vector.load %arg13[%c0_64, %c0_65, %c0_66] : memref<1x1x64xf32, #tpu.memory_space<vmem>>, vector<1x1x64xf32>
    %133 = vector.shape_cast %132 : vector<1x1x64xf32> to vector<1x64xf32>
    %134 = vector.broadcast %133 : vector<1x64xf32> to vector<16x64xf32>
    %135 = arith.addf %131, %134 : vector<16x64xf32>
    %136 = arith.mulf %135, %135 : vector<16x64xf32>
    %137 = arith.mulf %135, %136 : vector<16x64xf32>
    %cst_67 = arith.constant 4.471500e-02 : f32
    %138 = vector.broadcast %cst_67 : f32 to vector<16x64xf32>
    %139 = arith.mulf %138, %137 : vector<16x64xf32>
    %140 = arith.addf %135, %139 : vector<16x64xf32>
    %cst_68 = arith.constant 0.797884583 : f32
    %141 = vector.broadcast %cst_68 : f32 to vector<16x64xf32>
    %142 = arith.mulf %141, %140 : vector<16x64xf32>
    %143 = math.tanh %142 : vector<16x64xf32>
    %cst_69 = arith.constant 1.000000e+00 : f32
    %144 = vector.broadcast %cst_69 : f32 to vector<16x64xf32>
    %145 = arith.addf %144, %143 : vector<16x64xf32>
    %cst_70 = arith.constant 5.000000e-01 : f32
    %146 = vector.broadcast %cst_70 : f32 to vector<16x64xf32>
    %147 = arith.mulf %146, %145 : vector<16x64xf32>
    %148 = arith.mulf %135, %147 : vector<16x64xf32>
    %c0_71 = arith.constant 0 : index
    %c0_72 = arith.constant 0 : index
    %c0_73 = arith.constant 0 : index
    %149 = vector.load %arg14[%c0_71, %c0_72, %c0_73] : memref<1x64x32xf32, #tpu.memory_space<vmem>>, vector<1x64x32xf32>
    %150 = vector.shape_cast %149 : vector<1x64x32xf32> to vector<64x32xf32>
    %cst_74 = arith.constant dense<0.000000e+00> : vector<16x32xf32>
    %151 = tpu.matmul %148, %150, %cst_74 {dimension_numbers = #tpu.dot_dimension_numbers<[1], [0], [0], [1], [0, 0, 1, 1], [], []>} : vector<16x64xf32>, vector<64x32xf32>, vector<16x32xf32> -> vector<16x32xf32>
    %c0_75 = arith.constant 0 : index
    %c0_76 = arith.constant 0 : index
    %c0_77 = arith.constant 0 : index
    %152 = vector.load %arg15[%c0_75, %c0_76, %c0_77] : memref<1x1x32xf32, #tpu.memory_space<vmem>>, vector<1x1x32xf32>
    %153 = vector.shape_cast %152 : vector<1x1x32xf32> to vector<1x32xf32>
    %154 = vector.broadcast %153 : vector<1x32xf32> to vector<16x32xf32>
    %155 = arith.addf %151, %154 : vector<16x32xf32>
    %156 = arith.addf %155, %128 : vector<16x32xf32>
    %c0_78 = arith.constant 0 : index
    %c0_79 = arith.constant 0 : index
    %c0_80 = arith.constant 0 : index
    %157 = vector.load %arg16[%c0_78, %c0_79, %c0_80] : memref<1x1x32xf32, #tpu.memory_space<vmem>>, vector<1x1x32xf32>
    %158 = vector.shape_cast %157 : vector<1x1x32xf32> to vector<1x32xf32>
    %c0_81 = arith.constant 0 : index
    %c0_82 = arith.constant 0 : index
    %c0_83 = arith.constant 0 : index
    %159 = vector.load %arg17[%c0_81, %c0_82, %c0_83] : memref<1x1x32xf32, #tpu.memory_space<vmem>>, vector<1x1x32xf32>
    %160 = vector.shape_cast %159 : vector<1x1x32xf32> to vector<1x32xf32>
    %cst_84 = arith.constant dense<0.000000e+00> : vector<16xf32>
    %161 = vector.multi_reduction <add>, %156, %cst_84 [1] : vector<16x32xf32> to vector<16xf32>
    %162 = vector.shape_cast %161 : vector<16xf32> to vector<16x1xf32>
    %cst_85 = arith.constant 3.200000e+01 : f32
    %163 = vector.broadcast %cst_85 : f32 to vector<16x1xf32>
    %164 = arith.divf %162, %163 : vector<16x1xf32>
    %165 = vector.broadcast %164 : vector<16x1xf32> to vector<16x32xf32>
    %166 = arith.subf %156, %165 : vector<16x32xf32>
    %167 = arith.mulf %166, %166 : vector<16x32xf32>
    %cst_86 = arith.constant dense<0.000000e+00> : vector<16xf32>
    %168 = vector.multi_reduction <add>, %167, %cst_86 [1] : vector<16x32xf32> to vector<16xf32>
    %169 = vector.shape_cast %168 : vector<16xf32> to vector<16x1xf32>
    %cst_87 = arith.constant 3.200000e+01 : f32
    %170 = vector.broadcast %cst_87 : f32 to vector<16x1xf32>
    %171 = arith.divf %169, %170 : vector<16x1xf32>
    %172 = vector.broadcast %164 : vector<16x1xf32> to vector<16x32xf32>
    %173 = arith.subf %156, %172 : vector<16x32xf32>
    %cst_88 = arith.constant 9.99999996E-13 : f32
    %174 = vector.broadcast %cst_88 : f32 to vector<16x1xf32>
    %175 = arith.addf %171, %174 : vector<16x1xf32>
    %176 = math.rsqrt %175 : vector<16x1xf32>
    %177 = vector.broadcast %176 : vector<16x1xf32> to vector<16x32xf32>
    %178 = arith.mulf %173, %177 : vector<16x32xf32>
    %179 = vector.broadcast %158 : vector<1x32xf32> to vector<16x32xf32>
    %180 = arith.mulf %178, %179 : vector<16x32xf32>
    %181 = vector.broadcast %160 : vector<1x32xf32> to vector<16x32xf32>
    %182 = arith.addf %180, %181 : vector<16x32xf32>
    %c0_89 = arith.constant 0 : index
    %c0_90 = arith.constant 0 : index
    %183 = vector.load %arg22[%c0_89, %c0_90] : memref<16x32xf32, #tpu.memory_space<vmem>>, vector<16x32xf32>
    tpu.vector_store %arg22[%c0_89, %c0_90], %182 {strides = array<i32>} : memref<16x32xf32, #tpu.memory_space<vmem>>, vector<16x32xf32>,
    %c1_i32 = arith.constant 1 : i32
    %184 = arith.cmpi eq, %arg0, %c1_i32 : i32
    %185 = arith.extui %184 : i1 to i32
    %c0_i32_91 = arith.constant 0 : i32
    %186 = arith.cmpi ne, %185, %c0_i32_91 : i32
    scf.if %186 {
      %c0_92 = arith.constant 0 : index
      %c0_93 = arith.constant 0 : index
      %187 = vector.load %arg4[%c0_92, %c0_93] : memref<16x32xf32, #tpu.memory_space<vmem>>, vector<16x32xf32>
      %188 = arith.addf %182, %187 : vector<16x32xf32>
      %c0_94 = arith.constant 0 : index
      %c0_95 = arith.constant 0 : index
      %189 = vector.load %arg18[%c0_94, %c0_95] : memref<32x128xf32, #tpu.memory_space<vmem>>, vector<32x128xf32>
      %cst_96 = arith.constant dense<0.000000e+00> : vector<16x128xf32>
      %190 = tpu.matmul %188, %189, %cst_96 {dimension_numbers = #tpu.dot_dimension_numbers<[1], [0], [0], [1], [0, 0, 1, 1], [], []>} : vector<16x32xf32>, vector<32x128xf32>, vector<16x128xf32> -> vector<16x128xf32>
      %c0_97 = arith.constant 0 : index
      %c0_98 = arith.constant 0 : index
      %191 = vector.load %arg19[%c0_97, %c0_98] : memref<1x128xf32, #tpu.memory_space<vmem>>, vector<1x128xf32>
      %192 = vector.broadcast %191 : vector<1x128xf32> to vector<16x128xf32>
      %193 = arith.addf %190, %192 : vector<16x128xf32>
      %cst_99 = arith.constant dense<0xFF800000> : vector<16xf32>
      %194 = vector.multi_reduction <maximumf>, %193, %cst_99 [1] : vector<16x128xf32> to vector<16xf32>
      %195 = vector.shape_cast %194 : vector<16xf32> to vector<16x1xf32>
      %196 = vector.broadcast %195 : vector<16x1xf32> to vector<16x128xf32>
      %197 = arith.subf %193, %196 : vector<16x128xf32>
      %198 = math.exp %197 : vector<16x128xf32>
      %cst_100 = arith.constant dense<0.000000e+00> : vector<16xf32>
      %199 = vector.multi_reduction <add>, %198, %cst_100 [1] : vector<16x128xf32> to vector<16xf32>
      %200 = vector.shape_cast %199 : vector<16xf32> to vector<16x1xf32>
      %201 = math.log %200 : vector<16x1xf32>
      %202 = arith.addf %201, %195 : vector<16x1xf32>
      %203 = vector.broadcast %202 : vector<16x1xf32> to vector<16x128xf32>
      %204 = arith.subf %193, %203 : vector<16x128xf32>
      %c0_101 = arith.constant 0 : index
      %c0_102 = arith.constant 0 : index
      %205 = vector.load %arg20[%c0_101, %c0_102] : memref<16x128xf32, #tpu.memory_space<vmem>>, vector<16x128xf32>
      tpu.vector_store %arg20[%c0_101, %c0_102], %204 {strides = array<i32>} : memref<16x128xf32, #tpu.memory_space<vmem>>, vector<16x128xf32>,
    } else {
    }
    return
  }
  func.func @transform_0(%arg0: i32) -> (i32, i32) {
    %c0_i32 = arith.constant 0 : i32
    %c0_i32_0 = arith.constant 0 : i32
    %c0_i32_1 = arith.constant 0 : i32
    return %c0_i32, %c0_i32_0 : i32, i32
  }
  func.func @transform_1(%arg0: i32) -> (i32, i32) {
    %c0_i32 = arith.constant 0 : i32
    %c0_i32_0 = arith.constant 0 : i32
    %c0_i32_1 = arith.constant 0 : i32
    return %c0_i32, %c0_i32_0 : i32, i32
  }
  func.func @transform_2(%arg0: i32) -> (i32, i32) {
    %c0_i32 = arith.constant 0 : i32
    %c0_i32_0 = arith.constant 0 : i32
    %c0_i32_1 = arith.constant 0 : i32
    return %c0_i32, %c0_i32_0 : i32, i32
  }
  func.func @transform_3(%arg0: i32) -> (i32, i32) {
    %c0_i32 = arith.constant 0 : i32
    %c0_i32_0 = arith.constant 0 : i32
    %c0_i32_1 = arith.constant 0 : i32
    return %c0_i32, %c0_i32_0 : i32, i32
  }
  func.func @transform_4(%arg0: i32) -> (i32, i32) {
    %c0_i32 = arith.constant 0 : i32
    %c0_i32_0 = arith.constant 0 : i32
    %c0_i32_1 = arith.constant 0 : i32
    return %c0_i32, %c0_i32_0 : i32, i32
  }
  func.func @transform_5(%arg0: i32) -> (i32, i32, i32) {
    %c0_i32 = arith.constant 0 : i32
    %c0_i32_0 = arith.constant 0 : i32
    %c0_i32_1 = arith.constant 0 : i32
    return %arg0, %c0_i32, %c0_i32_0 : i32, i32, i32
  }
  func.func @transform_6(%arg0: i32) -> (i32, i32, i32) {
    %c0_i32 = arith.constant 0 : i32
    %c0_i32_0 = arith.constant 0 : i32
    %c0_i32_1 = arith.constant 0 : i32
    return %arg0, %c0_i32, %c0_i32_0 : i32, i32, i32
  }
  func.func @transform_7(%arg0: i32) -> (i32, i32, i32) {
    %c0_i32 = arith.constant 0 : i32
    %c0_i32_0 = arith.constant 0 : i32
    %c0_i32_1 = arith.constant 0 : i32
    return %arg0, %c0_i32, %c0_i32_0 : i32, i32, i32
  }
  func.func @transform_8(%arg0: i32) -> (i32, i32, i32) {
    %c0_i32 = arith.constant 0 : i32
    %c0_i32_0 = arith.constant 0 : i32
    %c0_i32_1 = arith.constant 0 : i32
    return %arg0, %c0_i32, %c0_i32_0 : i32, i32, i32
  }
  func.func @transform_9(%arg0: i32) -> (i32, i32, i32) {
    %c0_i32 = arith.constant 0 : i32
    %c0_i32_0 = arith.constant 0 : i32
    %c0_i32_1 = arith.constant 0 : i32
    return %arg0, %c0_i32, %c0_i32_0 : i32, i32, i32
  }
  func.func @transform_10(%arg0: i32) -> (i32, i32, i32) {
    %c0_i32 = arith.constant 0 : i32
    %c0_i32_0 = arith.constant 0 : i32
    %c0_i32_1 = arith.constant 0 : i32
    return %arg0, %c0_i32, %c0_i32_0 : i32, i32, i32
  }
  func.func @transform_11(%arg0: i32) -> (i32, i32, i32) {
    %c0_i32 = arith.constant 0 : i32
    %c0_i32_0 = arith.constant 0 : i32
    %c0_i32_1 = arith.constant 0 : i32
    return %arg0, %c0_i32, %c0_i32_0 : i32, i32, i32
  }
  func.func @transform_12(%arg0: i32) -> (i32, i32, i32) {
    %c0_i32 = arith.constant 0 : i32
    %c0_i32_0 = arith.constant 0 : i32
    %c0_i32_1 = arith.constant 0 : i32
    return %arg0, %c0_i32, %c0_i32_0 : i32, i32, i32
  }
  func.func @transform_13(%arg0: i32) -> (i32, i32, i32) {
    %c0_i32 = arith.constant 0 : i32
    %c0_i32_0 = arith.constant 0 : i32
    %c0_i32_1 = arith.constant 0 : i32
    return %arg0, %c0_i32, %c0_i32_0 : i32, i32, i32
  }
  func.func @transform_14(%arg0: i32) -> (i32, i32, i32) {
    %c0_i32 = arith.constant 0 : i32
    %c0_i32_0 = arith.constant 0 : i32
    %c0_i32_1 = arith.constant 0 : i32
    return %arg0, %c0_i32, %c0_i32_0 : i32, i32, i32
  }
  func.func @transform_15(%arg0: i32) -> (i32, i32, i32) {
    %c0_i32 = arith.constant 0 : i32
    %c0_i32_0 = arith.constant 0 : i32
    %c0_i32_1 = arith.constant 0 : i32
    return %arg0, %c0_i32, %c0_i32_0 : i32, i32, i32
  }
  func.func @transform_16(%arg0: i32) -> (i32, i32, i32) {
    %c0_i32 = arith.constant 0 : i32
    %c0_i32_0 = arith.constant 0 : i32
    %c0_i32_1 = arith.constant 0 : i32
    return %arg0, %c0_i32, %c0_i32_0 : i32, i32, i32
  }
  func.func @transform_17(%arg0: i32) -> (i32, i32) {
    %c0_i32 = arith.constant 0 : i32
    %c0_i32_0 = arith.constant 0 : i32
    %c0_i32_1 = arith.constant 0 : i32
    return %c0_i32, %c0_i32_0 : i32, i32
  }
  func.func @transform_18(%arg0: i32) -> (i32, i32) {
    %c0_i32 = arith.constant 0 : i32
    %c0_i32_0 = arith.constant 0 : i32
    %c0_i32_1 = arith.constant 0 : i32
    return %c0_i32, %c0_i32_0 : i32, i32
  }
  func.func @transform_19(%arg0: i32) -> (i32, i32) {
    %c0_i32 = arith.constant 0 : i32
    %c0_i32_0 = arith.constant 0 : i32
    %c0_i32_1 = arith.constant 0 : i32
    return %c0_i32, %c0_i32_0 : i32, i32
  }
  func.func @transform_20(%arg0: i32) -> (i32, i32) {
    %c0_i32 = arith.constant 0 : i32
    %c0_i32_0 = arith.constant 0 : i32
    %c0_i32_1 = arith.constant 0 : i32
    return %c0_i32, %c0_i32_0 : i32, i32
  }
}

</mosaic_0001>

<llo_original>
// kernel: soft_masked_bert_forward.3
$region0: #{soft_masked_bert_forward.3}
  #allocation0 [shape = 'u32[]', space=smem, size = 0x4, offset = 0x4, fixed_abs, tag = 'smem constant byte address 0x4 - core index']
  #allocation1 [shape = 'u32[144,128]{1,0:T(1,128)}', space=vmem, size = 0x12000, scoped, tag = 'internal scratch']
  %s0 = inlined_call_operand.vmem [shape: f32[17,32], index: 0, kind: input, shape index: {}]
  %s1 = inlined_call_operand.vmem [shape: f32[1,32], index: 1, kind: input, shape index: {}]
  %s2 = inlined_call_operand.vmem [shape: f32[1,32], index: 2, kind: input, shape index: {}]
  %s3 = inlined_call_operand.vmem [shape: f32[32,96], index: 3, kind: input, shape index: {}]
  %s4 = inlined_call_operand.vmem [shape: f32[1,96], index: 4, kind: input, shape index: {}]
  %s5 = inlined_call_operand.vmem [shape: f32[17,32], index: 5, kind: output, shape index: {0}]
  %s6 = inlined_call_operand.vmem [shape: f32[17,96], index: 6, kind: output, shape index: {1}]
  %7 = xla_tuple %s5, %s6
  %s8 = sld [smem:[#allocation0]]
  $region38: #{soft_masked_bert_forward.3} parent=0
    _
  %s10 = ssub.s32 1, %s8
  %s11 = scalar_select 0, %s10, %s8
  // Predicated region
  $region2: #{soft_masked_bert_forward.3} parent=0 // pred_check
    _
  $region3: #{soft_masked_bert_forward.3} parent=0 // pred_check_branch
    %13 = sbr.rel (0) target = $region5
  $region4: #{soft_masked_bert_forward.3} parent=0 // pred_region
    _
  $region5: #{soft_masked_bert_forward.3} parent=0 // pred_fallthru
    _
  // Predicated region
  $region6: #{soft_masked_bert_forward.3} parent=0 // pred_check
    _
  $region7: #{soft_masked_bert_forward.3} parent=0 // pred_check_branch
    %15 = sbr.rel (0) target = $region9
  $region8: #{soft_masked_bert_forward.3} parent=0 // pred_region
    _
  $region9: #{soft_masked_bert_forward.3} parent=0 // pred_fallthru
    _
  // Predicated region
  $region10: #{soft_masked_bert_forward.3} parent=0 // pred_check
    _
  $region11: #{soft_masked_bert_forward.3} parent=0 // pred_check_branch
    %17 = sbr.rel (0) target = $region13
  $region12: #{soft_masked_bert_forward.3} parent=0 // pred_region
    _
  $region13: #{soft_masked_bert_forward.3} parent=0 // pred_fallthru
    _
  // Predicated region
  $region14: #{soft_masked_bert_forward.3} parent=0 // pred_check
    _
  $region15: #{soft_masked_bert_forward.3} parent=0 // pred_check_branch
    %19 = sbr.rel (0) target = $region17
  $region16: #{soft_masked_bert_forward.3} parent=0 // pred_region
    _
  $region17: #{soft_masked_bert_forward.3} parent=0 // pred_fallthru
    _
  // Predicated region
  $region18: #{soft_masked_bert_forward.3} parent=0 // pred_check
    _
  $region19: #{soft_masked_bert_forward.3} parent=0 // pred_check_branch
    %21 = sbr.rel (0) target = $region21
  $region20: #{soft_masked_bert_forward.3} parent=0 // pred_region
    _
  $region21: #{soft_masked_bert_forward.3} parent=0 // pred_fallthru
    _
  %v22 = vld [vmem:[%s0] sm:$0xff]
  %v23 = vld [vmem:[%s0 + $0x8] sm:$0xff]
  %v24 = vld [vmem:[%s0 + $0x10] sm:$0x1]
  %v25 = vld [vmem:[%s1] sm:$0x1]
  %v26 = vld [vmem:[%s2] sm:$0x1]
  %vm27 = vcmask 261120
  %v28 = vsel %vm27, %v22, 0.0
  %29 = vadd.xlane.f32.xlu0 %v28
  %v30 = vpop.xlane.xlu0 %29
  %v31 = vsel %vm27, %v23, 0.0
  %32 = vadd.xlane.f32.xlu0 %v31
  %v33 = vpop.xlane.xlu0 %32
  %vm34 = vcmask 253952
  %v35 = vsel %vm34, %v24, 0.0
  %36 = vadd.xlane.f32.xlu0 %v35
  %v37 = vpop.xlane.xlu0 %36
  %v38 = vrcp.pop 32.0
  %v39 = vmul.f32 %v30, %v38
  %v40 = vmul.f32 %v33, %v38
  %v41 = vmul.f32 %v37, %v38
  %v42 = vsub.f32 %v22, %v39
  %v43 = vsub.f32 %v23, %v40
  %v44 = vsub.f32 %v24, %v41
  %v45 = vmul.f32 %v42, %v42
  %v46 = vmul.f32 %v43, %v43
  %v47 = vmul.f32 %v44, %v44
  %v48 = vsel %vm27, %v45, 0.0
  %49 = vadd.xlane.f32.xlu0 %v48
  %v50 = vpop.xlane.xlu0 %49
  %v51 = vsel %vm27, %v46, 0.0
  %52 = vadd.xlane.f32.xlu0 %v51
  %v53 = vpop.xlane.xlu0 %52
  %v54 = vsel %vm34, %v47, 0.0
  %55 = vadd.xlane.f32.xlu0 %v54
  %v56 = vpop.xlane.xlu0 %55
  %v57 = vmul.f32 %v50, %v38
  %v58 = vmul.f32 %v53, %v38
  %v59 = vmul.f32 %v56, %v38
  %v60 = vadd.f32 %v57, 1e-12
  %v61 = vadd.f32 %v58, 1e-12
  %v62 = vadd.f32 %v59, 1e-12
  %v63 = vrsqrt.pop %v60
  %v64 = vrsqrt.pop %v61
  %v65 = vrsqrt.pop %v62
  %v66 = vmul.f32 %v42, %v63
  %v67 = vmul.f32 %v43, %v64
  %v68 = vmul.f32 %v44, %v65
  %v70 = vlaneseq
  %v71 = vshrl.u32 %v70, 7
  %v72 = vsub.s32 0, %v71
  %v73 = vrot.slane %v25, %v72
  %v75 = vmul.f32 %v66, %v73
  %v76 = vmul.f32 %v67, %v73
  %v77 = vmul.f32 %v68, %v73
  %v79 = vlaneseq
  %v80 = vshrl.u32 %v79, 7
  %v81 = vsub.s32 0, %v80
  %v82 = vrot.slane %v26, %v81
  %v84 = vadd.f32 %v75, %v82
  %v85 = vadd.f32 %v76, %v82
  %v86 = vadd.f32 %v77, %v82
  %87 = vst.msk [vmem:[%s5] sm:$0xff] %vm27, %v84
  %88 = vst.msk [vmem:[%s5 + $0x8] sm:$0xff] %vm27, %v85
  %89 = vst.msk [vmem:[%s5 + $0x10] sm:$0x1] %vm34, %v86
  %v90 = vld [vmem:[%s3] sm:$0xff]
  %v91 = vld [vmem:[%s3 + $0x8] sm:$0xff]
  %v92 = vld [vmem:[%s3 + $0x10] sm:$0xff]
  %v93 = vld [vmem:[%s3 + $0x18] sm:$0xff]
  %v94 = vld [vmem:[%s4] sm:$0x1]
  %v96 = vlaneseq
  %v97 = vshrl.u32 %v96, 7
  %v98 = vsub.s32 0, %v97
  %v99 = vrot.slane %v94, %v98
  %v102 = vsel %vm27, %v84, 0
  %v105 = vsel %vm27, %v85, 0
  %v108 = vsel %vm27, %v86, 0
  %110 = vmatprep.subr.mxu0 0.0
  %111 = vmatpush1.msra.mxu0 %v90
  %112 = vmatprep.subr.mxu0 0.0
  %113 = vmatpush1.msra.mxu0 %v91
  %114 = vmatprep.subr.mxu0 0.0
  %115 = vmatpush1.msra.mxu0 %v92
  %116 = vmatprep.subr.mxu0 0.0
  %117 = vmatpush1.msra.mxu0 %v93
  %118 = vmatprep.subr.mxu0 0.0
  %119 = vmatpush1.msra.mxu0 0.0
  %120 = vmatprep.subr.mxu0 0.0
  %121 = vmatpush1.msra.mxu0 0.0
  %122 = vmatprep.subr.mxu0 0.0
  %123 = vmatpush1.msra.mxu0 0.0
  %124 = vmatprep.subr.mxu0 0.0
  %125 = vmatpush1.msra.mxu0 0.0
  %126 = vmatprep.subr.mxu0 0.0
  %127 = vmatpush1.msra.mxu0 0.0
  %128 = vmatprep.subr.mxu0 0.0
  %129 = vmatpush1.msra.mxu0 0.0
  %130 = vmatprep.subr.mxu0 0.0
  %131 = vmatpush1.msra.mxu0 0.0
  %132 = vmatprep.subr.mxu0 0.0
  %133 = vmatpush1.msra.mxu0 0.0
  %134 = vmatprep.subr.mxu0 0.0
  %135 = vmatpush1.msra.mxu0 0.0
  %136 = vmatprep.subr.mxu0 0.0
  %137 = vmatpush1.msra.mxu0 0.0
  %138 = vmatprep.subr.mxu0 0.0
  %139 = vmatpush1.msra.mxu0 0.0
  %140 = vmatprep.subr.mxu0 0.0
  %141 = vmatpush1.msra.mxu0 0.0
  %142 = vmatprep.subr.mxu0 0.0
  %143 = vmatpush1.msra.mxu0 0.0
  %144 = vmatprep.subr.mxu0 0.0
  %145 = vmatpush1.msra.mxu0 0.0
  %146 = vmatprep.subr.mxu0 0.0
  %147 = vmatpush1.msra.mxu0 0.0
  %148 = vmatprep.subr.mxu0 0.0
  %149 = vmatpush1.msra.mxu0 0.0
  %150 = vmatprep.subr.mxu0 0.0
  %151 = vmatpush1.msra.mxu0 0.0
  %152 = vmatprep.subr.mxu0 0.0
  %153 = vmatpush1.msra.mxu0 0.0
  %154 = vmatprep.subr.mxu0 0.0
  %155 = vmatpush1.msra.mxu0 0.0
  %156 = vmatprep.subr.mxu0 0.0
  %157 = vmatpush1.msra.mxu0 0.0
  %158 = vmatprep.subr.mxu0 0.0
  %159 = vmatpush1.msra.mxu0 0.0
  %160 = vmatprep.subr.mxu0 0.0
  %161 = vmatpush1.msra.mxu0 0.0
  %162 = vmatprep.subr.mxu0 0.0
  %163 = vmatpush1.msra.mxu0 0.0
  %164 = vmatprep.subr.mxu0 0.0
  %165 = vmatpush1.msra.mxu0 0.0
  %166 = vmatprep.subr.mxu0 0.0
  %167 = vmatpush1.msra.mxu0 0.0
  %168 = vmatprep.subr.mxu0 0.0
  %169 = vmatpush1.msra.mxu0 0.0
  %170 = vmatprep.subr.mxu0 0.0
  %171 = vmatpush1.msra.mxu0 0.0
  %172 = vmatprep.subr.mxu0 0.0
  %173 = vmatpush1.msra.mxu0 0.0
  %174 = vmatprep.mubr.f32.mxu0 0.0
  %175 = vmatmul.mubr.f32.gmra.mrb[0].mxu0 %v102
  %v176 = vpop.f32.mrb[0].mxu0
  %v177 = vadd.f32 %v99, %v176
  %v178 = vpop.f32.mrb[0].mxu0
  %179 = vmatprep.mubr.f32.mxu0 0.0
  %180 = vmatmul.mubr.f32.gmra.mrb[0].mxu0 %v105
  %v181 = vpop.f32.mrb[0].mxu0
  %v182 = vadd.f32 %v99, %v181
  %v183 = vpop.f32.mrb[0].mxu0
  %184 = vmatprep.mubr.f32.mxu0 0.0
  %185 = vmatmul.mubr.f32.gmra.mrb[0].mxu0 %v108
  %v186 = vpop.f32.mrb[0].mxu0
  %v187 = vadd.f32 %v99, %v186
  %v188 = vpop.f32.mrb[0].mxu0
  %189 = vdwg.mxu0
  %vm190 = vcmask 785408
  %191 = vst.msk [vmem:[%s6] sm:$0xff] %vm190, %v177
  %192 = vst.msk [vmem:[%s6 + $0x8] sm:$0xff] %vm190, %v182
  %vm193 = vcmask 778240
  %194 = vst.msk [vmem:[%s6 + $0x10] sm:$0x1] %vm193, %v187
  // Predicated region
  $region22: #{soft_masked_bert_forward.3} parent=0 // pred_check
    _
  $region23: #{soft_masked_bert_forward.3} parent=0 // pred_check_branch
    %196 = sbr.rel (0) target = $region25
  $region24: #{soft_masked_bert_forward.3} parent=0 // pred_region
    _
  $region25: #{soft_masked_bert_forward.3} parent=0 // pred_fallthru
    _
  // Predicated region
  $region26: #{soft_masked_bert_forward.3} parent=0 // pred_check
    _
  $region27: #{soft_masked_bert_forward.3} parent=0 // pred_check_branch
    %198 = sbr.rel (0) target = $region29
  $region28: #{soft_masked_bert_forward.3} parent=0 // pred_region
    _
  $region29: #{soft_masked_bert_forward.3} parent=0 // pred_fallthru
    _
  // Predicated region
  $region30: #{soft_masked_bert_forward.3} parent=0 // pred_check
    _
  $region31: #{soft_masked_bert_forward.3} parent=0 // pred_check_branch
    %200 = sbr.rel (0) target = $region33
  $region32: #{soft_masked_bert_forward.3} parent=0 // pred_region
    _
  $region33: #{soft_masked_bert_forward.3} parent=0 // pred_fallthru
    _
  // Predicated region
  $region34: #{soft_masked_bert_forward.3} parent=0 // pred_check
    _
  $region35: #{soft_masked_bert_forward.3} parent=0 // pred_check_branch
    %202 = sbr.rel (0) target = $region37
  $region36: #{soft_masked_bert_forward.3} parent=0 // pred_region
    _
  $region37: #{soft_masked_bert_forward.3} parent=0 // pred_fallthru
    _

// kernel: soft_masked_bert_forward.4
$region0: #{soft_masked_bert_forward.4}
  #allocation0 [shape = 'u32[]', space=smem, size = 0x4, offset = 0x4, fixed_abs, tag = 'smem constant byte address 0x4 - core index']
  #allocation1 [shape = 'u32[144,128]{1,0:T(1,128)}', space=vmem, size = 0x12000, scoped, tag = 'internal scratch']
  #allocation2 [shape = 'f32[2,16]{1,0:T(2,128)}', space=vmem, size = 0x400, scoped, tag = 'scratch operand']
  %s0 = inlined_call_operand.vmem [shape: f32[2,8,2,48], index: 0, kind: input, shape index: {}]
  %s1 = inlined_call_operand.vmem [shape: f32[2,16,48], index: 1, kind: input, shape index: {}]
  %s2 = inlined_call_operand.vmem [shape: f32[2,1,16], index: 2, kind: input, shape index: {}]
  %s3 = inlined_call_operand.vmem [shape: f32[2,8,2,16], index: 3, kind: output, shape index: {}]
  %s4 = sld [smem:[#allocation0]]
  $region52: #{soft_masked_bert_forward.4} parent=0
    _
  %s6 = ssub.s32 1, %s4
  %s7 = scalar_select 0, %s6, %s4
  loop: start=0, step=1, limit=4
  $region2: #{soft_masked_bert_forward.4} parent=0 // loop_pre_header
    _
  $region3: #{soft_masked_bert_forward.4} parent=0 // loop_header
    %s9 = sphi 0, %s13
    %p10 = scmp.ge.s32.totalorder %s9, 4
    %s19 = sphi 0, %s21
    %s22 = sphi 0, %s19
    %s23 = sphi 0, %s22
    %s39 = sphi 0, %s23
    %s45 = sphi 0, %s47
    %s48 = sphi 0, %s45
    %s49 = sphi 0, %s48
    %s65 = sphi 0, %s49
    %s71 = sphi 0, %s73
    %s74 = sphi 0, %s71
    %s75 = sphi 0, %s74
    %s91 = sphi 0, %s75
    %s97 = sphi 0, %s99
    %s100 = sphi 0, %s97
    %s101 = sphi 0, %s100
    %s117 = sphi 0, %s101
  $region4: #{soft_masked_bert_forward.4} parent=0 // loop_header_branch
    %12 = sbr.rel (%p10) target = $region8
  $region5: #{soft_masked_bert_forward.4} parent=0 // loop_body
    %s14 = ssub.s32 %s9, 1
    %s15 = ssub.s32 %s9, 2
    %s16 = sadd.s32 %s9, 1
    %s17 = ssub.s32 %s9, %s16
    %p18 = scmp.eq.s32.totalorder %s17, 0
    %s20 = sadd.s32 %s19, 1
    %s21 = scalar_select %p18, %s19, %s20
    %p24 = pneg %p18
    %p25 = scmp.eq.s32.totalorder %s9, 1
    %p26 = por %p24, %p25
    %p27 = scmp.ne.s32.totalorder %s19, %s22
    %p28 = scmp.eq.s32.totalorder %s9, 0
    %p29 = por %p27, %p28
    %p30 = scmp.ne.s32.totalorder %s19, %s22
    %p31 = scmp.eq.s32.totalorder %s14, 1
    %p32 = por %p30, %p31
    %p33 = scmp.ne.s32.totalorder %s22, %s23
    %p34 = scmp.eq.s32.totalorder %s14, 0
    %p35 = por %p33, %p34
    %p36 = scmp.ne.s32.totalorder %s22, %s23
    %p37 = scmp.eq.s32.totalorder %s15, 1
    %p38 = por %p36, %p37
    %p40 = scmp.ne.s32.totalorder %s23, %s39
    %p41 = scmp.eq.s32.totalorder %s15, 0
    %p42 = por %p40, %p41
    %s43 = ssub.s32 %s9, %s16
    %p44 = scmp.eq.s32.totalorder %s43, 0
    %s46 = sadd.s32 %s45, 1
    %s47 = scalar_select %p44, %s45, %s46
    %p50 = pneg %p44
    %p51 = scmp.eq.s32.totalorder %s9, 1
    %p52 = por %p50, %p51
    %p53 = scmp.ne.s32.totalorder %s45, %s48
    %p54 = scmp.eq.s32.totalorder %s9, 0
    %p55 = por %p53, %p54
    %p56 = scmp.ne.s32.totalorder %s45, %s48
    %p57 = scmp.eq.s32.totalorder %s14, 1
    %p58 = por %p56, %p57
    %p59 = scmp.ne.s32.totalorder %s48, %s49
    %p60 = scmp.eq.s32.totalorder %s14, 0
    %p61 = por %p59, %p60
    %p62 = scmp.ne.s32.totalorder %s48, %s49
    %p63 = scmp.eq.s32.totalorder %s15, 1
    %p64 = por %p62, %p63
    %p66 = scmp.ne.s32.totalorder %s49, %s65
    %p67 = scmp.eq.s32.totalorder %s15, 0
    %p68 = por %p66, %p67
    %s69 = ssub.s32 %s9, %s16
    %p70 = scmp.eq.s32.totalorder %s69, 0
    %s72 = sadd.s32 %s71, 1
    %s73 = scalar_select %p70, %s71, %s72
    %p76 = pneg %p70
    %p77 = scmp.eq.s32.totalorder %s9, 1
    %p78 = por %p76, %p77
    %p79 = scmp.ne.s32.totalorder %s71, %s74
    %p80 = scmp.eq.s32.totalorder %s9, 0
    %p81 = por %p79, %p80
    %p82 = scmp.ne.s32.totalorder %s71, %s74
    %p83 = scmp.eq.s32.totalorder %s14, 1
    %p84 = por %p82, %p83
    %p85 = scmp.ne.s32.totalorder %s74, %s75
    %p86 = scmp.eq.s32.totalorder %s14, 0
    %p87 = por %p85, %p86
    %p88 = scmp.ne.s32.totalorder %s74, %s75
    %p89 = scmp.eq.s32.totalorder %s15, 1
    %p90 = por %p88, %p89
    %p92 = scmp.ne.s32.totalorder %s75, %s91
    %p93 = scmp.eq.s32.totalorder %s15, 0
    %p94 = por %p92, %p93
    %s95 = ssub.s32 %s9, %s16
    %p96 = scmp.eq.s32.totalorder %s95, 0
    %s98 = sadd.s32 %s97, 1
    %s99 = scalar_select %p96, %s97, %s98
    %p102 = pneg %p96
    %p103 = scmp.eq.s32.totalorder %s9, 1
    %p104 = por %p102, %p103
    %p105 = scmp.ne.s32.totalorder %s97, %s100
    %p106 = scmp.eq.s32.totalorder %s9, 0
    %p107 = por %p105, %p106
    %p108 = scmp.ne.s32.totalorder %s97, %s100
    %p109 = scmp.eq.s32.totalorder %s14, 1
    %p110 = por %p108, %p109
    %p111 = scmp.ne.s32.totalorder %s100, %s101
    %p112 = scmp.eq.s32.totalorder %s14, 0
    %p113 = por %p111, %p112
    %p114 = scmp.ne.s32.totalorder %s100, %s101
    %p115 = scmp.eq.s32.totalorder %s15, 1
    %p116 = por %p114, %p115
    %p118 = scmp.ne.s32.totalorder %s101, %s117
    %p119 = scmp.eq.s32.totalorder %s15, 0
    %p120 = por %p118, %p119
    %p121 = scmp.le.s32.totalorder 1, %s9
    %p122 = scmp.lt.s32.totalorder %s9, 3
    %p123 = pnand %p121, %p122
    %p124 = pneg %p123
    // Predicated region
    $region9: #{soft_masked_bert_forward.4} parent=5 // pred_check
      _
    $region10: #{soft_masked_bert_forward.4} parent=5 // pred_check_branch
      %126 = sbr.rel (%p123) target = $region12
    $region11: #{soft_masked_bert_forward.4} parent=5 // pred_region
      %s127 = ssub.s32 %s9, 1
    $region12: #{soft_masked_bert_forward.4} parent=5 // pred_fallthru
      _
    %p128 = scmp.lt.s32.totalorder %s9, 2
    // Predicated region
    $region13: #{soft_masked_bert_forward.4} parent=5 // pred_check
      %p129 = pneg %p128
    $region14: #{soft_masked_bert_forward.4} parent=5 // pred_check_branch
      %131 = sbr.rel (%p129) target = $region16
    $region15: #{soft_masked_bert_forward.4} parent=5 // pred_region
      // Predicated region
      $region17: #{soft_masked_bert_forward.4} parent=15 // pred_check
        %p132 = pneg %p29
      $region18: #{soft_masked_bert_forward.4} parent=15 // pred_check_branch
        %134 = sbr.rel (%p132) target = $region20
      $region19: #{soft_masked_bert_forward.4} parent=15 // pred_region
        %p135 = scmp.lt.s32.totalorder %s9, 1
        %s136 = scalar_select %p135, %s9, 1
        %s137 = smul.addr %s136, 8
        %s138 = smul.addr %s137, 2
        %s139 = scalar_lea.vmem %s0, %s138
      $region20: #{soft_masked_bert_forward.4} parent=15 // pred_fallthru
        _
      // Predicated region
      $region21: #{soft_masked_bert_forward.4} parent=15 // pred_check
        %p140 = pneg %p55
      $region22: #{soft_masked_bert_forward.4} parent=15 // pred_check_branch
        %142 = sbr.rel (%p140) target = $region24
      $region23: #{soft_masked_bert_forward.4} parent=15 // pred_region
        %p143 = scmp.lt.s32.totalorder %s9, 1
        %s144 = scalar_select %p143, %s9, 1
        %s145 = smul.addr %s144, 2
        %s146 = smul.addr %s145, 8
        %s147 = scalar_lea.vmem %s1, %s146
      $region24: #{soft_masked_bert_forward.4} parent=15 // pred_fallthru
        _
      // Predicated region
      $region25: #{soft_masked_bert_forward.4} parent=15 // pred_check
        %p148 = pneg %p81
      $region26: #{soft_masked_bert_forward.4} parent=15 // pred_check_branch
        %150 = sbr.rel (%p148) target = $region28
      $region27: #{soft_masked_bert_forward.4} parent=15 // pred_region
        %p151 = scmp.lt.s32.totalorder %s9, 1
        %s152 = scalar_select %p151, %s9, 1
        %s153 = scalar_lea.vmem %s2, %s152
      $region28: #{soft_masked_bert_forward.4} parent=15 // pred_fallthru
        _
    $region16: #{soft_masked_bert_forward.4} parent=5 // pred_fallthru
      _
    %p154 = scmp.le.s32.totalorder 1, %s9
    %p155 = scmp.lt.s32.totalorder %s9, 3
    %p156 = pnand %p154, %p155
    %p157 = pneg %p156
    // Predicated region
    $region29: #{soft_masked_bert_forward.4} parent=5 // pred_check
      _
    $region30: #{soft_masked_bert_forward.4} parent=5 // pred_check_branch
      %159 = sbr.rel (%p156) target = $region32
    $region31: #{soft_masked_bert_forward.4} parent=5 // pred_region
      %s160 = ssub.s32 %s9, 1
      %p161 = scmp.lt.s32.totalorder %s14, 1
      %s162 = scalar_select %p161, %s14, 1
      %s163 = smul.addr %s162, 8
      %s164 = smul.addr %s163, 2
      %s165 = scalar_lea.vmem %s0, %s164
      %p166 = pneg %p35
      %p167 = pneg %p32
      %p168 = scmp.lt.s32.totalorder %s14, 1
      %s169 = scalar_select %p168, %s14, 1
      %s170 = smul.addr %s169, 2
      %s171 = smul.addr %s170, 8
      %s172 = scalar_lea.vmem %s1, %s171
      %p173 = pneg %p61
      %p174 = pneg %p58
      %p175 = scmp.lt.s32.totalorder %s14, 1
      %s176 = scalar_select %p175, %s14, 1
      %s177 = scalar_lea.vmem %s2, %s176
      %p178 = pneg %p87
      %p179 = pneg %p84
      %p180 = pneg %p113
      %p181 = pneg %p110
      %p182 = scmp.lt.s32.totalorder %s14, 1
      %s183 = scalar_select %p182, %s14, 1
      %s184 = smul.addr %s183, 8
      %s185 = smul.addr %s184, 2
      %s186 = scalar_lea.vmem %s3, %s185
      %p187 = scmp.lt.s32.totalorder %s14, 1
      %s188 = scalar_select %p187, %s14, 1
      %s189 = smul.addr %s188, 8
      %s190 = smul.addr %s189, 2
      %s191 = scalar_lea.vmem %s0, %s190
      %p192 = scmp.lt.s32.totalorder %s14, 1
      %s193 = scalar_select %p192, %s14, 1
      %s194 = smul.addr %s193, 2
      %s195 = smul.addr %s194, 8
      %s196 = scalar_lea.vmem %s1, %s195
      %p197 = scmp.lt.s32.totalorder %s14, 1
      %s198 = scalar_select %p197, %s14, 1
      %s199 = scalar_lea.vmem %s2, %s198
      %p200 = scmp.lt.s32.totalorder %s14, 1
      %s201 = scalar_select %p200, %s14, 1
      %s202 = smul.addr %s201, 8
      %s203 = smul.addr %s202, 2
      %s204 = scalar_lea.vmem %s3, %s203
      %vm205 = vcmask 123904
      %206 = vst.msk [vmem:[#allocation2] sm:$0x3] %vm205, 0.0
      loop: start=0, step=1, limit=8
      $region33: #{soft_masked_bert_forward.4} parent=31 // loop_pre_header
        _
      $region34: #{soft_masked_bert_forward.4} parent=31 // loop_header
        %s208 = sphi 0, %s212
        %p209 = scmp.ge.s32.totalorder %s208, 8
      $region35: #{soft_masked_bert_forward.4} parent=31 // loop_header_branch
        %211 = sbr.rel (%p209) target = $region39
      $region36: #{soft_masked_bert_forward.4} parent=31 // loop_body
        %v213 = vld [vmem:[#allocation2] sm:$0x3]
        %v214 = vld [vmem:[%s196] sm:$0xff]
        %v215 = vld [vmem:[%s196 + $0x8] sm:$0xff]
        %vm216 = vcmask 130048
        %v218 = vsel %vm216, %v213, 0
        %220 = vmatprep.subr.mxu0 0.0
        %221 = vmatpush1.msra.mxu0 %v214
        %222 = vmatprep.subr.mxu0 0.0
        %223 = vmatpush1.msra.mxu0 %v215
        %224 = vmatprep.subr.mxu0 0.0
        %225 = vmatpush1.msra.mxu0 0.0
        %226 = vmatprep.subr.mxu0 0.0
        %227 = vmatpush1.msra.mxu0 0.0
        %228 = vmatprep.subr.mxu0 0.0
        %229 = vmatpush1.msra.mxu0 0.0
        %230 = vmatprep.subr.mxu0 0.0
        %231 = vmatpush1.msra.mxu0 0.0
        %232 = vmatprep.subr.mxu0 0.0
        %233 = vmatpush1.msra.mxu0 0.0
        %234 = vmatprep.subr.mxu0 0.0
        %235 = vmatpush1.msra.mxu0 0.0
        %236 = vmatprep.subr.mxu0 0.0
        %237 = vmatpush1.msra.mxu0 0.0
        %238 = vmatprep.subr.mxu0 0.0
        %239 = vmatpush1.msra.mxu0 0.0
        %240 = vmatprep.subr.mxu0 0.0
        %241 = vmatpush1.msra.mxu0 0.0
        %242 = vmatprep.subr.mxu0 0.0
        %243 = vmatpush1.msra.mxu0 0.0
        %244 = vmatprep.subr.mxu0 0.0
        %245 = vmatpush1.msra.mxu0 0.0
        %246 = vmatprep.subr.mxu0 0.0
        %247 = vmatpush1.msra.mxu0 0.0
        %248 = vmatprep.subr.mxu0 0.0
        %249 = vmatpush1.msra.mxu0 0.0
        %250 = vmatprep.subr.mxu0 0.0
        %251 = vmatpush1.msra.mxu0 0.0
        %252 = vmatprep.subr.mxu0 0.0
        %253 = vmatpush1.msra.mxu0 0.0
        %254 = vmatprep.subr.mxu0 0.0
        %255 = vmatpush1.msra.mxu0 0.0
        %256 = vmatprep.subr.mxu0 0.0
        %257 = vmatpush1.msra.mxu0 0.0
        %258 = vmatprep.subr.mxu0 0.0
        %259 = vmatpush1.msra.mxu0 0.0
        %260 = vmatprep.subr.mxu0 0.0
        %261 = vmatpush1.msra.mxu0 0.0
        %262 = vmatprep.subr.mxu0 0.0
        %263 = vmatpush1.msra.mxu0 0.0
        %264 = vmatprep.subr.mxu0 0.0
        %265 = vmatpush1.msra.mxu0 0.0
        %266 = vmatprep.subr.mxu0 0.0
        %267 = vmatpush1.msra.mxu0 0.0
        %268 = vmatprep.subr.mxu0 0.0
        %269 = vmatpush1.msra.mxu0 0.0
        %270 = vmatprep.subr.mxu0 0.0
        %271 = vmatpush1.msra.mxu0 0.0
        %272 = vmatprep.subr.mxu0 0.0
        %273 = vmatpush1.msra.mxu0 0.0
        %274 = vmatprep.subr.mxu0 0.0
        %275 = vmatpush1.msra.mxu0 0.0
        %276 = vmatprep.subr.mxu0 0.0
        %277 = vmatpush1.msra.mxu0 0.0
        %278 = vmatprep.subr.mxu0 0.0
        %279 = vmatpush1.msra.mxu0 0.0
        %280 = vmatprep.subr.mxu0 0.0
        %281 = vmatpush1.msra.mxu0 0.0
        %282 = vmatprep.subr.mxu0 0.0
        %283 = vmatpush1.msra.mxu0 0.0
        %284 = vmatprep.mubr.f32.mxu0 0.0
        %285 = vmatmul.mubr.f32.gmra.mrb[0].mxu0 %v218
        %v286 = vpop.f32.mrb[0].mxu0
        %v287 = vadd.f32 0.0, %v286
        %v288 = vpop.f32.mrb[0].mxu0
        %289 = vdwg.mxu0
        %s290 = smul.u32 %s208, 2
        %s291 = scalar_lea.vmem %s191, %s290
        %v292 = vld [vmem:[%s291] sm:$0x3]
        %v293 = vadd.f32 %v292, %v287
        %v294 = vxor.u32 %v293, 2147483648
        %v295 = vmul.f32 %v294, 1.442695
        %v296 = vpow.pop %v295
        %v297 = vadd.f32 %v296, 1.0
        %v298 = vrcp.pop %v297
        %v299 = vmul.f32 1.0, %v298
        %v300 = vld [vmem:[%s199] sm:$0x1]
        %v302 = vlaneseq
        %v303 = vshrl.u32 %v302, 7
        %v304 = vsub.s32 0, %v303
        %v305 = vrot.slane %v300, %v304
        %306 = vrot.lane.b32.xlu0 %v305, 32
        %v307 = vpop.permute.xlu0 %306
        %v309 = vadd.f32 %v287, %v307
        %311 = vrot.lane.b32.xlu0 %v309, 96
        %v312 = vpop.permute.xlu0 %311
        %v314 = vmul.f32 %v299, %v312
        %316 = vrot.lane.b32.xlu0 %v314, 32
        %v317 = vpop.permute.xlu0 %316
        %v319 = vadd.f32 %v292, %v317
        %v320 = vtanh.pop %v319
        %v321 = vsub.f32 1.0, %v299
        %323 = vrot.lane.b32.xlu0 %v320, 112
        %v324 = vpop.permute.xlu0 %323
        %v326 = vmul.f32 %v321, %v324
        %327 = vrot.lane.b32.xlu0 %v213, 16
        %v328 = vpop.permute.xlu0 %327
        %v330 = vmul.f32 %v299, %v328
        %v331 = vadd.f32 %v326, %v330
        %333 = vrot.lane.b32.xlu0 %v331, 112
        %v334 = vpop.permute.xlu0 %333
        %336 = vst.msk [vmem:[#allocation2] sm:$0x3] %vm205, %v334
        %s337 = scalar_lea.vmem %s204, %s290
        %338 = vst.msk [vmem:[%s337] sm:$0x3] %vm205, %v334
      $region37: #{soft_masked_bert_forward.4} parent=31 // loop_footer
        %s212 = sadd.s32 1, %s208
      $region38: #{soft_masked_bert_forward.4} parent=31 // loop_footer_branch
        %207 = sbr.rel target = $region34
      $region39: #{soft_masked_bert_forward.4} parent=31 // loop_exit
        _
      %p339 = scmp.lt.s32.totalorder %s14, 1
      %s340 = scalar_select %p339, %s14, 1
      %s341 = smul.addr %s340, 8
      %s342 = smul.addr %s341, 2
      %s343 = scalar_lea.vmem %s3, %s342
      // Predicated region
      $region40: #{soft_masked_bert_forward.4} parent=31 // pred_check
        %p344 = pneg %p110
      $region41: #{soft_masked_bert_forward.4} parent=31 // pred_check_branch
        %346 = sbr.rel (%p344) target = $region43
      $region42: #{soft_masked_bert_forward.4} parent=31 // pred_region
        _
      $region43: #{soft_masked_bert_forward.4} parent=31 // pred_fallthru
        _
    $region32: #{soft_masked_bert_forward.4} parent=5 // pred_fallthru
      _
    %p347 = scmp.le.s32.totalorder 2, %s9
    // Predicated region
    $region44: #{soft_masked_bert_forward.4} parent=5 // pred_check
      %p348 = pneg %p347
    $region45: #{soft_masked_bert_forward.4} parent=5 // pred_check_branch
      %350 = sbr.rel (%p348) target = $region47
    $region46: #{soft_masked_bert_forward.4} parent=5 // pred_region
      %s351 = ssub.s32 %s9, 2
      // Predicated region
      $region48: #{soft_masked_bert_forward.4} parent=46 // pred_check
        %p352 = pneg %p116
      $region49: #{soft_masked_bert_forward.4} parent=46 // pred_check_branch
        %354 = sbr.rel (%p352) target = $region51
      $region50: #{soft_masked_bert_forward.4} parent=46 // pred_region
        %p355 = scmp.lt.s32.totalorder %s15, 1
        %s356 = scalar_select %p355, %s15, 1
        %s357 = smul.addr %s356, 8
        %s358 = smul.addr %s357, 2
        %s359 = scalar_lea.vmem %s3, %s358
      $region51: #{soft_masked_bert_forward.4} parent=46 // pred_fallthru
        _
    $region47: #{soft_masked_bert_forward.4} parent=5 // pred_fallthru
      _
  $region6: #{soft_masked_bert_forward.4} parent=0 // loop_footer
    %s13 = sadd.s32 1, %s9
  $region7: #{soft_masked_bert_forward.4} parent=0 // loop_footer_branch
    %8 = sbr.rel target = $region3
  $region8: #{soft_masked_bert_forward.4} parent=0 // loop_exit
    _

// kernel: soft_masked_bert_forward.5
$region0: #{soft_masked_bert_forward.5}
  #allocation0 [shape = 'u32[]', space=smem, size = 0x4, offset = 0x4, fixed_abs, tag = 'smem constant byte address 0x4 - core index']
  #allocation1 [shape = 'u32[144,128]{1,0:T(1,128)}', space=vmem, size = 0x12000, scoped, tag = 'internal scratch']
  #allocation2 [shape = 'f32[16,32]{1,0:T(8,128)}', space=vmem, size = 0x2000, scoped, tag = 'scratch operand']
  #allocation3 [shape = 'f32[16,32]{1,0:T(8,128)}', space=vmem, size = 0x2000, scoped, tag = 'scratch operand']
  #allocation4 [shape = 'f32[1,1]{1,0:T(1,128)S(1)}', space=vmem, size = 0x200, scoped, tag = 'scoped memory for soft_masked_bert_forward.5']
  %s0 = inlined_call_operand.vmem [shape: f32[16,32], index: 0, kind: input, shape index: {}]
  %s1 = inlined_call_operand.vmem [shape: f32[32,1], index: 1, kind: input, shape index: {}]
  %s2 = inlined_call_operand.<no memory space> [shape: f32[1,1], index: 2, kind: input, shape index: {}]
  %s3 = inlined_call_operand.vmem [shape: f32[16,32], index: 3, kind: input, shape index: {}]
  %s4 = inlined_call_operand.vmem [shape: f32[1,32], index: 4, kind: input, shape index: {}]
  %s5 = inlined_call_operand.vmem [shape: f32[2,32,96], index: 5, kind: input, shape index: {}]
  %s6 = inlined_call_operand.vmem [shape: f32[2,1,96], index: 6, kind: input, shape index: {}]
  %s7 = inlined_call_operand.vmem [shape: f32[2,32,32], index: 7, kind: input, shape index: {}]
  %s8 = inlined_call_operand.vmem [shape: f32[2,1,32], index: 8, kind: input, shape index: {}]
  %s9 = inlined_call_operand.vmem [shape: f32[2,1,32], index: 9, kind: input, shape index: {}]
  %s10 = inlined_call_operand.vmem [shape: f32[2,1,32], index: 10, kind: input, shape index: {}]
  %s11 = inlined_call_operand.vmem [shape: f32[2,32,64], index: 11, kind: input, shape index: {}]
  %s12 = inlined_call_operand.vmem [shape: f32[2,1,64], index: 12, kind: input, shape index: {}]
  %s13 = inlined_call_operand.vmem [shape: f32[2,64,32], index: 13, kind: input, shape index: {}]
  %s14 = inlined_call_operand.vmem [shape: f32[2,1,32], index: 14, kind: input, shape index: {}]
  %s15 = inlined_call_operand.vmem [shape: f32[2,1,32], index: 15, kind: input, shape index: {}]
  %s16 = inlined_call_operand.vmem [shape: f32[2,1,32], index: 16, kind: input, shape index: {}]
  %s17 = inlined_call_operand.vmem [shape: f32[32,128], index: 17, kind: input, shape index: {}]
  %s18 = inlined_call_operand.vmem [shape: f32[1,128], index: 18, kind: input, shape index: {}]
  %s19 = inlined_call_operand.hbm [shape: f32[16,128], index: 19, kind: output, shape index: {0}]
  %s20 = inlined_call_operand.vmem [shape: f32[16,1], index: 20, kind: output, shape index: {1}]
  %21 = xla_tuple %s19, %s20
  %s22 = sld [smem:[#allocation0]]
  $region125: #{soft_masked_bert_forward.5} parent=0
    _
  %s24 = ssub.s32 1, %s22
  %s25 = scalar_select 0, %s24, %s22
  %v26 = vstv %s2
  %27 = vst [vmem:[#allocation4] sm:$0x1] %v26
  $region1: #{soft_masked_bert_forward.5} parent=0
    #allocation5 [shape = 'u8[8192]{0}', space=vmem, size = 0x2000, scoped, tag = 'output window, operand 0, single buffered']
    #allocation6 [shape = 's32[2]{0}', space=sflag, size = 0x8, scoped, tag = 'scoped memory for soft_masked_bert_forward.5']
    %28 = vsyncpa [#allocation6], 0
    loop: start=0, step=1, limit=4
    $region2: #{soft_masked_bert_forward.5} parent=1 // loop_pre_header
      _
    $region3: #{soft_masked_bert_forward.5} parent=1 // loop_header
      %s30 = sphi 0, %s34
      %p31 = scmp.ge.s32.totalorder %s30, 4
      %s38 = sphi 0, %s38
      %s40 = sphi 0, %s38
      %s41 = sphi 0, %s40
      %s55 = sphi 0, %s41
      %s59 = sphi 0, %s59
      %s61 = sphi 0, %s59
      %s62 = sphi 0, %s61
      %s76 = sphi 0, %s62
      %s80 = sphi 0, %s80
      %s82 = sphi 0, %s80
      %s83 = sphi 0, %s82
      %s97 = sphi 0, %s83
      %s101 = sphi 0, %s101
      %s103 = sphi 0, %s101
      %s104 = sphi 0, %s103
      %s118 = sphi 0, %s104
      %s122 = sphi 0, %s122
      %s124 = sphi 0, %s122
      %s125 = sphi 0, %s124
      %s139 = sphi 0, %s125
      %s145 = sphi 0, %s147
      %s148 = sphi 0, %s145
      %s149 = sphi 0, %s148
      %s165 = sphi 0, %s149
      %s171 = sphi 0, %s173
      %s174 = sphi 0, %s171
      %s175 = sphi 0, %s174
      %s191 = sphi 0, %s175
      %s197 = sphi 0, %s199
      %s200 = sphi 0, %s197
      %s201 = sphi 0, %s200
      %s217 = sphi 0, %s201
      %s223 = sphi 0, %s225
      %s226 = sphi 0, %s223
      %s227 = sphi 0, %s226
      %s243 = sphi 0, %s227
      %s249 = sphi 0, %s251
      %s252 = sphi 0, %s249
      %s253 = sphi 0, %s252
      %s269 = sphi 0, %s253
      %s275 = sphi 0, %s277
      %s278 = sphi 0, %s275
      %s279 = sphi 0, %s278
      %s295 = sphi 0, %s279
      %s301 = sphi 0, %s303
      %s304 = sphi 0, %s301
      %s305 = sphi 0, %s304
      %s321 = sphi 0, %s305
      %s327 = sphi 0, %s329
      %s330 = sphi 0, %s327
      %s331 = sphi 0, %s330
      %s347 = sphi 0, %s331
      %s353 = sphi 0, %s355
      %s356 = sphi 0, %s353
      %s357 = sphi 0, %s356
      %s373 = sphi 0, %s357
      %s379 = sphi 0, %s381
      %s382 = sphi 0, %s379
      %s383 = sphi 0, %s382
      %s399 = sphi 0, %s383
      %s405 = sphi 0, %s407
      %s408 = sphi 0, %s405
      %s409 = sphi 0, %s408
      %s425 = sphi 0, %s409
      %s431 = sphi 0, %s433
      %s434 = sphi 0, %s431
      %s435 = sphi 0, %s434
      %s451 = sphi 0, %s435
      %s455 = sphi 0, %s455
      %s457 = sphi 0, %s455
      %s458 = sphi 0, %s457
      %s472 = sphi 0, %s458
      %s476 = sphi 0, %s476
      %s478 = sphi 0, %s476
      %s479 = sphi 0, %s478
      %s493 = sphi 0, %s479
      %s497 = sphi 0, %s497
      %s499 = sphi 0, %s497
      %s500 = sphi 0, %s499
      %s514 = sphi 0, %s500
      %s518 = sphi 0, %s518
      %s520 = sphi 0, %s518
      %s521 = sphi 0, %s520
      %s535 = sphi 0, %s521
    $region4: #{soft_masked_bert_forward.5} parent=1 // loop_header_branch
      %33 = sbr.rel (%p31) target = $region8
    $region5: #{soft_masked_bert_forward.5} parent=1 // loop_body
      %s35 = ssub.s32 %s30, 1
      %s36 = ssub.s32 %s30, 2
      %s37 = sadd.s32 %s30, 1
      %s39 = sadd.s32 %s38, 1
      %p42 = scmp.eq.s32.totalorder %s30, 1
      %p43 = scmp.ne.s32.totalorder %s38, %s40
      %p44 = scmp.eq.s32.totalorder %s30, 0
      %p45 = por %p43, %p44
      %p46 = scmp.ne.s32.totalorder %s38, %s40
      %p47 = scmp.eq.s32.totalorder %s35, 1
      %p48 = por %p46, %p47
      %p49 = scmp.ne.s32.totalorder %s40, %s41
      %p50 = scmp.eq.s32.totalorder %s35, 0
      %p51 = por %p49, %p50
      %p52 = scmp.ne.s32.totalorder %s40, %s41
      %p53 = scmp.eq.s32.totalorder %s36, 1
      %p54 = por %p52, %p53
      %p56 = scmp.ne.s32.totalorder %s41, %s55
      %p57 = scmp.eq.s32.totalorder %s36, 0
      %p58 = por %p56, %p57
      %s60 = sadd.s32 %s59, 1
      %p63 = scmp.eq.s32.totalorder %s30, 1
      %p64 = scmp.ne.s32.totalorder %s59, %s61
      %p65 = scmp.eq.s32.totalorder %s30, 0
      %p66 = por %p64, %p65
      %p67 = scmp.ne.s32.totalorder %s59, %s61
      %p68 = scmp.eq.s32.totalorder %s35, 1
      %p69 = por %p67, %p68
      %p70 = scmp.ne.s32.totalorder %s61, %s62
      %p71 = scmp.eq.s32.totalorder %s35, 0
      %p72 = por %p70, %p71
      %p73 = scmp.ne.s32.totalorder %s61, %s62
      %p74 = scmp.eq.s32.totalorder %s36, 1
      %p75 = por %p73, %p74
      %p77 = scmp.ne.s32.totalorder %s62, %s76
      %p78 = scmp.eq.s32.totalorder %s36, 0
      %p79 = por %p77, %p78
      %s81 = sadd.s32 %s80, 1
      %p84 = scmp.eq.s32.totalorder %s30, 1
      %p85 = scmp.ne.s32.totalorder %s80, %s82
      %p86 = scmp.eq.s32.totalorder %s30, 0
      %p87 = por %p85, %p86
      %p88 = scmp.ne.s32.totalorder %s80, %s82
      %p89 = scmp.eq.s32.totalorder %s35, 1
      %p90 = por %p88, %p89
      %p91 = scmp.ne.s32.totalorder %s82, %s83
      %p92 = scmp.eq.s32.totalorder %s35, 0
      %p93 = por %p91, %p92
      %p94 = scmp.ne.s32.totalorder %s82, %s83
      %p95 = scmp.eq.s32.totalorder %s36, 1
      %p96 = por %p94, %p95
      %p98 = scmp.ne.s32.totalorder %s83, %s97
      %p99 = scmp.eq.s32.totalorder %s36, 0
      %p100 = por %p98, %p99
      %s102 = sadd.s32 %s101, 1
      %p105 = scmp.eq.s32.totalorder %s30, 1
      %p106 = scmp.ne.s32.totalorder %s101, %s103
      %p107 = scmp.eq.s32.totalorder %s30, 0
      %p108 = por %p106, %p107
      %p109 = scmp.ne.s32.totalorder %s101, %s103
      %p110 = scmp.eq.s32.totalorder %s35, 1
      %p111 = por %p109, %p110
      %p112 = scmp.ne.s32.totalorder %s103, %s104
      %p113 = scmp.eq.s32.totalorder %s35, 0
      %p114 = por %p112, %p113
      %p115 = scmp.ne.s32.totalorder %s103, %s104
      %p116 = scmp.eq.s32.totalorder %s36, 1
      %p117 = por %p115, %p116
      %p119 = scmp.ne.s32.totalorder %s104, %s118
      %p120 = scmp.eq.s32.totalorder %s36, 0
      %p121 = por %p119, %p120
      %s123 = sadd.s32 %s122, 1
      %p126 = scmp.eq.s32.totalorder %s30, 1
      %p127 = scmp.ne.s32.totalorder %s122, %s124
      %p128 = scmp.eq.s32.totalorder %s30, 0
      %p129 = por %p127, %p128
      %p130 = scmp.ne.s32.totalorder %s122, %s124
      %p131 = scmp.eq.s32.totalorder %s35, 1
      %p132 = por %p130, %p131
      %p133 = scmp.ne.s32.totalorder %s124, %s125
      %p134 = scmp.eq.s32.totalorder %s35, 0
      %p135 = por %p133, %p134
      %p136 = scmp.ne.s32.totalorder %s124, %s125
      %p137 = scmp.eq.s32.totalorder %s36, 1
      %p138 = por %p136, %p137
      %p140 = scmp.ne.s32.totalorder %s125, %s139
      %p141 = scmp.eq.s32.totalorder %s36, 0
      %p142 = por %p140, %p141
      %s143 = ssub.s32 %s30, %s37
      %p144 = scmp.eq.s32.totalorder %s143, 0
      %s146 = sadd.s32 %s145, 1
      %s147 = scalar_select %p144, %s145, %s146
      %p150 = pneg %p144
      %p151 = scmp.eq.s32.totalorder %s30, 1
      %p152 = por %p150, %p151
      %p153 = scmp.ne.s32.totalorder %s145, %s148
      %p154 = scmp.eq.s32.totalorder %s30, 0
      %p155 = por %p153, %p154
      %p156 = scmp.ne.s32.totalorder %s145, %s148
      %p157 = scmp.eq.s32.totalorder %s35, 1
      %p158 = por %p156, %p157
      %p159 = scmp.ne.s32.totalorder %s148, %s149
      %p160 = scmp.eq.s32.totalorder %s35, 0
      %p161 = por %p159, %p160
      %p162 = scmp.ne.s32.totalorder %s148, %s149
      %p163 = scmp.eq.s32.totalorder %s36, 1
      %p164 = por %p162, %p163
      %p166 = scmp.ne.s32.totalorder %s149, %s165
      %p167 = scmp.eq.s32.totalorder %s36, 0
      %p168 = por %p166, %p167
      %s169 = ssub.s32 %s30, %s37
      %p170 = scmp.eq.s32.totalorder %s169, 0
      %s172 = sadd.s32 %s171, 1
      %s173 = scalar_select %p170, %s171, %s172
      %p176 = pneg %p170
      %p177 = scmp.eq.s32.totalorder %s30, 1
      %p178 = por %p176, %p177
      %p179 = scmp.ne.s32.totalorder %s171, %s174
      %p180 = scmp.eq.s32.totalorder %s30, 0
      %p181 = por %p179, %p180
      %p182 = scmp.ne.s32.totalorder %s171, %s174
      %p183 = scmp.eq.s32.totalorder %s35, 1
      %p184 = por %p182, %p183
      %p185 = scmp.ne.s32.totalorder %s174, %s175
      %p186 = scmp.eq.s32.totalorder %s35, 0
      %p187 = por %p185, %p186
      %p188 = scmp.ne.s32.totalorder %s174, %s175
      %p189 = scmp.eq.s32.totalorder %s36, 1
      %p190 = por %p188, %p189
      %p192 = scmp.ne.s32.totalorder %s175, %s191
      %p193 = scmp.eq.s32.totalorder %s36, 0
      %p194 = por %p192, %p193
      %s195 = ssub.s32 %s30, %s37
      %p196 = scmp.eq.s32.totalorder %s195, 0
      %s198 = sadd.s32 %s197, 1
      %s199 = scalar_select %p196, %s197, %s198
      %p202 = pneg %p196
      %p203 = scmp.eq.s32.totalorder %s30, 1
      %p204 = por %p202, %p203
      %p205 = scmp.ne.s32.totalorder %s197, %s200
      %p206 = scmp.eq.s32.totalorder %s30, 0
      %p207 = por %p205, %p206
      %p208 = scmp.ne.s32.totalorder %s197, %s200
      %p209 = scmp.eq.s32.totalorder %s35, 1
      %p210 = por %p208, %p209
      %p211 = scmp.ne.s32.totalorder %s200, %s201
      %p212 = scmp.eq.s32.totalorder %s35, 0
      %p213 = por %p211, %p212
      %p214 = scmp.ne.s32.totalorder %s200, %s201
      %p215 = scmp.eq.s32.totalorder %s36, 1
      %p216 = por %p214, %p215
      %p218 = scmp.ne.s32.totalorder %s201, %s217
      %p219 = scmp.eq.s32.totalorder %s36, 0
      %p220 = por %p218, %p219
      %s221 = ssub.s32 %s30, %s37
      %p222 = scmp.eq.s32.totalorder %s221, 0
      %s224 = sadd.s32 %s223, 1
      %s225 = scalar_select %p222, %s223, %s224
      %p228 = pneg %p222
      %p229 = scmp.eq.s32.totalorder %s30, 1
      %p230 = por %p228, %p229
      %p231 = scmp.ne.s32.totalorder %s223, %s226
      %p232 = scmp.eq.s32.totalorder %s30, 0
      %p233 = por %p231, %p232
      %p234 = scmp.ne.s32.totalorder %s223, %s226
      %p235 = scmp.eq.s32.totalorder %s35, 1
      %p236 = por %p234, %p235
      %p237 = scmp.ne.s32.totalorder %s226, %s227
      %p238 = scmp.eq.s32.totalorder %s35, 0
      %p239 = por %p237, %p238
      %p240 = scmp.ne.s32.totalorder %s226, %s227
      %p241 = scmp.eq.s32.totalorder %s36, 1
      %p242 = por %p240, %p241
      %p244 = scmp.ne.s32.totalorder %s227, %s243
      %p245 = scmp.eq.s32.totalorder %s36, 0
      %p246 = por %p244, %p245
      %s247 = ssub.s32 %s30, %s37
      %p248 = scmp.eq.s32.totalorder %s247, 0
      %s250 = sadd.s32 %s249, 1
      %s251 = scalar_select %p248, %s249, %s250
      %p254 = pneg %p248
      %p255 = scmp.eq.s32.totalorder %s30, 1
      %p256 = por %p254, %p255
      %p257 = scmp.ne.s32.totalorder %s249, %s252
      %p258 = scmp.eq.s32.totalorder %s30, 0
      %p259 = por %p257, %p258
      %p260 = scmp.ne.s32.totalorder %s249, %s252
      %p261 = scmp.eq.s32.totalorder %s35, 1
      %p262 = por %p260, %p261
      %p263 = scmp.ne.s32.totalorder %s252, %s253
      %p264 = scmp.eq.s32.totalorder %s35, 0
      %p265 = por %p263, %p264
      %p266 = scmp.ne.s32.totalorder %s252, %s253
      %p267 = scmp.eq.s32.totalorder %s36, 1
      %p268 = por %p266, %p267
      %p270 = scmp.ne.s32.totalorder %s253, %s269
      %p271 = scmp.eq.s32.totalorder %s36, 0
      %p272 = por %p270, %p271
      %s273 = ssub.s32 %s30, %s37
      %p274 = scmp.eq.s32.totalorder %s273, 0
      %s276 = sadd.s32 %s275, 1
      %s277 = scalar_select %p274, %s275, %s276
      %p280 = pneg %p274
      %p281 = scmp.eq.s32.totalorder %s30, 1
      %p282 = por %p280, %p281
      %p283 = scmp.ne.s32.totalorder %s275, %s278
      %p284 = scmp.eq.s32.totalorder %s30, 0
      %p285 = por %p283, %p284
      %p286 = scmp.ne.s32.totalorder %s275, %s278
      %p287 = scmp.eq.s32.totalorder %s35, 1
      %p288 = por %p286, %p287
      %p289 = scmp.ne.s32.totalorder %s278, %s279
      %p290 = scmp.eq.s32.totalorder %s35, 0
      %p291 = por %p289, %p290
      %p292 = scmp.ne.s32.totalorder %s278, %s279
      %p293 = scmp.eq.s32.totalorder %s36, 1
      %p294 = por %p292, %p293
      %p296 = scmp.ne.s32.totalorder %s279, %s295
      %p297 = scmp.eq.s32.totalorder %s36, 0
      %p298 = por %p296, %p297
      %s299 = ssub.s32 %s30, %s37
      %p300 = scmp.eq.s32.totalorder %s299, 0
      %s302 = sadd.s32 %s301, 1
      %s303 = scalar_select %p300, %s301, %s302
      %p306 = pneg %p300
      %p307 = scmp.eq.s32.totalorder %s30, 1
      %p308 = por %p306, %p307
      %p309 = scmp.ne.s32.totalorder %s301, %s304
      %p310 = scmp.eq.s32.totalorder %s30, 0
      %p311 = por %p309, %p310
      %p312 = scmp.ne.s32.totalorder %s301, %s304
      %p313 = scmp.eq.s32.totalorder %s35, 1
      %p314 = por %p312, %p313
      %p315 = scmp.ne.s32.totalorder %s304, %s305
      %p316 = scmp.eq.s32.totalorder %s35, 0
      %p317 = por %p315, %p316
      %p318 = scmp.ne.s32.totalorder %s304, %s305
      %p319 = scmp.eq.s32.totalorder %s36, 1
      %p320 = por %p318, %p319
      %p322 = scmp.ne.s32.totalorder %s305, %s321
      %p323 = scmp.eq.s32.totalorder %s36, 0
      %p324 = por %p322, %p323
      %s325 = ssub.s32 %s30, %s37
      %p326 = scmp.eq.s32.totalorder %s325, 0
      %s328 = sadd.s32 %s327, 1
      %s329 = scalar_select %p326, %s327, %s328
      %p332 = pneg %p326
      %p333 = scmp.eq.s32.totalorder %s30, 1
      %p334 = por %p332, %p333
      %p335 = scmp.ne.s32.totalorder %s327, %s330
      %p336 = scmp.eq.s32.totalorder %s30, 0
      %p337 = por %p335, %p336
      %p338 = scmp.ne.s32.totalorder %s327, %s330
      %p339 = scmp.eq.s32.totalorder %s35, 1
      %p340 = por %p338, %p339
      %p341 = scmp.ne.s32.totalorder %s330, %s331
      %p342 = scmp.eq.s32.totalorder %s35, 0
      %p343 = por %p341, %p342
      %p344 = scmp.ne.s32.totalorder %s330, %s331
      %p345 = scmp.eq.s32.totalorder %s36, 1
      %p346 = por %p344, %p345
      %p348 = scmp.ne.s32.totalorder %s331, %s347
      %p349 = scmp.eq.s32.totalorder %s36, 0
      %p350 = por %p348, %p349
      %s351 = ssub.s32 %s30, %s37
      %p352 = scmp.eq.s32.totalorder %s351, 0
      %s354 = sadd.s32 %s353, 1
      %s355 = scalar_select %p352, %s353, %s354
      %p358 = pneg %p352
      %p359 = scmp.eq.s32.totalorder %s30, 1
      %p360 = por %p358, %p359
      %p361 = scmp.ne.s32.totalorder %s353, %s356
      %p362 = scmp.eq.s32.totalorder %s30, 0
      %p363 = por %p361, %p362
      %p364 = scmp.ne.s32.totalorder %s353, %s356
      %p365 = scmp.eq.s32.totalorder %s35, 1
      %p366 = por %p364, %p365
      %p367 = scmp.ne.s32.totalorder %s356, %s357
      %p368 = scmp.eq.s32.totalorder %s35, 0
      %p369 = por %p367, %p368
      %p370 = scmp.ne.s32.totalorder %s356, %s357
      %p371 = scmp.eq.s32.totalorder %s36, 1
      %p372 = por %p370, %p371
      %p374 = scmp.ne.s32.totalorder %s357, %s373
      %p375 = scmp.eq.s32.totalorder %s36, 0
      %p376 = por %p374, %p375
      %s377 = ssub.s32 %s30, %s37
      %p378 = scmp.eq.s32.totalorder %s377, 0
      %s380 = sadd.s32 %s379, 1
      %s381 = scalar_select %p378, %s379, %s380
      %p384 = pneg %p378
      %p385 = scmp.eq.s32.totalorder %s30, 1
      %p386 = por %p384, %p385
      %p387 = scmp.ne.s32.totalorder %s379, %s382
      %p388 = scmp.eq.s32.totalorder %s30, 0
      %p389 = por %p387, %p388
      %p390 = scmp.ne.s32.totalorder %s379, %s382
      %p391 = scmp.eq.s32.totalorder %s35, 1
      %p392 = por %p390, %p391
      %p393 = scmp.ne.s32.totalorder %s382, %s383
      %p394 = scmp.eq.s32.totalorder %s35, 0
      %p395 = por %p393, %p394
      %p396 = scmp.ne.s32.totalorder %s382, %s383
      %p397 = scmp.eq.s32.totalorder %s36, 1
      %p398 = por %p396, %p397
      %p400 = scmp.ne.s32.totalorder %s383, %s399
      %p401 = scmp.eq.s32.totalorder %s36, 0
      %p402 = por %p400, %p401
      %s403 = ssub.s32 %s30, %s37
      %p404 = scmp.eq.s32.totalorder %s403, 0
      %s406 = sadd.s32 %s405, 1
      %s407 = scalar_select %p404, %s405, %s406
      %p410 = pneg %p404
      %p411 = scmp.eq.s32.totalorder %s30, 1
      %p412 = por %p410, %p411
      %p413 = scmp.ne.s32.totalorder %s405, %s408
      %p414 = scmp.eq.s32.totalorder %s30, 0
      %p415 = por %p413, %p414
      %p416 = scmp.ne.s32.totalorder %s405, %s408
      %p417 = scmp.eq.s32.totalorder %s35, 1
      %p418 = por %p416, %p417
      %p419 = scmp.ne.s32.totalorder %s408, %s409
      %p420 = scmp.eq.s32.totalorder %s35, 0
      %p421 = por %p419, %p420
      %p422 = scmp.ne.s32.totalorder %s408, %s409
      %p423 = scmp.eq.s32.totalorder %s36, 1
      %p424 = por %p422, %p423
      %p426 = scmp.ne.s32.totalorder %s409, %s425
      %p427 = scmp.eq.s32.totalorder %s36, 0
      %p428 = por %p426, %p427
      %s429 = ssub.s32 %s30, %s37
      %p430 = scmp.eq.s32.totalorder %s429, 0
      %s432 = sadd.s32 %s431, 1
      %s433 = scalar_select %p430, %s431, %s432
      %p436 = pneg %p430
      %p437 = scmp.eq.s32.totalorder %s30, 1
      %p438 = por %p436, %p437
      %p439 = scmp.ne.s32.totalorder %s431, %s434
      %p440 = scmp.eq.s32.totalorder %s30, 0
      %p441 = por %p439, %p440
      %p442 = scmp.ne.s32.totalorder %s431, %s434
      %p443 = scmp.eq.s32.totalorder %s35, 1
      %p444 = por %p442, %p443
      %p445 = scmp.ne.s32.totalorder %s434, %s435
      %p446 = scmp.eq.s32.totalorder %s35, 0
      %p447 = por %p445, %p446
      %p448 = scmp.ne.s32.totalorder %s434, %s435
      %p449 = scmp.eq.s32.totalorder %s36, 1
      %p450 = por %p448, %p449
      %p452 = scmp.ne.s32.totalorder %s435, %s451
      %p453 = scmp.eq.s32.totalorder %s36, 0
      %p454 = por %p452, %p453
      %s456 = sadd.s32 %s455, 1
      %p459 = scmp.eq.s32.totalorder %s30, 1
      %p460 = scmp.ne.s32.totalorder %s455, %s457
      %p461 = scmp.eq.s32.totalorder %s30, 0
      %p462 = por %p460, %p461
      %p463 = scmp.ne.s32.totalorder %s455, %s457
      %p464 = scmp.eq.s32.totalorder %s35, 1
      %p465 = por %p463, %p464
      %p466 = scmp.ne.s32.totalorder %s457, %s458
      %p467 = scmp.eq.s32.totalorder %s35, 0
      %p468 = por %p466, %p467
      %p469 = scmp.ne.s32.totalorder %s457, %s458
      %p470 = scmp.eq.s32.totalorder %s36, 1
      %p471 = por %p469, %p470
      %p473 = scmp.ne.s32.totalorder %s458, %s472
      %p474 = scmp.eq.s32.totalorder %s36, 0
      %p475 = por %p473, %p474
      %s477 = sadd.s32 %s476, 1
      %p480 = scmp.eq.s32.totalorder %s30, 1
      %p481 = scmp.ne.s32.totalorder %s476, %s478
      %p482 = scmp.eq.s32.totalorder %s30, 0
      %p483 = por %p481, %p482
      %p484 = scmp.ne.s32.totalorder %s476, %s478
      %p485 = scmp.eq.s32.totalorder %s35, 1
      %p486 = por %p484, %p485
      %p487 = scmp.ne.s32.totalorder %s478, %s479
      %p488 = scmp.eq.s32.totalorder %s35, 0
      %p489 = por %p487, %p488
      %p490 = scmp.ne.s32.totalorder %s478, %s479
      %p491 = scmp.eq.s32.totalorder %s36, 1
      %p492 = por %p490, %p491
      %p494 = scmp.ne.s32.totalorder %s479, %s493
      %p495 = scmp.eq.s32.totalorder %s36, 0
      %p496 = por %p494, %p495
      %s498 = sadd.s32 %s497, 1
      %p501 = scmp.eq.s32.totalorder %s30, 1
      %p502 = scmp.ne.s32.totalorder %s497, %s499
      %p503 = scmp.eq.s32.totalorder %s30, 0
      %p504 = por %p502, %p503
      %p505 = scmp.ne.s32.totalorder %s497, %s499
      %p506 = scmp.eq.s32.totalorder %s35, 1
      %p507 = por %p505, %p506
      %p508 = scmp.ne.s32.totalorder %s499, %s500
      %p509 = scmp.eq.s32.totalorder %s35, 0
      %p510 = por %p508, %p509
      %p511 = scmp.ne.s32.totalorder %s499, %s500
      %p512 = scmp.eq.s32.totalorder %s36, 1
      %p513 = por %p511, %p512
      %p515 = scmp.ne.s32.totalorder %s500, %s514
      %p516 = scmp.eq.s32.totalorder %s36, 0
      %p517 = por %p515, %p516
      %s519 = sadd.s32 %s518, 1
      %p522 = scmp.eq.s32.totalorder %s30, 1
      %p523 = scmp.ne.s32.totalorder %s518, %s520
      %p524 = scmp.eq.s32.totalorder %s30, 0
      %p525 = por %p523, %p524
      %p526 = scmp.ne.s32.totalorder %s518, %s520
      %p527 = scmp.eq.s32.totalorder %s35, 1
      %p528 = por %p526, %p527
      %p529 = scmp.ne.s32.totalorder %s520, %s521
      %p530 = scmp.eq.s32.totalorder %s35, 0
      %p531 = por %p529, %p530
      %p532 = scmp.ne.s32.totalorder %s520, %s521
      %p533 = scmp.eq.s32.totalorder %s36, 1
      %p534 = por %p532, %p533
      %p536 = scmp.ne.s32.totalorder %s521, %s535
      %p537 = scmp.eq.s32.totalorder %s36, 0
      %p538 = por %p536, %p537
      %p539 = scmp.le.s32.totalorder 1, %s30
      %p540 = scmp.lt.s32.totalorder %s30, 3
      %p541 = pnand %p539, %p540
      %p542 = pneg %p541
      // Predicated region
      $region9: #{soft_masked_bert_forward.5} parent=5 // pred_check
        _
      $region10: #{soft_masked_bert_forward.5} parent=5 // pred_check_branch
        %544 = sbr.rel (%p541) target = $region12
      $region11: #{soft_masked_bert_forward.5} parent=5 // pred_region
        %s545 = ssub.s32 %s30, 1
        // Predicated region
        $region13: #{soft_masked_bert_forward.5} parent=11 // pred_check
          %p546 = pneg %p51
        $region14: #{soft_masked_bert_forward.5} parent=11 // pred_check_branch
          %548 = sbr.rel (%p546) target = $region16
        $region15: #{soft_masked_bert_forward.5} parent=11 // pred_region
          _
        $region16: #{soft_masked_bert_forward.5} parent=11 // pred_fallthru
          _
        // Predicated region
        $region17: #{soft_masked_bert_forward.5} parent=11 // pred_check
          %p549 = pneg %p72
        $region18: #{soft_masked_bert_forward.5} parent=11 // pred_check_branch
          %551 = sbr.rel (%p549) target = $region20
        $region19: #{soft_masked_bert_forward.5} parent=11 // pred_region
          _
        $region20: #{soft_masked_bert_forward.5} parent=11 // pred_fallthru
          _
        // Predicated region
        $region21: #{soft_masked_bert_forward.5} parent=11 // pred_check
          %p552 = pneg %p93
        $region22: #{soft_masked_bert_forward.5} parent=11 // pred_check_branch
          %554 = sbr.rel (%p552) target = $region24
        $region23: #{soft_masked_bert_forward.5} parent=11 // pred_region
          _
        $region24: #{soft_masked_bert_forward.5} parent=11 // pred_fallthru
          _
        // Predicated region
        $region25: #{soft_masked_bert_forward.5} parent=11 // pred_check
          %p555 = pneg %p114
        $region26: #{soft_masked_bert_forward.5} parent=11 // pred_check_branch
          %557 = sbr.rel (%p555) target = $region28
        $region27: #{soft_masked_bert_forward.5} parent=11 // pred_region
          _
        $region28: #{soft_masked_bert_forward.5} parent=11 // pred_fallthru
          _
        // Predicated region
        $region29: #{soft_masked_bert_forward.5} parent=11 // pred_check
          %p558 = pneg %p135
        $region30: #{soft_masked_bert_forward.5} parent=11 // pred_check_branch
          %560 = sbr.rel (%p558) target = $region32
        $region31: #{soft_masked_bert_forward.5} parent=11 // pred_region
          _
        $region32: #{soft_masked_bert_forward.5} parent=11 // pred_fallthru
          _
        // Predicated region
        $region33: #{soft_masked_bert_forward.5} parent=11 // pred_check
          %p561 = pneg %p468
        $region34: #{soft_masked_bert_forward.5} parent=11 // pred_check_branch
          %563 = sbr.rel (%p561) target = $region36
        $region35: #{soft_masked_bert_forward.5} parent=11 // pred_region
          _
        $region36: #{soft_masked_bert_forward.5} parent=11 // pred_fallthru
          _
        // Predicated region
        $region37: #{soft_masked_bert_forward.5} parent=11 // pred_check
          %p564 = pneg %p489
        $region38: #{soft_masked_bert_forward.5} parent=11 // pred_check_branch
          %566 = sbr.rel (%p564) target = $region40
        $region39: #{soft_masked_bert_forward.5} parent=11 // pred_region
          _
        $region40: #{soft_masked_bert_forward.5} parent=11 // pred_fallthru
          _
      $region12: #{soft_masked_bert_forward.5} parent=5 // pred_fallthru
        _
      %p567 = scmp.lt.s32.totalorder %s30, 2
      // Predicated region
      $region41: #{soft_masked_bert_forward.5} parent=5 // pred_check
        %p568 = pneg %p567
      $region42: #{soft_masked_bert_forward.5} parent=5 // pred_check_branch
        %570 = sbr.rel (%p568) target = $region44
      $region43: #{soft_masked_bert_forward.5} parent=5 // pred_region
        // Predicated region
        $region45: #{soft_masked_bert_forward.5} parent=43 // pred_check
          %p571 = pneg %p155
        $region46: #{soft_masked_bert_forward.5} parent=43 // pred_check_branch
          %573 = sbr.rel (%p571) target = $region48
        $region47: #{soft_masked_bert_forward.5} parent=43 // pred_region
          %p574 = scmp.lt.s32.totalorder %s30, 1
          %s575 = scalar_select %p574, %s30, 1
          %s576 = smul.addr %s575, 4
          %s577 = smul.addr %s576, 8
          %s578 = scalar_lea.vmem %s5, %s577
        $region48: #{soft_masked_bert_forward.5} parent=43 // pred_fallthru
          _
        // Predicated region
        $region49: #{soft_masked_bert_forward.5} parent=43 // pred_check
          %p579 = pneg %p181
        $region50: #{soft_masked_bert_forward.5} parent=43 // pred_check_branch
          %581 = sbr.rel (%p579) target = $region52
        $region51: #{soft_masked_bert_forward.5} parent=43 // pred_region
          %p582 = scmp.lt.s32.totalorder %s30, 1
          %s583 = scalar_select %p582, %s30, 1
          %s584 = scalar_lea.vmem %s6, %s583
        $region52: #{soft_masked_bert_forward.5} parent=43 // pred_fallthru
          _
        // Predicated region
        $region53: #{soft_masked_bert_forward.5} parent=43 // pred_check
          %p585 = pneg %p207
        $region54: #{soft_masked_bert_forward.5} parent=43 // pred_check_branch
          %587 = sbr.rel (%p585) target = $region56
        $region55: #{soft_masked_bert_forward.5} parent=43 // pred_region
          %p588 = scmp.lt.s32.totalorder %s30, 1
          %s589 = scalar_select %p588, %s30, 1
          %s590 = smul.addr %s589, 4
          %s591 = smul.addr %s590, 8
          %s592 = scalar_lea.vmem %s7, %s591
        $region56: #{soft_masked_bert_forward.5} parent=43 // pred_fallthru
          _
        // Predicated region
        $region57: #{soft_masked_bert_forward.5} parent=43 // pred_check
          %p593 = pneg %p233
        $region58: #{soft_masked_bert_forward.5} parent=43 // pred_check_branch
          %595 = sbr.rel (%p593) target = $region60
        $region59: #{soft_masked_bert_forward.5} parent=43 // pred_region
          %p596 = scmp.lt.s32.totalorder %s30, 1
          %s597 = scalar_select %p596, %s30, 1
          %s598 = scalar_lea.vmem %s8, %s597
        $region60: #{soft_masked_bert_forward.5} parent=43 // pred_fallthru
          _
        // Predicated region
        $region61: #{soft_masked_bert_forward.5} parent=43 // pred_check
          %p599 = pneg %p259
        $region62: #{soft_masked_bert_forward.5} parent=43 // pred_check_branch
          %601 = sbr.rel (%p599) target = $region64
        $region63: #{soft_masked_bert_forward.5} parent=43 // pred_region
          %p602 = scmp.lt.s32.totalorder %s30, 1
          %s603 = scalar_select %p602, %s30, 1
          %s604 = scalar_lea.vmem %s9, %s603
        $region64: #{soft_masked_bert_forward.5} parent=43 // pred_fallthru
          _
        // Predicated region
        $region65: #{soft_masked_bert_forward.5} parent=43 // pred_check
          %p605 = pneg %p285
        $region66: #{soft_masked_bert_forward.5} parent=43 // pred_check_branch
          %607 = sbr.rel (%p605) target = $region68
        $region67: #{soft_masked_bert_forward.5} parent=43 // pred_region
          %p608 = scmp.lt.s32.totalorder %s30, 1
          %s609 = scalar_select %p608, %s30, 1
          %s610 = scalar_lea.vmem %s10, %s609
        $region68: #{soft_masked_bert_forward.5} parent=43 // pred_fallthru
          _
        // Predicated region
        $region69: #{soft_masked_bert_forward.5} parent=43 // pred_check
          %p611 = pneg %p311
        $region70: #{soft_masked_bert_forward.5} parent=43 // pred_check_branch
          %613 = sbr.rel (%p611) target = $region72
        $region71: #{soft_masked_bert_forward.5} parent=43 // pred_region
          %p614 = scmp.lt.s32.totalorder %s30, 1
          %s615 = scalar_select %p614, %s30, 1
          %s616 = smul.addr %s615, 4
          %s617 = smul.addr %s616, 8
          %s618 = scalar_lea.vmem %s11, %s617
        $region72: #{soft_masked_bert_forward.5} parent=43 // pred_fallthru
          _
        // Predicated region
        $region73: #{soft_masked_bert_forward.5} parent=43 // pred_check
          %p619 = pneg %p337
        $region74: #{soft_masked_bert_forward.5} parent=43 // pred_check_branch
          %621 = sbr.rel (%p619) target = $region76
        $region75: #{soft_masked_bert_forward.5} parent=43 // pred_region
          %p622 = scmp.lt.s32.totalorder %s30, 1
          %s623 = scalar_select %p622, %s30, 1
          %s624 = scalar_lea.vmem %s12, %s623
        $region76: #{soft_masked_bert_forward.5} parent=43 // pred_fallthru
          _
        // Predicated region
        $region77: #{soft_masked_bert_forward.5} parent=43 // pred_check
          %p625 = pneg %p363
        $region78: #{soft_masked_bert_forward.5} parent=43 // pred_check_branch
          %627 = sbr.rel (%p625) target = $region80
        $region79: #{soft_masked_bert_forward.5} parent=43 // pred_region
          %p628 = scmp.lt.s32.totalorder %s30, 1
          %s629 = scalar_select %p628, %s30, 1
          %s630 = smul.addr %s629, 8
          %s631 = smul.addr %s630, 8
          %s632 = scalar_lea.vmem %s13, %s631
        $region80: #{soft_masked_bert_forward.5} parent=43 // pred_fallthru
          _
        // Predicated region
        $region81: #{soft_masked_bert_forward.5} parent=43 // pred_check
          %p633 = pneg %p389
        $region82: #{soft_masked_bert_forward.5} parent=43 // pred_check_branch
          %635 = sbr.rel (%p633) target = $region84
        $region83: #{soft_masked_bert_forward.5} parent=43 // pred_region
          %p636 = scmp.lt.s32.totalorder %s30, 1
          %s637 = scalar_select %p636, %s30, 1
          %s638 = scalar_lea.vmem %s14, %s637
        $region84: #{soft_masked_bert_forward.5} parent=43 // pred_fallthru
          _
        // Predicated region
        $region85: #{soft_masked_bert_forward.5} parent=43 // pred_check
          %p639 = pneg %p415
        $region86: #{soft_masked_bert_forward.5} parent=43 // pred_check_branch
          %641 = sbr.rel (%p639) target = $region88
        $region87: #{soft_masked_bert_forward.5} parent=43 // pred_region
          %p642 = scmp.lt.s32.totalorder %s30, 1
          %s643 = scalar_select %p642, %s30, 1
          %s644 = scalar_lea.vmem %s15, %s643
        $region88: #{soft_masked_bert_forward.5} parent=43 // pred_fallthru
          _
        // Predicated region
        $region89: #{soft_masked_bert_forward.5} parent=43 // pred_check
          %p645 = pneg %p441
        $region90: #{soft_masked_bert_forward.5} parent=43 // pred_check_branch
          %647 = sbr.rel (%p645) target = $region92
        $region91: #{soft_masked_bert_forward.5} parent=43 // pred_region
          %p648 = scmp.lt.s32.totalorder %s30, 1
          %s649 = scalar_select %p648, %s30, 1
          %s650 = scalar_lea.vmem %s16, %s649
        $region92: #{soft_masked_bert_forward.5} parent=43 // pred_fallthru
          _
      $region44: #{soft_masked_bert_forward.5} parent=5 // pred_fallthru
        _
      %p651 = scmp.le.s32.totalorder 1, %s30
      %p652 = scmp.lt.s32.totalorder %s30, 3
      %p653 = pnand %p651, %p652
      %p654 = pneg %p653
      // Predicated region
      $region93: #{soft_masked_bert_forward.5} parent=5 // pred_check
        _
      $region94: #{soft_masked_bert_forward.5} parent=5 // pred_check_branch
        %656 = sbr.rel (%p653) target = $region96
      $region95: #{soft_masked_bert_forward.5} parent=5 // pred_region
        %s657 = ssub.s32 %s30, 1
        %p658 = pneg %p51
        %p659 = pneg %p48
        %p660 = pneg %p72
        %p661 = pneg %p69
        %p662 = pneg %p93
        %p663 = pneg %p90
        %p664 = pneg %p114
        %p665 = pneg %p111
        %p666 = pneg %p135
        %p667 = pneg %p132
        %p668 = scmp.lt.s32.totalorder %s35, 1
        %s669 = scalar_select %p668, %s35, 1
        %s670 = smul.addr %s669, 4
        %s671 = smul.addr %s670, 8
        %s672 = scalar_lea.vmem %s5, %s671
        %p673 = pneg %p161
        %p674 = pneg %p158
        %p675 = scmp.lt.s32.totalorder %s35, 1
        %s676 = scalar_select %p675, %s35, 1
        %s677 = scalar_lea.vmem %s6, %s676
        %p678 = pneg %p187
        %p679 = pneg %p184
        %p680 = scmp.lt.s32.totalorder %s35, 1
        %s681 = scalar_select %p680, %s35, 1
        %s682 = smul.addr %s681, 4
        %s683 = smul.addr %s682, 8
        %s684 = scalar_lea.vmem %s7, %s683
        %p685 = pneg %p213
        %p686 = pneg %p210
        %p687 = scmp.lt.s32.totalorder %s35, 1
        %s688 = scalar_select %p687, %s35, 1
        %s689 = scalar_lea.vmem %s8, %s688
        %p690 = pneg %p239
        %p691 = pneg %p236
        %p692 = scmp.lt.s32.totalorder %s35, 1
        %s693 = scalar_select %p692, %s35, 1
        %s694 = scalar_lea.vmem %s9, %s693
        %p695 = pneg %p265
        %p696 = pneg %p262
        %p697 = scmp.lt.s32.totalorder %s35, 1
        %s698 = scalar_select %p697, %s35, 1
        %s699 = scalar_lea.vmem %s10, %s698
        %p700 = pneg %p291
        %p701 = pneg %p288
        %p702 = scmp.lt.s32.totalorder %s35, 1
        %s703 = scalar_select %p702, %s35, 1
        %s704 = smul.addr %s703, 4
        %s705 = smul.addr %s704, 8
        %s706 = scalar_lea.vmem %s11, %s705
        %p707 = pneg %p317
        %p708 = pneg %p314
        %p709 = scmp.lt.s32.totalorder %s35, 1
        %s710 = scalar_select %p709, %s35, 1
        %s711 = scalar_lea.vmem %s12, %s710
        %p712 = pneg %p343
        %p713 = pneg %p340
        %p714 = scmp.lt.s32.totalorder %s35, 1
        %s715 = scalar_select %p714, %s35, 1
        %s716 = smul.addr %s715, 8
        %s717 = smul.addr %s716, 8
        %s718 = scalar_lea.vmem %s13, %s717
        %p719 = pneg %p369
        %p720 = pneg %p366
        %p721 = scmp.lt.s32.totalorder %s35, 1
        %s722 = scalar_select %p721, %s35, 1
        %s723 = scalar_lea.vmem %s14, %s722
        %p724 = pneg %p395
        %p725 = pneg %p392
        %p726 = scmp.lt.s32.totalorder %s35, 1
        %s727 = scalar_select %p726, %s35, 1
        %s728 = scalar_lea.vmem %s15, %s727
        %p729 = pneg %p421
        %p730 = pneg %p418
        %p731 = scmp.lt.s32.totalorder %s35, 1
        %s732 = scalar_select %p731, %s35, 1
        %s733 = scalar_lea.vmem %s16, %s732
        %p734 = pneg %p447
        %p735 = pneg %p444
        %p736 = pneg %p468
        %p737 = pneg %p465
        %p738 = pneg %p489
        %p739 = pneg %p486
        %p740 = pneg %p510
        %p741 = pneg %p507
        %p742 = pneg %p531
        %p743 = pneg %p528
        %p744 = scmp.lt.s32.totalorder %s35, 1
        %s745 = scalar_select %p744, %s35, 1
        %s746 = smul.addr %s745, 4
        %s747 = smul.addr %s746, 8
        %s748 = scalar_lea.vmem %s5, %s747
        %p749 = scmp.lt.s32.totalorder %s35, 1
        %s750 = scalar_select %p749, %s35, 1
        %s751 = scalar_lea.vmem %s6, %s750
        %p752 = scmp.lt.s32.totalorder %s35, 1
        %s753 = scalar_select %p752, %s35, 1
        %s754 = smul.addr %s753, 4
        %s755 = smul.addr %s754, 8
        %s756 = scalar_lea.vmem %s7, %s755
        %p757 = scmp.lt.s32.totalorder %s35, 1
        %s758 = scalar_select %p757, %s35, 1
        %s759 = scalar_lea.vmem %s8, %s758
        %p760 = scmp.lt.s32.totalorder %s35, 1
        %s761 = scalar_select %p760, %s35, 1
        %s762 = scalar_lea.vmem %s9, %s761
        %p763 = scmp.lt.s32.totalorder %s35, 1
        %s764 = scalar_select %p763, %s35, 1
        %s765 = scalar_lea.vmem %s10, %s764
        %p766 = scmp.lt.s32.totalorder %s35, 1
        %s767 = scalar_select %p766, %s35, 1
        %s768 = smul.addr %s767, 4
        %s769 = smul.addr %s768, 8
        %s770 = scalar_lea.vmem %s11, %s769
        %p771 = scmp.lt.s32.totalorder %s35, 1
        %s772 = scalar_select %p771, %s35, 1
        %s773 = scalar_lea.vmem %s12, %s772
        %p774 = scmp.lt.s32.totalorder %s35, 1
        %s775 = scalar_select %p774, %s35, 1
        %s776 = smul.addr %s775, 8
        %s777 = smul.addr %s776, 8
        %s778 = scalar_lea.vmem %s13, %s777
        %p779 = scmp.lt.s32.totalorder %s35, 1
        %s780 = scalar_select %p779, %s35, 1
        %s781 = scalar_lea.vmem %s14, %s780
        %p782 = scmp.lt.s32.totalorder %s35, 1
        %s783 = scalar_select %p782, %s35, 1
        %s784 = scalar_lea.vmem %s15, %s783
        %p785 = scmp.lt.s32.totalorder %s35, 1
        %s786 = scalar_select %p785, %s35, 1
        %s787 = scalar_lea.vmem %s16, %s786
        %v788 = vld [vmem:[%s0] sm:$0xff]
        %v789 = vld [vmem:[%s0 + $0x8] sm:$0xff]
        %v790 = vld [vmem:[%s1] sm:$0xff]
        %v791 = vld [vmem:[%s1 + $0x8] sm:$0xff]
        %v792 = vld [vmem:[%s1 + $0x10] sm:$0xff]
        %v793 = vld [vmem:[%s1 + $0x18] sm:$0xff]
        %v794 = vld [vmem:[#allocation4] sm:$0x1]
        %v796 = vlaneseq
        %v797 = vshrl.u32 %v796, 7
        %v798 = vsub.s32 0, %v797
        %v799 = vrot.slane %v794, %v798
        %vm801 = vcmask 261120
        %v803 = vsel %vm801, %v788, 0
        %v806 = vsel %vm801, %v789, 0
        %808 = vmatprep.subr.mxu0 0.0
        %809 = vmatpush1.msra.mxu0 %v790
        %810 = vmatprep.subr.mxu0 0.0
        %811 = vmatpush1.msra.mxu0 %v791
        %812 = vmatprep.subr.mxu0 0.0
        %813 = vmatpush1.msra.mxu0 %v792
        %814 = vmatprep.subr.mxu0 0.0
        %815 = vmatpush1.msra.mxu0 %v793
        %816 = vmatprep.subr.mxu0 0.0
        %817 = vmatpush1.msra.mxu0 0.0
        %818 = vmatprep.subr.mxu0 0.0
        %819 = vmatpush1.msra.mxu0 0.0
        %820 = vmatprep.subr.mxu0 0.0
        %821 = vmatpush1.msra.mxu0 0.0
        %822 = vmatprep.subr.mxu0 0.0
        %823 = vmatpush1.msra.mxu0 0.0
        %824 = vmatprep.subr.mxu0 0.0
        %825 = vmatpush1.msra.mxu0 0.0
        %826 = vmatprep.subr.mxu0 0.0
        %827 = vmatpush1.msra.mxu0 0.0
        %828 = vmatprep.subr.mxu0 0.0
        %829 = vmatpush1.msra.mxu0 0.0
        %830 = vmatprep.subr.mxu0 0.0
        %831 = vmatpush1.msra.mxu0 0.0
        %832 = vmatprep.subr.mxu0 0.0
        %833 = vmatpush1.msra.mxu0 0.0
        %834 = vmatprep.subr.mxu0 0.0
        %835 = vmatpush1.msra.mxu0 0.0
        %836 = vmatprep.subr.mxu0 0.0
        %837 = vmatpush1.msra.mxu0 0.0
        %838 = vmatprep.subr.mxu0 0.0
        %839 = vmatpush1.msra.mxu0 0.0
        %840 = vmatprep.subr.mxu0 0.0
        %841 = vmatpush1.msra.mxu0 0.0
        %842 = vmatprep.subr.mxu0 0.0
        %843 = vmatpush1.msra.mxu0 0.0
        %844 = vmatprep.subr.mxu0 0.0
        %845 = vmatpush1.msra.mxu0 0.0
        %846 = vmatprep.subr.mxu0 0.0
        %847 = vmatpush1.msra.mxu0 0.0
        %848 = vmatprep.subr.mxu0 0.0
        %849 = vmatpush1.msra.mxu0 0.0
        %850 = vmatprep.subr.mxu0 0.0
        %851 = vmatpush1.msra.mxu0 0.0
        %852 = vmatprep.subr.mxu0 0.0
        %853 = vmatpush1.msra.mxu0 0.0
        %854 = vmatprep.subr.mxu0 0.0
        %855 = vmatpush1.msra.mxu0 0.0
        %856 = vmatprep.subr.mxu0 0.0
        %857 = vmatpush1.msra.mxu0 0.0
        %858 = vmatprep.subr.mxu0 0.0
        %859 = vmatpush1.msra.mxu0 0.0
        %860 = vmatprep.subr.mxu0 0.0
        %861 = vmatpush1.msra.mxu0 0.0
        %862 = vmatprep.subr.mxu0 0.0
        %863 = vmatpush1.msra.mxu0 0.0
        %864 = vmatprep.subr.mxu0 0.0
        %865 = vmatpush1.msra.mxu0 0.0
        %866 = vmatprep.subr.mxu0 0.0
        %867 = vmatpush1.msra.mxu0 0.0
        %868 = vmatprep.subr.mxu0 0.0
        %869 = vmatpush1.msra.mxu0 0.0
        %870 = vmatprep.subr.mxu0 0.0
        %871 = vmatpush1.msra.mxu0 0.0
        %872 = vmatprep.mubr.f32.mxu0 0.0
        %873 = vmatmul.mubr.f32.gmra.mrb[0].mxu0 %v803
        %v874 = vpop.f32.mrb[0].mxu0
        %v875 = vadd.f32 %v799, %v874
        %v876 = vpop.f32.mrb[0].mxu0
        %877 = vmatprep.mubr.f32.mxu0 0.0
        %878 = vmatmul.mubr.f32.gmra.mrb[0].mxu0 %v806
        %v879 = vpop.f32.mrb[0].mxu0
        %v880 = vadd.f32 %v799, %v879
        %v881 = vpop.f32.mrb[0].mxu0
        %882 = vdwg.mxu0
        %v883 = vxor.u32 %v875, 2147483648
        %v884 = vxor.u32 %v880, 2147483648
        %v885 = vmul.f32 %v883, 1.442695
        %v886 = vpow.pop %v885
        %v887 = vmul.f32 %v884, 1.442695
        %v888 = vpow.pop %v887
        %v889 = vadd.f32 %v886, 1.0
        %v890 = vadd.f32 %v888, 1.0
        %v891 = vrcp.pop %v889
        %v892 = vmul.f32 1.0, %v891
        %v893 = vrcp.pop %v890
        %v894 = vmul.f32 1.0, %v893
        %vm895 = vcmask 7168
        %896 = vst.msk [vmem:[%s20] sm:$0xff] %vm895, %v892
        %897 = vst.msk [vmem:[%s20 + $0x8] sm:$0xff] %vm895, %v894
        %p898 = scmp.eq.s32.totalorder %s35, 0
        // Predicated region
        $region97: #{soft_masked_bert_forward.5} parent=95 // pred_check
          %p899 = pneg %p898
        $region98: #{soft_masked_bert_forward.5} parent=95 // pred_check_branch
          %901 = sbr.rel (%p899) target = $region100
        $region99: #{soft_masked_bert_forward.5} parent=95 // pred_region
          %v902 = vld [vmem:[%s4] sm:$0x1]
          %904 = vset.pattern.permute.xlu0 0
          %905 = vperm.xlu0 %904, %v892
          %v906 = vpop.permute.xlu0 %905
          %909 = vset.pattern.permute.xlu0 0
          %910 = vperm.xlu0 %909, %v894
          %v911 = vpop.permute.xlu0 %910
          %v914 = vlaneseq
          %v915 = vshrl.u32 %v914, 7
          %v916 = vsub.s32 0, %v915
          %v917 = vrot.slane %v902, %v916
          %v919 = vmul.f32 %v906, %v917
          %v920 = vmul.f32 %v911, %v917
          %v921 = vsub.f32 1.0, %v892
          %v922 = vsub.f32 1.0, %v894
          %v923 = vld [vmem:[%s3] sm:$0xff]
          %v924 = vld [vmem:[%s3 + $0x8] sm:$0xff]
          %926 = vset.pattern.permute.xlu0 0
          %927 = vperm.xlu0 %926, %v921
          %v928 = vpop.permute.xlu0 %927
          %931 = vset.pattern.permute.xlu0 0
          %932 = vperm.xlu0 %931, %v922
          %v933 = vpop.permute.xlu0 %932
          %v935 = vmul.f32 %v928, %v923
          %v936 = vmul.f32 %v933, %v924
          %v937 = vadd.f32 %v919, %v935
          %v938 = vadd.f32 %v920, %v936
          %939 = vst.msk [vmem:[#allocation2] sm:$0xff] %vm801, %v937
          %940 = vst.msk [vmem:[#allocation2 + $0x8] sm:$0xff] %vm801, %v938
        $region100: #{soft_masked_bert_forward.5} parent=95 // pred_fallthru
          _
        %v941 = vld [vmem:[#allocation2] sm:$0xff]
        %v942 = vld [vmem:[#allocation2 + $0x8] sm:$0xff]
        %v943 = vld [vmem:[%s748] sm:$0xff]
        %v944 = vld [vmem:[%s748 + $0x8] sm:$0xff]
        %v945 = vld [vmem:[%s748 + $0x10] sm:$0xff]
        %v946 = vld [vmem:[%s748 + $0x18] sm:$0xff]
        %v947 = vld [vmem:[%s751] sm:$0x1]
        %v949 = vlaneseq
        %v950 = vshrl.u32 %v949, 7
        %v951 = vsub.s32 0, %v950
        %v952 = vrot.slane %v947, %v951
        %v955 = vsel %vm801, %v941, 0
        %v958 = vsel %vm801, %v942, 0
        %960 = vmatprep.subr.mxu0 0.0
        %961 = vmatpush1.msra.mxu0 %v943
        %962 = vmatprep.subr.mxu0 0.0
        %963 = vmatpush1.msra.mxu0 %v944
        %964 = vmatprep.subr.mxu0 0.0
        %965 = vmatpush1.msra.mxu0 %v945
        %966 = vmatprep.subr.mxu0 0.0
        %967 = vmatpush1.msra.mxu0 %v946
        %968 = vmatprep.subr.mxu0 0.0
        %969 = vmatpush1.msra.mxu0 0.0
        %970 = vmatprep.subr.mxu0 0.0
        %971 = vmatpush1.msra.mxu0 0.0
        %972 = vmatprep.subr.mxu0 0.0
        %973 = vmatpush1.msra.mxu0 0.0
        %974 = vmatprep.subr.mxu0 0.0
        %975 = vmatpush1.msra.mxu0 0.0
        %976 = vmatprep.subr.mxu0 0.0
        %977 = vmatpush1.msra.mxu0 0.0
        %978 = vmatprep.subr.mxu0 0.0
        %979 = vmatpush1.msra.mxu0 0.0
        %980 = vmatprep.subr.mxu0 0.0
        %981 = vmatpush1.msra.mxu0 0.0
        %982 = vmatprep.subr.mxu0 0.0
        %983 = vmatpush1.msra.mxu0 0.0
        %984 = vmatprep.subr.mxu0 0.0
        %985 = vmatpush1.msra.mxu0 0.0
        %986 = vmatprep.subr.mxu0 0.0
        %987 = vmatpush1.msra.mxu0 0.0
        %988 = vmatprep.subr.mxu0 0.0
        %989 = vmatpush1.msra.mxu0 0.0
        %990 = vmatprep.subr.mxu0 0.0
        %991 = vmatpush1.msra.mxu0 0.0
        %992 = vmatprep.subr.mxu0 0.0
        %993 = vmatpush1.msra.mxu0 0.0
        %994 = vmatprep.subr.mxu0 0.0
        %995 = vmatpush1.msra.mxu0 0.0
        %996 = vmatprep.subr.mxu0 0.0
        %997 = vmatpush1.msra.mxu0 0.0
        %998 = vmatprep.subr.mxu0 0.0
        %999 = vmatpush1.msra.mxu0 0.0
        %1000 = vmatprep.subr.mxu0 0.0
        %1001 = vmatpush1.msra.mxu0 0.0
        %1002 = vmatprep.subr.mxu0 0.0
        %1003 = vmatpush1.msra.mxu0 0.0
        %1004 = vmatprep.subr.mxu0 0.0
        %1005 = vmatpush1.msra.mxu0 0.0
        %1006 = vmatprep.subr.mxu0 0.0
        %1007 = vmatpush1.msra.mxu0 0.0
        %1008 = vmatprep.subr.mxu0 0.0
        %1009 = vmatpush1.msra.mxu0 0.0
        %1010 = vmatprep.subr.mxu0 0.0
        %1011 = vmatpush1.msra.mxu0 0.0
        %1012 = vmatprep.subr.mxu0 0.0
        %1013 = vmatpush1.msra.mxu0 0.0
        %1014 = vmatprep.subr.mxu0 0.0
        %1015 = vmatpush1.msra.mxu0 0.0
        %1016 = vmatprep.subr.mxu0 0.0
        %1017 = vmatpush1.msra.mxu0 0.0
        %1018 = vmatprep.subr.mxu0 0.0
        %1019 = vmatpush1.msra.mxu0 0.0
        %1020 = vmatprep.subr.mxu0 0.0
        %1021 = vmatpush1.msra.mxu0 0.0
        %1022 = vmatprep.subr.mxu0 0.0
        %1023 = vmatpush1.msra.mxu0 0.0
        %1024 = vmatprep.mubr.f32.mxu0 0.0
        %1025 = vmatmul.mubr.f32.gmra.mrb[0].mxu0 %v955
        %v1026 = vpop.f32.mrb[0].mxu0
        %v1027 = vadd.f32 %v952, %v1026
        %v1028 = vpop.f32.mrb[0].mxu0
        %1029 = vmatprep.mubr.f32.mxu0 0.0
        %1030 = vmatmul.mubr.f32.gmra.mrb[0].mxu0 %v958
        %v1031 = vpop.f32.mrb[0].mxu0
        %v1032 = vadd.f32 %v952, %v1031
        %v1033 = vpop.f32.mrb[0].mxu0
        %1034 = vdwg.mxu0
        %1036 = vrot.lane.b32.xlu0 %v1027, 96
        %v1037 = vpop.permute.xlu0 %1036
        %vm1038 = vcmask 130048
        %v1039 = vsel %vm1038, %v1027, 0
        %v1041 = vsel %vm1038, %v1037, 0
        %1043 = vmatprep.subr.mxu0 0.0
        %1044 = vmatpush1.xpose.msra.mxu0 %v1041
        %1045 = vmatprep.subr.mxu0 0.0
        %1046 = vmatpush1.xpose.msra.mxu0 0.0
        %1047 = vmatprep.subr.mxu0 0.0
        %1048 = vmatpush1.xpose.msra.mxu0 0.0
        %1049 = vmatprep.subr.mxu0 0.0
        %1050 = vmatpush1.xpose.msra.mxu0 0.0
        %1051 = vmatprep.subr.mxu0 0.0
        %1052 = vmatpush1.xpose.msra.mxu0 0.0
        %1053 = vmatprep.subr.mxu0 0.0
        %1054 = vmatpush1.xpose.msra.mxu0 0.0
        %1055 = vmatprep.subr.mxu0 0.0
        %1056 = vmatpush1.xpose.msra.mxu0 0.0
        %1057 = vmatprep.subr.mxu0 0.0
        %1058 = vmatpush1.xpose.msra.mxu0 0.0
        %1059 = vmatprep.subr.mxu0 0.0
        %1060 = vmatpush1.xpose.msra.mxu0 0.0
        %1061 = vmatprep.subr.mxu0 0.0
        %1062 = vmatpush1.xpose.msra.mxu0 0.0
        %1063 = vmatprep.subr.mxu0 0.0
        %1064 = vmatpush1.xpose.msra.mxu0 0.0
        %1065 = vmatprep.subr.mxu0 0.0
        %1066 = vmatpush1.xpose.msra.mxu0 0.0
        %1067 = vmatprep.subr.mxu0 0.0
        %1068 = vmatpush1.xpose.msra.mxu0 0.0
        %1069 = vmatprep.subr.mxu0 0.0
        %1070 = vmatpush1.xpose.msra.mxu0 0.0
        %1071 = vmatprep.subr.mxu0 0.0
        %1072 = vmatpush1.xpose.msra.mxu0 0.0
        %1073 = vmatprep.subr.mxu0 0.0
        %1074 = vmatpush1.xpose.msra.mxu0 0.0
        %1075 = vmatprep.subr.mxu0 0.0
        %1076 = vmatpush1.xpose.msra.mxu0 0.0
        %1077 = vmatprep.subr.mxu0 0.0
        %1078 = vmatpush1.xpose.msra.mxu0 0.0
        %1079 = vmatprep.subr.mxu0 0.0
        %1080 = vmatpush1.xpose.msra.mxu0 0.0
        %1081 = vmatprep.subr.mxu0 0.0
        %1082 = vmatpush1.xpose.msra.mxu0 0.0
        %1083 = vmatprep.subr.mxu0 0.0
        %1084 = vmatpush1.xpose.msra.mxu0 0.0
        %1085 = vmatprep.subr.mxu0 0.0
        %1086 = vmatpush1.xpose.msra.mxu0 0.0
        %1087 = vmatprep.subr.mxu0 0.0
        %1088 = vmatpush1.xpose.msra.mxu0 0.0
        %1089 = vmatprep.subr.mxu0 0.0
        %1090 = vmatpush1.xpose.msra.mxu0 0.0
        %1091 = vmatprep.subr.mxu0 0.0
        %1092 = vmatpush1.xpose.msra.mxu0 0.0
        %1093 = vmatprep.subr.mxu0 0.0
        %1094 = vmatpush1.xpose.msra.mxu0 0.0
        %1095 = vmatprep.subr.mxu0 0.0
        %1096 = vmatpush1.xpose.msra.mxu0 0.0
        %1097 = vmatprep.subr.mxu0 0.0
        %1098 = vmatpush1.xpose.msra.mxu0 0.0
        %1099 = vmatprep.subr.mxu0 0.0
        %1100 = vmatpush1.xpose.msra.mxu0 0.0
        %1101 = vmatprep.subr.mxu0 0.0
        %1102 = vmatpush1.xpose.msra.mxu0 0.0
        %1103 = vmatprep.subr.mxu0 0.0
        %1104 = vmatpush1.xpose.msra.mxu0 0.0
        %1105 = vmatprep.subr.mxu0 0.0
        %1106 = vmatpush1.xpose.msra.mxu0 0.0
        %1107 = vmatprep.mubr.f32.mxu0 0.0
        %1108 = vmatmul.mubr.f32.gmra.mrb[0].mxu0 %v1039
        %v1109 = vpop.f32.mrb[0].mxu0
        %v1110 = vadd.f32 0.0, %v1109
        %v1111 = vpop.f32.mrb[0].mxu0
        %1112 = vdwg.mxu0
        %vm1113 = vcmask 64512
        %v1114 = vsel %vm1113, %v1110, -inf
        %1115 = vmax.xlane.f32.xlu0 %v1114
        %v1116 = vpop.xlane.xlu0 %1115
        %v1117 = vsub.f32 %v1110, %v1116
        %v1118 = vmul.f32 %v1117, 1.442695
        %v1119 = vpow.pop %v1118
        %v1120 = vsel %vm1113, %v1119, 0.0
        %1121 = vadd.xlane.f32.xlu0 %v1120
        %v1122 = vpop.xlane.xlu0 %1121
        %v1123 = vrcp.pop %v1122
        %v1124 = vmul.f32 %v1119, %v1123
        %1125 = vrot.lane.b32.xlu0 %v1027, 64
        %v1126 = vpop.permute.xlu0 %1125
        %v1129 = vsel %vm1113, %v1124, 0
        %1131 = vmatprep.subr.mxu0 0.0
        %1132 = vmatpush1.msra.mxu0 %v1126
        %1133 = vmatprep.subr.mxu0 0.0
        %1134 = vmatpush1.msra.mxu0 0.0
        %1135 = vmatprep.subr.mxu0 0.0
        %1136 = vmatpush1.msra.mxu0 0.0
        %1137 = vmatprep.subr.mxu0 0.0
        %1138 = vmatpush1.msra.mxu0 0.0
        %1139 = vmatprep.subr.mxu0 0.0
        %1140 = vmatpush1.msra.mxu0 0.0
        %1141 = vmatprep.subr.mxu0 0.0
        %1142 = vmatpush1.msra.mxu0 0.0
        %1143 = vmatprep.subr.mxu0 0.0
        %1144 = vmatpush1.msra.mxu0 0.0
        %1145 = vmatprep.subr.mxu0 0.0
        %1146 = vmatpush1.msra.mxu0 0.0
        %1147 = vmatprep.subr.mxu0 0.0
        %1148 = vmatpush1.msra.mxu0 0.0
        %1149 = vmatprep.subr.mxu0 0.0
        %1150 = vmatpush1.msra.mxu0 0.0
        %1151 = vmatprep.subr.mxu0 0.0
        %1152 = vmatpush1.msra.mxu0 0.0
        %1153 = vmatprep.subr.mxu0 0.0
        %1154 = vmatpush1.msra.mxu0 0.0
        %1155 = vmatprep.subr.mxu0 0.0
        %1156 = vmatpush1.msra.mxu0 0.0
        %1157 = vmatprep.subr.mxu0 0.0
        %1158 = vmatpush1.msra.mxu0 0.0
        %1159 = vmatprep.subr.mxu0 0.0
        %1160 = vmatpush1.msra.mxu0 0.0
        %1161 = vmatprep.subr.mxu0 0.0
        %1162 = vmatpush1.msra.mxu0 0.0
        %1163 = vmatprep.subr.mxu0 0.0
        %1164 = vmatpush1.msra.mxu0 0.0
        %1165 = vmatprep.subr.mxu0 0.0
        %1166 = vmatpush1.msra.mxu0 0.0
        %1167 = vmatprep.subr.mxu0 0.0
        %1168 = vmatpush1.msra.mxu0 0.0
        %1169 = vmatprep.subr.mxu0 0.0
        %1170 = vmatpush1.msra.mxu0 0.0
        %1171 = vmatprep.subr.mxu0 0.0
        %1172 = vmatpush1.msra.mxu0 0.0
        %1173 = vmatprep.subr.mxu0 0.0
        %1174 = vmatpush1.msra.mxu0 0.0
        %1175 = vmatprep.subr.mxu0 0.0
        %1176 = vmatpush1.msra.mxu0 0.0
        %1177 = vmatprep.subr.mxu0 0.0
        %1178 = vmatpush1.msra.mxu0 0.0
        %1179 = vmatprep.subr.mxu0 0.0
        %1180 = vmatpush1.msra.mxu0 0.0
        %1181 = vmatprep.subr.mxu0 0.0
        %1182 = vmatpush1.msra.mxu0 0.0
        %1183 = vmatprep.subr.mxu0 0.0
        %1184 = vmatpush1.msra.mxu0 0.0
        %1185 = vmatprep.subr.mxu0 0.0
        %1186 = vmatpush1.msra.mxu0 0.0
        %1187 = vmatprep.subr.mxu0 0.0
        %1188 = vmatpush1.msra.mxu0 0.0
        %1189 = vmatprep.subr.mxu0 0.0
        %1190 = vmatpush1.msra.mxu0 0.0
        %1191 = vmatprep.subr.mxu0 0.0
        %1192 = vmatpush1.msra.mxu0 0.0
        %1193 = vmatprep.subr.mxu0 0.0
        %1194 = vmatpush1.msra.mxu0 0.0
        %1195 = vmatprep.mubr.f32.mxu0 0.0
        %1196 = vmatmul.mubr.f32.gmra.mrb[0].mxu0 %v1129
        %v1197 = vpop.f32.mrb[0].mxu0
        %v1198 = vadd.f32 0.0, %v1197
        %v1199 = vpop.f32.mrb[0].mxu0
        %1200 = vdwg.mxu0
        %1201 = vst.msk [vmem:[#allocation3] sm:$0xff] %vm1038, %v1198
        %1202 = vrot.lane.b32.xlu0 %v1027, 112
        %v1203 = vpop.permute.xlu0 %1202
        %1204 = vrot.lane.b32.xlu0 %v1027, 80
        %v1205 = vpop.permute.xlu0 %1204
        %v1206 = vsel %vm1038, %v1203, 0
        %v1208 = vsel %vm1038, %v1205, 0
        %1210 = vmatprep.subr.mxu0 0.0
        %1211 = vmatpush1.xpose.msra.mxu0 %v1208
        %1212 = vmatprep.subr.mxu0 0.0
        %1213 = vmatpush1.xpose.msra.mxu0 0.0
        %1214 = vmatprep.subr.mxu0 0.0
        %1215 = vmatpush1.xpose.msra.mxu0 0.0
        %1216 = vmatprep.subr.mxu0 0.0
        %1217 = vmatpush1.xpose.msra.mxu0 0.0
        %1218 = vmatprep.subr.mxu0 0.0
        %1219 = vmatpush1.xpose.msra.mxu0 0.0
        %1220 = vmatprep.subr.mxu0 0.0
        %1221 = vmatpush1.xpose.msra.mxu0 0.0
        %1222 = vmatprep.subr.mxu0 0.0
        %1223 = vmatpush1.xpose.msra.mxu0 0.0
        %1224 = vmatprep.subr.mxu0 0.0
        %1225 = vmatpush1.xpose.msra.mxu0 0.0
        %1226 = vmatprep.subr.mxu0 0.0
        %1227 = vmatpush1.xpose.msra.mxu0 0.0
        %1228 = vmatprep.subr.mxu0 0.0
        %1229 = vmatpush1.xpose.msra.mxu0 0.0
        %1230 = vmatprep.subr.mxu0 0.0
        %1231 = vmatpush1.xpose.msra.mxu0 0.0
        %1232 = vmatprep.subr.mxu0 0.0
        %1233 = vmatpush1.xpose.msra.mxu0 0.0
        %1234 = vmatprep.subr.mxu0 0.0
        %1235 = vmatpush1.xpose.msra.mxu0 0.0
        %1236 = vmatprep.subr.mxu0 0.0
        %1237 = vmatpush1.xpose.msra.mxu0 0.0
        %1238 = vmatprep.subr.mxu0 0.0
        %1239 = vmatpush1.xpose.msra.mxu0 0.0
        %1240 = vmatprep.subr.mxu0 0.0
        %1241 = vmatpush1.xpose.msra.mxu0 0.0
        %1242 = vmatprep.subr.mxu0 0.0
        %1243 = vmatpush1.xpose.msra.mxu0 0.0
        %1244 = vmatprep.subr.mxu0 0.0
        %1245 = vmatpush1.xpose.msra.mxu0 0.0
        %1246 = vmatprep.subr.mxu0 0.0
        %1247 = vmatpush1.xpose.msra.mxu0 0.0
        %1248 = vmatprep.subr.mxu0 0.0
        %1249 = vmatpush1.xpose.msra.mxu0 0.0
        %1250 = vmatprep.subr.mxu0 0.0
        %1251 = vmatpush1.xpose.msra.mxu0 0.0
        %1252 = vmatprep.subr.mxu0 0.0
        %1253 = vmatpush1.xpose.msra.mxu0 0.0
        %1254 = vmatprep.subr.mxu0 0.0
        %1255 = vmatpush1.xpose.msra.mxu0 0.0
        %1256 = vmatprep.subr.mxu0 0.0
        %1257 = vmatpush1.xpose.msra.mxu0 0.0
        %1258 = vmatprep.subr.mxu0 0.0
        %1259 = vmatpush1.xpose.msra.mxu0 0.0
        %1260 = vmatprep.subr.mxu0 0.0
        %1261 = vmatpush1.xpose.msra.mxu0 0.0
        %1262 = vmatprep.subr.mxu0 0.0
        %1263 = vmatpush1.xpose.msra.mxu0 0.0
        %1264 = vmatprep.subr.mxu0 0.0
        %1265 = vmatpush1.xpose.msra.mxu0 0.0
        %1266 = vmatprep.subr.mxu0 0.0
        %1267 = vmatpush1.xpose.msra.mxu0 0.0
        %1268 = vmatprep.subr.mxu0 0.0
        %1269 = vmatpush1.xpose.msra.mxu0 0.0
        %1270 = vmatprep.subr.mxu0 0.0
        %1271 = vmatpush1.xpose.msra.mxu0 0.0
        %1272 = vmatprep.subr.mxu0 0.0
        %1273 = vmatpush1.xpose.msra.mxu0 0.0
        %1274 = vmatprep.mubr.f32.mxu0 0.0
        %1275 = vmatmul.mubr.f32.gmra.mrb[0].mxu0 %v1206
        %v1276 = vpop.f32.mrb[0].mxu0
        %v1277 = vadd.f32 0.0, %v1276
        %v1278 = vpop.f32.mrb[0].mxu0
        %1279 = vdwg.mxu0
        %v1280 = vsel %vm1113, %v1277, -inf
        %1281 = vmax.xlane.f32.xlu0 %v1280
        %v1282 = vpop.xlane.xlu0 %1281
        %v1283 = vsub.f32 %v1277, %v1282
        %v1284 = vmul.f32 %v1283, 1.442695
        %v1285 = vpow.pop %v1284
        %v1286 = vsel %vm1113, %v1285, 0.0
        %1287 = vadd.xlane.f32.xlu0 %v1286
        %v1288 = vpop.xlane.xlu0 %1287
        %v1289 = vrcp.pop %v1288
        %v1290 = vmul.f32 %v1285, %v1289
        %1291 = vrot.lane.b32.xlu0 %v1027, 48
        %v1292 = vpop.permute.xlu0 %1291
        %v1295 = vsel %vm1113, %v1290, 0
        %1297 = vmatprep.subr.mxu0 0.0
        %1298 = vmatpush1.msra.mxu0 %v1292
        %1299 = vmatprep.subr.mxu0 0.0
        %1300 = vmatpush1.msra.mxu0 0.0
        %1301 = vmatprep.subr.mxu0 0.0
        %1302 = vmatpush1.msra.mxu0 0.0
        %1303 = vmatprep.subr.mxu0 0.0
        %1304 = vmatpush1.msra.mxu0 0.0
        %1305 = vmatprep.subr.mxu0 0.0
        %1306 = vmatpush1.msra.mxu0 0.0
        %1307 = vmatprep.subr.mxu0 0.0
        %1308 = vmatpush1.msra.mxu0 0.0
        %1309 = vmatprep.subr.mxu0 0.0
        %1310 = vmatpush1.msra.mxu0 0.0
        %1311 = vmatprep.subr.mxu0 0.0
        %1312 = vmatpush1.msra.mxu0 0.0
        %1313 = vmatprep.subr.mxu0 0.0
        %1314 = vmatpush1.msra.mxu0 0.0
        %1315 = vmatprep.subr.mxu0 0.0
        %1316 = vmatpush1.msra.mxu0 0.0
        %1317 = vmatprep.subr.mxu0 0.0
        %1318 = vmatpush1.msra.mxu0 0.0
        %1319 = vmatprep.subr.mxu0 0.0
        %1320 = vmatpush1.msra.mxu0 0.0
        %1321 = vmatprep.subr.mxu0 0.0
        %1322 = vmatpush1.msra.mxu0 0.0
        %1323 = vmatprep.subr.mxu0 0.0
        %1324 = vmatpush1.msra.mxu0 0.0
        %1325 = vmatprep.subr.mxu0 0.0
        %1326 = vmatpush1.msra.mxu0 0.0
        %1327 = vmatprep.subr.mxu0 0.0
        %1328 = vmatpush1.msra.mxu0 0.0
        %1329 = vmatprep.subr.mxu0 0.0
        %1330 = vmatpush1.msra.mxu0 0.0
        %1331 = vmatprep.subr.mxu0 0.0
        %1332 = vmatpush1.msra.mxu0 0.0
        %1333 = vmatprep.subr.mxu0 0.0
        %1334 = vmatpush1.msra.mxu0 0.0
        %1335 = vmatprep.subr.mxu0 0.0
        %1336 = vmatpush1.msra.mxu0 0.0
        %1337 = vmatprep.subr.mxu0 0.0
        %1338 = vmatpush1.msra.mxu0 0.0
        %1339 = vmatprep.subr.mxu0 0.0
        %1340 = vmatpush1.msra.mxu0 0.0
        %1341 = vmatprep.subr.mxu0 0.0
        %1342 = vmatpush1.msra.mxu0 0.0
        %1343 = vmatprep.subr.mxu0 0.0
        %1344 = vmatpush1.msra.mxu0 0.0
        %1345 = vmatprep.subr.mxu0 0.0
        %1346 = vmatpush1.msra.mxu0 0.0
        %1347 = vmatprep.subr.mxu0 0.0
        %1348 = vmatpush1.msra.mxu0 0.0
        %1349 = vmatprep.subr.mxu0 0.0
        %1350 = vmatpush1.msra.mxu0 0.0
        %1351 = vmatprep.subr.mxu0 0.0
        %1352 = vmatpush1.msra.mxu0 0.0
        %1353 = vmatprep.subr.mxu0 0.0
        %1354 = vmatpush1.msra.mxu0 0.0
        %1355 = vmatprep.subr.mxu0 0.0
        %1356 = vmatpush1.msra.mxu0 0.0
        %1357 = vmatprep.subr.mxu0 0.0
        %1358 = vmatpush1.msra.mxu0 0.0
        %1359 = vmatprep.subr.mxu0 0.0
        %1360 = vmatpush1.msra.mxu0 0.0
        %1361 = vmatprep.mubr.f32.mxu0 0.0
        %1362 = vmatmul.mubr.f32.gmra.mrb[0].mxu0 %v1295
        %v1363 = vpop.f32.mrb[0].mxu0
        %v1364 = vadd.f32 0.0, %v1363
        %v1365 = vpop.f32.mrb[0].mxu0
        %1366 = vdwg.mxu0
        %1368 = vrot.lane.b32.xlu0 %v1364, 16
        %v1369 = vpop.permute.xlu0 %1368
        %vm1371 = vcmask 261248
        %1372 = vst.msk [vmem:[#allocation3] sm:$0xff] %vm1371, %v1369
        %1374 = vrot.lane.b32.xlu0 %v1032, 96
        %v1375 = vpop.permute.xlu0 %1374
        %v1376 = vsel %vm1038, %v1032, 0
        %v1378 = vsel %vm1038, %v1375, 0
        %1380 = vmatprep.subr.mxu0 0.0
        %1381 = vmatpush1.xpose.msra.mxu0 %v1378
        %1382 = vmatprep.subr.mxu0 0.0
        %1383 = vmatpush1.xpose.msra.mxu0 0.0
        %1384 = vmatprep.subr.mxu0 0.0
        %1385 = vmatpush1.xpose.msra.mxu0 0.0
        %1386 = vmatprep.subr.mxu0 0.0
        %1387 = vmatpush1.xpose.msra.mxu0 0.0
        %1388 = vmatprep.subr.mxu0 0.0
        %1389 = vmatpush1.xpose.msra.mxu0 0.0
        %1390 = vmatprep.subr.mxu0 0.0
        %1391 = vmatpush1.xpose.msra.mxu0 0.0
        %1392 = vmatprep.subr.mxu0 0.0
        %1393 = vmatpush1.xpose.msra.mxu0 0.0
        %1394 = vmatprep.subr.mxu0 0.0
        %1395 = vmatpush1.xpose.msra.mxu0 0.0
        %1396 = vmatprep.subr.mxu0 0.0
        %1397 = vmatpush1.xpose.msra.mxu0 0.0
        %1398 = vmatprep.subr.mxu0 0.0
        %1399 = vmatpush1.xpose.msra.mxu0 0.0
        %1400 = vmatprep.subr.mxu0 0.0
        %1401 = vmatpush1.xpose.msra.mxu0 0.0
        %1402 = vmatprep.subr.mxu0 0.0
        %1403 = vmatpush1.xpose.msra.mxu0 0.0
        %1404 = vmatprep.subr.mxu0 0.0
        %1405 = vmatpush1.xpose.msra.mxu0 0.0
        %1406 = vmatprep.subr.mxu0 0.0
        %1407 = vmatpush1.xpose.msra.mxu0 0.0
        %1408 = vmatprep.subr.mxu0 0.0
        %1409 = vmatpush1.xpose.msra.mxu0 0.0
        %1410 = vmatprep.subr.mxu0 0.0
        %1411 = vmatpush1.xpose.msra.mxu0 0.0
        %1412 = vmatprep.subr.mxu0 0.0
        %1413 = vmatpush1.xpose.msra.mxu0 0.0
        %1414 = vmatprep.subr.mxu0 0.0
        %1415 = vmatpush1.xpose.msra.mxu0 0.0
        %1416 = vmatprep.subr.mxu0 0.0
        %1417 = vmatpush1.xpose.msra.mxu0 0.0
        %1418 = vmatprep.subr.mxu0 0.0
        %1419 = vmatpush1.xpose.msra.mxu0 0.0
        %1420 = vmatprep.subr.mxu0 0.0
        %1421 = vmatpush1.xpose.msra.mxu0 0.0
        %1422 = vmatprep.subr.mxu0 0.0
        %1423 = vmatpush1.xpose.msra.mxu0 0.0
        %1424 = vmatprep.subr.mxu0 0.0
        %1425 = vmatpush1.xpose.msra.mxu0 0.0
        %1426 = vmatprep.subr.mxu0 0.0
        %1427 = vmatpush1.xpose.msra.mxu0 0.0
        %1428 = vmatprep.subr.mxu0 0.0
        %1429 = vmatpush1.xpose.msra.mxu0 0.0
        %1430 = vmatprep.subr.mxu0 0.0
        %1431 = vmatpush1.xpose.msra.mxu0 0.0
        %1432 = vmatprep.subr.mxu0 0.0
        %1433 = vmatpush1.xpose.msra.mxu0 0.0
        %1434 = vmatprep.subr.mxu0 0.0
        %1435 = vmatpush1.xpose.msra.mxu0 0.0
        %1436 = vmatprep.subr.mxu0 0.0
        %1437 = vmatpush1.xpose.msra.mxu0 0.0
        %1438 = vmatprep.subr.mxu0 0.0
        %1439 = vmatpush1.xpose.msra.mxu0 0.0
        %1440 = vmatprep.subr.mxu0 0.0
        %1441 = vmatpush1.xpose.msra.mxu0 0.0
        %1442 = vmatprep.subr.mxu0 0.0
        %1443 = vmatpush1.xpose.msra.mxu0 0.0
        %1444 = vmatprep.mubr.f32.mxu0 0.0
        %1445 = vmatmul.mubr.f32.gmra.mrb[0].mxu0 %v1376
        %v1446 = vpop.f32.mrb[0].mxu0
        %v1447 = vadd.f32 0.0, %v1446
        %v1448 = vpop.f32.mrb[0].mxu0
        %1449 = vdwg.mxu0
        %v1450 = vsel %vm1113, %v1447, -inf
        %1451 = vmax.xlane.f32.xlu0 %v1450
        %v1452 = vpop.xlane.xlu0 %1451
        %v1453 = vsub.f32 %v1447, %v1452
        %v1454 = vmul.f32 %v1453, 1.442695
        %v1455 = vpow.pop %v1454
        %v1456 = vsel %vm1113, %v1455, 0.0
        %1457 = vadd.xlane.f32.xlu0 %v1456
        %v1458 = vpop.xlane.xlu0 %1457
        %v1459 = vrcp.pop %v1458
        %v1460 = vmul.f32 %v1455, %v1459
        %1461 = vrot.lane.b32.xlu0 %v1032, 64
        %v1462 = vpop.permute.xlu0 %1461
        %v1465 = vsel %vm1113, %v1460, 0
        %1467 = vmatprep.subr.mxu0 0.0
        %1468 = vmatpush1.msra.mxu0 %v1462
        %1469 = vmatprep.subr.mxu0 0.0
        %1470 = vmatpush1.msra.mxu0 0.0
        %1471 = vmatprep.subr.mxu0 0.0
        %1472 = vmatpush1.msra.mxu0 0.0
        %1473 = vmatprep.subr.mxu0 0.0
        %1474 = vmatpush1.msra.mxu0 0.0
        %1475 = vmatprep.subr.mxu0 0.0
        %1476 = vmatpush1.msra.mxu0 0.0
        %1477 = vmatprep.subr.mxu0 0.0
        %1478 = vmatpush1.msra.mxu0 0.0
        %1479 = vmatprep.subr.mxu0 0.0
        %1480 = vmatpush1.msra.mxu0 0.0
        %1481 = vmatprep.subr.mxu0 0.0
        %1482 = vmatpush1.msra.mxu0 0.0
        %1483 = vmatprep.subr.mxu0 0.0
        %1484 = vmatpush1.msra.mxu0 0.0
        %1485 = vmatprep.subr.mxu0 0.0
        %1486 = vmatpush1.msra.mxu0 0.0
        %1487 = vmatprep.subr.mxu0 0.0
        %1488 = vmatpush1.msra.mxu0 0.0
        %1489 = vmatprep.subr.mxu0 0.0
        %1490 = vmatpush1.msra.mxu0 0.0
        %1491 = vmatprep.subr.mxu0 0.0
        %1492 = vmatpush1.msra.mxu0 0.0
        %1493 = vmatprep.subr.mxu0 0.0
        %1494 = vmatpush1.msra.mxu0 0.0
        %1495 = vmatprep.subr.mxu0 0.0
        %1496 = vmatpush1.msra.mxu0 0.0
        %1497 = vmatprep.subr.mxu0 0.0
        %1498 = vmatpush1.msra.mxu0 0.0
        %1499 = vmatprep.subr.mxu0 0.0
        %1500 = vmatpush1.msra.mxu0 0.0
        %1501 = vmatprep.subr.mxu0 0.0
        %1502 = vmatpush1.msra.mxu0 0.0
        %1503 = vmatprep.subr.mxu0 0.0
        %1504 = vmatpush1.msra.mxu0 0.0
        %1505 = vmatprep.subr.mxu0 0.0
        %1506 = vmatpush1.msra.mxu0 0.0
        %1507 = vmatprep.subr.mxu0 0.0
        %1508 = vmatpush1.msra.mxu0 0.0
        %1509 = vmatprep.subr.mxu0 0.0
        %1510 = vmatpush1.msra.mxu0 0.0
        %1511 = vmatprep.subr.mxu0 0.0
        %1512 = vmatpush1.msra.mxu0 0.0
        %1513 = vmatprep.subr.mxu0 0.0
        %1514 = vmatpush1.msra.mxu0 0.0
        %1515 = vmatprep.subr.mxu0 0.0
        %1516 = vmatpush1.msra.mxu0 0.0
        %1517 = vmatprep.subr.mxu0 0.0
        %1518 = vmatpush1.msra.mxu0 0.0
        %1519 = vmatprep.subr.mxu0 0.0
        %1520 = vmatpush1.msra.mxu0 0.0
        %1521 = vmatprep.subr.mxu0 0.0
        %1522 = vmatpush1.msra.mxu0 0.0
        %1523 = vmatprep.subr.mxu0 0.0
        %1524 = vmatpush1.msra.mxu0 0.0
        %1525 = vmatprep.subr.mxu0 0.0
        %1526 = vmatpush1.msra.mxu0 0.0
        %1527 = vmatprep.subr.mxu0 0.0
        %1528 = vmatpush1.msra.mxu0 0.0
        %1529 = vmatprep.subr.mxu0 0.0
        %1530 = vmatpush1.msra.mxu0 0.0
        %1531 = vmatprep.mubr.f32.mxu0 0.0
        %1532 = vmatmul.mubr.f32.gmra.mrb[0].mxu0 %v1465
        %v1533 = vpop.f32.mrb[0].mxu0
        %v1534 = vadd.f32 0.0, %v1533
        %v1535 = vpop.f32.mrb[0].mxu0
        %1536 = vdwg.mxu0
        %1537 = vst.msk [vmem:[#allocation3 + $0x8] sm:$0xff] %vm1038, %v1534
        %1538 = vrot.lane.b32.xlu0 %v1032, 112
        %v1539 = vpop.permute.xlu0 %1538
        %1540 = vrot.lane.b32.xlu0 %v1032, 80
        %v1541 = vpop.permute.xlu0 %1540
        %v1542 = vsel %vm1038, %v1539, 0
        %v1544 = vsel %vm1038, %v1541, 0
        %1546 = vmatprep.subr.mxu0 0.0
        %1547 = vmatpush1.xpose.msra.mxu0 %v1544
        %1548 = vmatprep.subr.mxu0 0.0
        %1549 = vmatpush1.xpose.msra.mxu0 0.0
        %1550 = vmatprep.subr.mxu0 0.0
        %1551 = vmatpush1.xpose.msra.mxu0 0.0
        %1552 = vmatprep.subr.mxu0 0.0
        %1553 = vmatpush1.xpose.msra.mxu0 0.0
        %1554 = vmatprep.subr.mxu0 0.0
        %1555 = vmatpush1.xpose.msra.mxu0 0.0
        %1556 = vmatprep.subr.mxu0 0.0
        %1557 = vmatpush1.xpose.msra.mxu0 0.0
        %1558 = vmatprep.subr.mxu0 0.0
        %1559 = vmatpush1.xpose.msra.mxu0 0.0
        %1560 = vmatprep.subr.mxu0 0.0
        %1561 = vmatpush1.xpose.msra.mxu0 0.0
        %1562 = vmatprep.subr.mxu0 0.0
        %1563 = vmatpush1.xpose.msra.mxu0 0.0
        %1564 = vmatprep.subr.mxu0 0.0
        %1565 = vmatpush1.xpose.msra.mxu0 0.0
        %1566 = vmatprep.subr.mxu0 0.0
        %1567 = vmatpush1.xpose.msra.mxu0 0.0
        %1568 = vmatprep.subr.mxu0 0.0
        %1569 = vmatpush1.xpose.msra.mxu0 0.0
        %1570 = vmatprep.subr.mxu0 0.0
        %1571 = vmatpush1.xpose.msra.mxu0 0.0
        %1572 = vmatprep.subr.mxu0 0.0
        %1573 = vmatpush1.xpose.msra.mxu0 0.0
        %1574 = vmatprep.subr.mxu0 0.0
        %1575 = vmatpush1.xpose.msra.mxu0 0.0
        %1576 = vmatprep.subr.mxu0 0.0
        %1577 = vmatpush1.xpose.msra.mxu0 0.0
        %1578 = vmatprep.subr.mxu0 0.0
        %1579 = vmatpush1.xpose.msra.mxu0 0.0
        %1580 = vmatprep.subr.mxu0 0.0
        %1581 = vmatpush1.xpose.msra.mxu0 0.0
        %1582 = vmatprep.subr.mxu0 0.0
        %1583 = vmatpush1.xpose.msra.mxu0 0.0
        %1584 = vmatprep.subr.mxu0 0.0
        %1585 = vmatpush1.xpose.msra.mxu0 0.0
        %1586 = vmatprep.subr.mxu0 0.0
        %1587 = vmatpush1.xpose.msra.mxu0 0.0
        %1588 = vmatprep.subr.mxu0 0.0
        %1589 = vmatpush1.xpose.msra.mxu0 0.0
        %1590 = vmatprep.subr.mxu0 0.0
        %1591 = vmatpush1.xpose.msra.mxu0 0.0
        %1592 = vmatprep.subr.mxu0 0.0
        %1593 = vmatpush1.xpose.msra.mxu0 0.0
        %1594 = vmatprep.subr.mxu0 0.0
        %1595 = vmatpush1.xpose.msra.mxu0 0.0
        %1596 = vmatprep.subr.mxu0 0.0
        %1597 = vmatpush1.xpose.msra.mxu0 0.0
        %1598 = vmatprep.subr.mxu0 0.0
        %1599 = vmatpush1.xpose.msra.mxu0 0.0
        %1600 = vmatprep.subr.mxu0 0.0
        %1601 = vmatpush1.xpose.msra.mxu0 0.0
        %1602 = vmatprep.subr.mxu0 0.0
        %1603 = vmatpush1.xpose.msra.mxu0 0.0
        %1604 = vmatprep.subr.mxu0 0.0
        %1605 = vmatpush1.xpose.msra.mxu0 0.0
        %1606 = vmatprep.subr.mxu0 0.0
        %1607 = vmatpush1.xpose.msra.mxu0 0.0
        %1608 = vmatprep.subr.mxu0 0.0
        %1609 = vmatpush1.xpose.msra.mxu0 0.0
        %1610 = vmatprep.mubr.f32.mxu0 0.0
        %1611 = vmatmul.mubr.f32.gmra.mrb[0].mxu0 %v1542
        %v1612 = vpop.f32.mrb[0].mxu0
        %v1613 = vadd.f32 0.0, %v1612
        %v1614 = vpop.f32.mrb[0].mxu0
        %1615 = vdwg.mxu0
        %v1616 = vsel %vm1113, %v1613, -inf
        %1617 = vmax.xlane.f32.xlu0 %v1616
        %v1618 = vpop.xlane.xlu0 %1617
        %v1619 = vsub.f32 %v1613, %v1618
        %v1620 = vmul.f32 %v1619, 1.442695
        %v1621 = vpow.pop %v1620
        %v1622 = vsel %vm1113, %v1621, 0.0
        %1623 = vadd.xlane.f32.xlu0 %v1622
        %v1624 = vpop.xlane.xlu0 %1623
        %v1625 = vrcp.pop %v1624
        %v1626 = vmul.f32 %v1621, %v1625
        %1627 = vrot.lane.b32.xlu0 %v1032, 48
        %v1628 = vpop.permute.xlu0 %1627
        %v1631 = vsel %vm1113, %v1626, 0
        %1633 = vmatprep.subr.mxu0 0.0
        %1634 = vmatpush1.msra.mxu0 %v1628
        %1635 = vmatprep.subr.mxu0 0.0
        %1636 = vmatpush1.msra.mxu0 0.0
        %1637 = vmatprep.subr.mxu0 0.0
        %1638 = vmatpush1.msra.mxu0 0.0
        %1639 = vmatprep.subr.mxu0 0.0
        %1640 = vmatpush1.msra.mxu0 0.0
        %1641 = vmatprep.subr.mxu0 0.0
        %1642 = vmatpush1.msra.mxu0 0.0
        %1643 = vmatprep.subr.mxu0 0.0
        %1644 = vmatpush1.msra.mxu0 0.0
        %1645 = vmatprep.subr.mxu0 0.0
        %1646 = vmatpush1.msra.mxu0 0.0
        %1647 = vmatprep.subr.mxu0 0.0
        %1648 = vmatpush1.msra.mxu0 0.0
        %1649 = vmatprep.subr.mxu0 0.0
        %1650 = vmatpush1.msra.mxu0 0.0
        %1651 = vmatprep.subr.mxu0 0.0
        %1652 = vmatpush1.msra.mxu0 0.0
        %1653 = vmatprep.subr.mxu0 0.0
        %1654 = vmatpush1.msra.mxu0 0.0
        %1655 = vmatprep.subr.mxu0 0.0
        %1656 = vmatpush1.msra.mxu0 0.0
        %1657 = vmatprep.subr.mxu0 0.0
        %1658 = vmatpush1.msra.mxu0 0.0
        %1659 = vmatprep.subr.mxu0 0.0
        %1660 = vmatpush1.msra.mxu0 0.0
        %1661 = vmatprep.subr.mxu0 0.0
        %1662 = vmatpush1.msra.mxu0 0.0
        %1663 = vmatprep.subr.mxu0 0.0
        %1664 = vmatpush1.msra.mxu0 0.0
        %1665 = vmatprep.subr.mxu0 0.0
        %1666 = vmatpush1.msra.mxu0 0.0
        %1667 = vmatprep.subr.mxu0 0.0
        %1668 = vmatpush1.msra.mxu0 0.0
        %1669 = vmatprep.subr.mxu0 0.0
        %1670 = vmatpush1.msra.mxu0 0.0
        %1671 = vmatprep.subr.mxu0 0.0
        %1672 = vmatpush1.msra.mxu0 0.0
        %1673 = vmatprep.subr.mxu0 0.0
        %1674 = vmatpush1.msra.mxu0 0.0
        %1675 = vmatprep.subr.mxu0 0.0
        %1676 = vmatpush1.msra.mxu0 0.0
        %1677 = vmatprep.subr.mxu0 0.0
        %1678 = vmatpush1.msra.mxu0 0.0
        %1679 = vmatprep.subr.mxu0 0.0
        %1680 = vmatpush1.msra.mxu0 0.0
        %1681 = vmatprep.subr.mxu0 0.0
        %1682 = vmatpush1.msra.mxu0 0.0
        %1683 = vmatprep.subr.mxu0 0.0
        %1684 = vmatpush1.msra.mxu0 0.0
        %1685 = vmatprep.subr.mxu0 0.0
        %1686 = vmatpush1.msra.mxu0 0.0
        %1687 = vmatprep.subr.mxu0 0.0
        %1688 = vmatpush1.msra.mxu0 0.0
        %1689 = vmatprep.subr.mxu0 0.0
        %1690 = vmatpush1.msra.mxu0 0.0
        %1691 = vmatprep.subr.mxu0 0.0
        %1692 = vmatpush1.msra.mxu0 0.0
        %1693 = vmatprep.subr.mxu0 0.0
        %1694 = vmatpush1.msra.mxu0 0.0
        %1695 = vmatprep.subr.mxu0 0.0
        %1696 = vmatpush1.msra.mxu0 0.0
        %1697 = vmatprep.mubr.f32.mxu0 0.0
        %1698 = vmatmul.mubr.f32.gmra.mrb[0].mxu0 %v1631
        %v1699 = vpop.f32.mrb[0].mxu0
        %v1700 = vadd.f32 0.0, %v1699
        %v1701 = vpop.f32.mrb[0].mxu0
        %1702 = vdwg.mxu0
        %1704 = vrot.lane.b32.xlu0 %v1700, 16
        %v1705 = vpop.permute.xlu0 %1704
        %1707 = vst.msk [vmem:[#allocation3 + $0x8] sm:$0xff] %vm1371, %v1705
        %v1708 = vld [vmem:[#allocation3] sm:$0xff]
        %v1709 = vld [vmem:[#allocation3 + $0x8] sm:$0xff]
        %v1710 = vld [vmem:[%s756] sm:$0xff]
        %v1711 = vld [vmem:[%s756 + $0x8] sm:$0xff]
        %v1712 = vld [vmem:[%s756 + $0x10] sm:$0xff]
        %v1713 = vld [vmem:[%s756 + $0x18] sm:$0xff]
        %v1714 = vld [vmem:[%s759] sm:$0x1]
        %v1716 = vlaneseq
        %v1717 = vshrl.u32 %v1716, 7
        %v1718 = vsub.s32 0, %v1717
        %v1719 = vrot.slane %v1714, %v1718
        %v1722 = vsel %vm801, %v1708, 0
        %v1725 = vsel %vm801, %v1709, 0
        %1727 = vmatprep.subr.mxu0 0.0
        %1728 = vmatpush1.msra.mxu0 %v1710
        %1729 = vmatprep.subr.mxu0 0.0
        %1730 = vmatpush1.msra.mxu0 %v1711
        %1731 = vmatprep.subr.mxu0 0.0
        %1732 = vmatpush1.msra.mxu0 %v1712
        %1733 = vmatprep.subr.mxu0 0.0
        %1734 = vmatpush1.msra.mxu0 %v1713
        %1735 = vmatprep.subr.mxu0 0.0
        %1736 = vmatpush1.msra.mxu0 0.0
        %1737 = vmatprep.subr.mxu0 0.0
        %1738 = vmatpush1.msra.mxu0 0.0
        %1739 = vmatprep.subr.mxu0 0.0
        %1740 = vmatpush1.msra.mxu0 0.0
        %1741 = vmatprep.subr.mxu0 0.0
        %1742 = vmatpush1.msra.mxu0 0.0
        %1743 = vmatprep.subr.mxu0 0.0
        %1744 = vmatpush1.msra.mxu0 0.0
        %1745 = vmatprep.subr.mxu0 0.0
        %1746 = vmatpush1.msra.mxu0 0.0
        %1747 = vmatprep.subr.mxu0 0.0
        %1748 = vmatpush1.msra.mxu0 0.0
        %1749 = vmatprep.subr.mxu0 0.0
        %1750 = vmatpush1.msra.mxu0 0.0
        %1751 = vmatprep.subr.mxu0 0.0
        %1752 = vmatpush1.msra.mxu0 0.0
        %1753 = vmatprep.subr.mxu0 0.0
        %1754 = vmatpush1.msra.mxu0 0.0
        %1755 = vmatprep.subr.mxu0 0.0
        %1756 = vmatpush1.msra.mxu0 0.0
        %1757 = vmatprep.subr.mxu0 0.0
        %1758 = vmatpush1.msra.mxu0 0.0
        %1759 = vmatprep.subr.mxu0 0.0
        %1760 = vmatpush1.msra.mxu0 0.0
        %1761 = vmatprep.subr.mxu0 0.0
        %1762 = vmatpush1.msra.mxu0 0.0
        %1763 = vmatprep.subr.mxu0 0.0
        %1764 = vmatpush1.msra.mxu0 0.0
        %1765 = vmatprep.subr.mxu0 0.0
        %1766 = vmatpush1.msra.mxu0 0.0
        %1767 = vmatprep.subr.mxu0 0.0
        %1768 = vmatpush1.msra.mxu0 0.0
        %1769 = vmatprep.subr.mxu0 0.0
        %1770 = vmatpush1.msra.mxu0 0.0
        %1771 = vmatprep.subr.mxu0 0.0
        %1772 = vmatpush1.msra.mxu0 0.0
        %1773 = vmatprep.subr.mxu0 0.0
        %1774 = vmatpush1.msra.mxu0 0.0
        %1775 = vmatprep.subr.mxu0 0.0
        %1776 = vmatpush1.msra.mxu0 0.0
        %1777 = vmatprep.subr.mxu0 0.0
        %1778 = vmatpush1.msra.mxu0 0.0
        %1779 = vmatprep.subr.mxu0 0.0
        %1780 = vmatpush1.msra.mxu0 0.0
        %1781 = vmatprep.subr.mxu0 0.0
        %1782 = vmatpush1.msra.mxu0 0.0
        %1783 = vmatprep.subr.mxu0 0.0
        %1784 = vmatpush1.msra.mxu0 0.0
        %1785 = vmatprep.subr.mxu0 0.0
        %1786 = vmatpush1.msra.mxu0 0.0
        %1787 = vmatprep.subr.mxu0 0.0
        %1788 = vmatpush1.msra.mxu0 0.0
        %1789 = vmatprep.subr.mxu0 0.0
        %1790 = vmatpush1.msra.mxu0 0.0
        %1791 = vmatprep.mubr.f32.mxu0 0.0
        %1792 = vmatmul.mubr.f32.gmra.mrb[0].mxu0 %v1722
        %v1793 = vpop.f32.mrb[0].mxu0
        %v1794 = vadd.f32 %v1719, %v1793
        %v1795 = vpop.f32.mrb[0].mxu0
        %1796 = vmatprep.mubr.f32.mxu0 0.0
        %1797 = vmatmul.mubr.f32.gmra.mrb[0].mxu0 %v1725
        %v1798 = vpop.f32.mrb[0].mxu0
        %v1799 = vadd.f32 %v1719, %v1798
        %v1800 = vpop.f32.mrb[0].mxu0
        %1801 = vdwg.mxu0
        %v1802 = vadd.f32 %v1794, %v941
        %v1803 = vadd.f32 %v1799, %v942
        %v1804 = vld [vmem:[%s762] sm:$0x1]
        %v1805 = vld [vmem:[%s765] sm:$0x1]
        %v1806 = vsel %vm801, %v1802, 0.0
        %1807 = vadd.xlane.f32.xlu0 %v1806
        %v1808 = vpop.xlane.xlu0 %1807
        %v1809 = vsel %vm801, %v1803, 0.0
        %1810 = vadd.xlane.f32.xlu0 %v1809
        %v1811 = vpop.xlane.xlu0 %1810
        %v1812 = vrcp.pop 32.0
        %v1813 = vmul.f32 %v1808, %v1812
        %v1814 = vmul.f32 %v1811, %v1812
        %v1815 = vsub.f32 %v1802, %v1813
        %v1816 = vsub.f32 %v1803, %v1814
        %v1817 = vmul.f32 %v1815, %v1815
        %v1818 = vmul.f32 %v1816, %v1816
        %v1819 = vsel %vm801, %v1817, 0.0
        %1820 = vadd.xlane.f32.xlu0 %v1819
        %v1821 = vpop.xlane.xlu0 %1820
        %v1822 = vsel %vm801, %v1818, 0.0
        %1823 = vadd.xlane.f32.xlu0 %v1822
        %v1824 = vpop.xlane.xlu0 %1823
        %v1825 = vmul.f32 %v1821, %v1812
        %v1826 = vmul.f32 %v1824, %v1812
        %v1827 = vadd.f32 %v1825, 1e-12
        %v1828 = vadd.f32 %v1826, 1e-12
        %v1829 = vrsqrt.pop %v1827
        %v1830 = vrsqrt.pop %v1828
        %v1831 = vmul.f32 %v1815, %v1829
        %v1832 = vmul.f32 %v1816, %v1830
        %v1834 = vlaneseq
        %v1835 = vshrl.u32 %v1834, 7
        %v1836 = vsub.s32 0, %v1835
        %v1837 = vrot.slane %v1804, %v1836
        %v1839 = vmul.f32 %v1831, %v1837
        %v1840 = vmul.f32 %v1832, %v1837
        %v1842 = vlaneseq
        %v1843 = vshrl.u32 %v1842, 7
        %v1844 = vsub.s32 0, %v1843
        %v1845 = vrot.slane %v1805, %v1844
        %v1847 = vadd.f32 %v1839, %v1845
        %v1848 = vadd.f32 %v1840, %v1845
        %v1849 = vld [vmem:[%s770] sm:$0xff]
        %v1850 = vld [vmem:[%s770 + $0x8] sm:$0xff]
        %v1851 = vld [vmem:[%s770 + $0x10] sm:$0xff]
        %v1852 = vld [vmem:[%s770 + $0x18] sm:$0xff]
        %v1853 = vld [vmem:[%s773] sm:$0x1]
        %v1855 = vlaneseq
        %v1856 = vshrl.u32 %v1855, 7
        %v1857 = vsub.s32 0, %v1856
        %v1858 = vrot.slane %v1853, %v1857
        %v1861 = vsel %vm801, %v1847, 0
        %v1864 = vsel %vm801, %v1848, 0
        %1866 = vmatprep.subr.mxu0 0.0
        %1867 = vmatpush1.msra.mxu0 %v1849
        %1868 = vmatprep.subr.mxu0 0.0
        %1869 = vmatpush1.msra.mxu0 %v1850
        %1870 = vmatprep.subr.mxu0 0.0
        %1871 = vmatpush1.msra.mxu0 %v1851
        %1872 = vmatprep.subr.mxu0 0.0
        %1873 = vmatpush1.msra.mxu0 %v1852
        %1874 = vmatprep.subr.mxu0 0.0
        %1875 = vmatpush1.msra.mxu0 0.0
        %1876 = vmatprep.subr.mxu0 0.0
        %1877 = vmatpush1.msra.mxu0 0.0
        %1878 = vmatprep.subr.mxu0 0.0
        %1879 = vmatpush1.msra.mxu0 0.0
        %1880 = vmatprep.subr.mxu0 0.0
        %1881 = vmatpush1.msra.mxu0 0.0
        %1882 = vmatprep.subr.mxu0 0.0
        %1883 = vmatpush1.msra.mxu0 0.0
        %1884 = vmatprep.subr.mxu0 0.0
        %1885 = vmatpush1.msra.mxu0 0.0
        %1886 = vmatprep.subr.mxu0 0.0
        %1887 = vmatpush1.msra.mxu0 0.0
        %1888 = vmatprep.subr.mxu0 0.0
        %1889 = vmatpush1.msra.mxu0 0.0
        %1890 = vmatprep.subr.mxu0 0.0
        %1891 = vmatpush1.msra.mxu0 0.0
        %1892 = vmatprep.subr.mxu0 0.0
        %1893 = vmatpush1.msra.mxu0 0.0
        %1894 = vmatprep.subr.mxu0 0.0
        %1895 = vmatpush1.msra.mxu0 0.0
        %1896 = vmatprep.subr.mxu0 0.0
        %1897 = vmatpush1.msra.mxu0 0.0
        %1898 = vmatprep.subr.mxu0 0.0
        %1899 = vmatpush1.msra.mxu0 0.0
        %1900 = vmatprep.subr.mxu0 0.0
        %1901 = vmatpush1.msra.mxu0 0.0
        %1902 = vmatprep.subr.mxu0 0.0
        %1903 = vmatpush1.msra.mxu0 0.0
        %1904 = vmatprep.subr.mxu0 0.0
        %1905 = vmatpush1.msra.mxu0 0.0
        %1906 = vmatprep.subr.mxu0 0.0
        %1907 = vmatpush1.msra.mxu0 0.0
        %1908 = vmatprep.subr.mxu0 0.0
        %1909 = vmatpush1.msra.mxu0 0.0
        %1910 = vmatprep.subr.mxu0 0.0
        %1911 = vmatpush1.msra.mxu0 0.0
        %1912 = vmatprep.subr.mxu0 0.0
        %1913 = vmatpush1.msra.mxu0 0.0
        %1914 = vmatprep.subr.mxu0 0.0
        %1915 = vmatpush1.msra.mxu0 0.0
        %1916 = vmatprep.subr.mxu0 0.0
        %1917 = vmatpush1.msra.mxu0 0.0
        %1918 = vmatprep.subr.mxu0 0.0
        %1919 = vmatpush1.msra.mxu0 0.0
        %1920 = vmatprep.subr.mxu0 0.0
        %1921 = vmatpush1.msra.mxu0 0.0
        %1922 = vmatprep.subr.mxu0 0.0
        %1923 = vmatpush1.msra.mxu0 0.0
        %1924 = vmatprep.subr.mxu0 0.0
        %1925 = vmatpush1.msra.mxu0 0.0
        %1926 = vmatprep.subr.mxu0 0.0
        %1927 = vmatpush1.msra.mxu0 0.0
        %1928 = vmatprep.subr.mxu0 0.0
        %1929 = vmatpush1.msra.mxu0 0.0
        %1930 = vmatprep.mubr.f32.mxu0 0.0
        %1931 = vmatmul.mubr.f32.gmra.mrb[0].mxu0 %v1861
        %v1932 = vpop.f32.mrb[0].mxu0
        %v1933 = vadd.f32 %v1858, %v1932
        %v1934 = vpop.f32.mrb[0].mxu0
        %1935 = vmatprep.mubr.f32.mxu0 0.0
        %1936 = vmatmul.mubr.f32.gmra.mrb[0].mxu0 %v1864
        %v1937 = vpop.f32.mrb[0].mxu0
        %v1938 = vadd.f32 %v1858, %v1937
        %v1939 = vpop.f32.mrb[0].mxu0
        %1940 = vdwg.mxu0
        %v1941 = vmul.f32 %v1933, %v1933
        %v1942 = vmul.f32 %v1938, %v1938
        %v1943 = vmul.f32 %v1933, %v1941
        %v1944 = vmul.f32 %v1938, %v1942
        %v1945 = vmul.f32 %v1943, 0.044715
        %v1946 = vmul.f32 %v1944, 0.044715
        %v1947 = vadd.f32 %v1933, %v1945
        %v1948 = vadd.f32 %v1938, %v1946
        %v1949 = vmul.f32 %v1947, 0.7978846
        %v1950 = vmul.f32 %v1948, 0.7978846
        %v1951 = vtanh.pop %v1949
        %v1952 = vtanh.pop %v1950
        %v1953 = vadd.f32 %v1951, 1.0
        %v1954 = vadd.f32 %v1952, 1.0
        %v1955 = vmul.f32 %v1953, 0.5
        %v1956 = vmul.f32 %v1954, 0.5
        %v1957 = vmul.f32 %v1933, %v1955
        %v1958 = vmul.f32 %v1938, %v1956
        %v1959 = vld [vmem:[%s778] sm:$0xff]
        %v1960 = vld [vmem:[%s778 + $0x8] sm:$0xff]
        %v1961 = vld [vmem:[%s778 + $0x10] sm:$0xff]
        %v1962 = vld [vmem:[%s778 + $0x18] sm:$0xff]
        %v1963 = vld [vmem:[%s778 + $0x20] sm:$0xff]
        %v1964 = vld [vmem:[%s778 + $0x28] sm:$0xff]
        %v1965 = vld [vmem:[%s778 + $0x30] sm:$0xff]
        %v1966 = vld [vmem:[%s778 + $0x38] sm:$0xff]
        %v1967 = vld [vmem:[%s781] sm:$0x1]
        %v1969 = vlaneseq
        %v1970 = vshrl.u32 %v1969, 7
        %v1971 = vsub.s32 0, %v1970
        %v1972 = vrot.slane %v1967, %v1971
        %vm1974 = vcmask 523264
        %v1976 = vsel %vm1974, %v1957, 0
        %v1979 = vsel %vm1974, %v1958, 0
        %1981 = vmatprep.subr.mxu0 0.0
        %1982 = vmatpush1.msra.mxu0 %v1959
        %1983 = vmatprep.subr.mxu0 0.0
        %1984 = vmatpush1.msra.mxu0 %v1960
        %1985 = vmatprep.subr.mxu0 0.0
        %1986 = vmatpush1.msra.mxu0 %v1961
        %1987 = vmatprep.subr.mxu0 0.0
        %1988 = vmatpush1.msra.mxu0 %v1962
        %1989 = vmatprep.subr.mxu0 0.0
        %1990 = vmatpush1.msra.mxu0 %v1963
        %1991 = vmatprep.subr.mxu0 0.0
        %1992 = vmatpush1.msra.mxu0 %v1964
        %1993 = vmatprep.subr.mxu0 0.0
        %1994 = vmatpush1.msra.mxu0 %v1965
        %1995 = vmatprep.subr.mxu0 0.0
        %1996 = vmatpush1.msra.mxu0 %v1966
        %1997 = vmatprep.subr.mxu0 0.0
        %1998 = vmatpush1.msra.mxu0 0.0
        %1999 = vmatprep.subr.mxu0 0.0
        %2000 = vmatpush1.msra.mxu0 0.0
        %2001 = vmatprep.subr.mxu0 0.0
        %2002 = vmatpush1.msra.mxu0 0.0
        %2003 = vmatprep.subr.mxu0 0.0
        %2004 = vmatpush1.msra.mxu0 0.0
        %2005 = vmatprep.subr.mxu0 0.0
        %2006 = vmatpush1.msra.mxu0 0.0
        %2007 = vmatprep.subr.mxu0 0.0
        %2008 = vmatpush1.msra.mxu0 0.0
        %2009 = vmatprep.subr.mxu0 0.0
        %2010 = vmatpush1.msra.mxu0 0.0
        %2011 = vmatprep.subr.mxu0 0.0
        %2012 = vmatpush1.msra.mxu0 0.0
        %2013 = vmatprep.subr.mxu0 0.0
        %2014 = vmatpush1.msra.mxu0 0.0
        %2015 = vmatprep.subr.mxu0 0.0
        %2016 = vmatpush1.msra.mxu0 0.0
        %2017 = vmatprep.subr.mxu0 0.0
        %2018 = vmatpush1.msra.mxu0 0.0
        %2019 = vmatprep.subr.mxu0 0.0
        %2020 = vmatpush1.msra.mxu0 0.0
        %2021 = vmatprep.subr.mxu0 0.0
        %2022 = vmatpush1.msra.mxu0 0.0
        %2023 = vmatprep.subr.mxu0 0.0
        %2024 = vmatpush1.msra.mxu0 0.0
        %2025 = vmatprep.subr.mxu0 0.0
        %2026 = vmatpush1.msra.mxu0 0.0
        %2027 = vmatprep.subr.mxu0 0.0
        %2028 = vmatpush1.msra.mxu0 0.0
        %2029 = vmatprep.subr.mxu0 0.0
        %2030 = vmatpush1.msra.mxu0 0.0
        %2031 = vmatprep.subr.mxu0 0.0
        %2032 = vmatpush1.msra.mxu0 0.0
        %2033 = vmatprep.subr.mxu0 0.0
        %2034 = vmatpush1.msra.mxu0 0.0
        %2035 = vmatprep.subr.mxu0 0.0
        %2036 = vmatpush1.msra.mxu0 0.0
        %2037 = vmatprep.subr.mxu0 0.0
        %2038 = vmatpush1.msra.mxu0 0.0
        %2039 = vmatprep.subr.mxu0 0.0
        %2040 = vmatpush1.msra.mxu0 0.0
        %2041 = vmatprep.subr.mxu0 0.0
        %2042 = vmatpush1.msra.mxu0 0.0
        %2043 = vmatprep.subr.mxu0 0.0
        %2044 = vmatpush1.msra.mxu0 0.0
        %2045 = vmatprep.mubr.f32.mxu0 0.0
        %2046 = vmatmul.mubr.f32.gmra.mrb[0].mxu0 %v1976
        %v2047 = vpop.f32.mrb[0].mxu0
        %v2048 = vadd.f32 %v1972, %v2047
        %v2049 = vpop.f32.mrb[0].mxu0
        %2050 = vmatprep.mubr.f32.mxu0 0.0
        %2051 = vmatmul.mubr.f32.gmra.mrb[0].mxu0 %v1979
        %v2052 = vpop.f32.mrb[0].mxu0
        %v2053 = vadd.f32 %v1972, %v2052
        %v2054 = vpop.f32.mrb[0].mxu0
        %2055 = vdwg.mxu0
        %v2056 = vadd.f32 %v2048, %v1847
        %v2057 = vadd.f32 %v2053, %v1848
        %v2058 = vld [vmem:[%s784] sm:$0x1]
        %v2059 = vld [vmem:[%s787] sm:$0x1]
        %v2060 = vsel %vm801, %v2056, 0.0
        %2061 = vadd.xlane.f32.xlu0 %v2060
        %v2062 = vpop.xlane.xlu0 %2061
        %v2063 = vsel %vm801, %v2057, 0.0
        %2064 = vadd.xlane.f32.xlu0 %v2063
        %v2065 = vpop.xlane.xlu0 %2064
        %v2066 = vmul.f32 %v2062, %v1812
        %v2067 = vmul.f32 %v2065, %v1812
        %v2068 = vsub.f32 %v2056, %v2066
        %v2069 = vsub.f32 %v2057, %v2067
        %v2070 = vmul.f32 %v2068, %v2068
        %v2071 = vmul.f32 %v2069, %v2069
        %v2072 = vsel %vm801, %v2070, 0.0
        %2073 = vadd.xlane.f32.xlu0 %v2072
        %v2074 = vpop.xlane.xlu0 %2073
        %v2075 = vsel %vm801, %v2071, 0.0
        %2076 = vadd.xlane.f32.xlu0 %v2075
        %v2077 = vpop.xlane.xlu0 %2076
        %v2078 = vmul.f32 %v2074, %v1812
        %v2079 = vmul.f32 %v2077, %v1812
        %v2080 = vadd.f32 %v2078, 1e-12
        %v2081 = vadd.f32 %v2079, 1e-12
        %v2082 = vrsqrt.pop %v2080
        %v2083 = vrsqrt.pop %v2081
        %v2084 = vmul.f32 %v2068, %v2082
        %v2085 = vmul.f32 %v2069, %v2083
        %v2087 = vlaneseq
        %v2088 = vshrl.u32 %v2087, 7
        %v2089 = vsub.s32 0, %v2088
        %v2090 = vrot.slane %v2058, %v2089
        %v2092 = vmul.f32 %v2084, %v2090
        %v2093 = vmul.f32 %v2085, %v2090
        %v2095 = vlaneseq
        %v2096 = vshrl.u32 %v2095, 7
        %v2097 = vsub.s32 0, %v2096
        %v2098 = vrot.slane %v2059, %v2097
        %v2100 = vadd.f32 %v2092, %v2098
        %v2101 = vadd.f32 %v2093, %v2098
        %2102 = vst.msk [vmem:[#allocation2] sm:$0xff] %vm801, %v2100
        %2103 = vst.msk [vmem:[#allocation2 + $0x8] sm:$0xff] %vm801, %v2101
        %p2104 = scmp.eq.s32.totalorder %s35, 1
        // Predicated region
        $region101: #{soft_masked_bert_forward.5} parent=95 // pred_check
          %p2105 = pneg %p2104
        $region102: #{soft_masked_bert_forward.5} parent=95 // pred_check_branch
          %2107 = sbr.rel (%p2105) target = $region104
        $region103: #{soft_masked_bert_forward.5} parent=95 // pred_region
          %v2108 = vld [vmem:[%s3] sm:$0xff]
          %v2109 = vld [vmem:[%s3 + $0x8] sm:$0xff]
          %v2110 = vadd.f32 %v2100, %v2108
          %v2111 = vadd.f32 %v2101, %v2109
          %v2112 = vld [vmem:[%s17] sm:$0xff]
          %v2113 = vld [vmem:[%s17 + $0x8] sm:$0xff]
          %v2114 = vld [vmem:[%s17 + $0x10] sm:$0xff]
          %v2115 = vld [vmem:[%s17 + $0x18] sm:$0xff]
          %v2116 = vld [vmem:[%s18] sm:$0x1]
          %v2118 = vlaneseq
          %v2119 = vshrl.u32 %v2118, 7
          %v2120 = vsub.s32 0, %v2119
          %v2121 = vrot.slane %v2116, %v2120
          %v2124 = vsel %vm801, %v2110, 0
          %v2127 = vsel %vm801, %v2111, 0
          %2129 = vmatprep.subr.mxu0 0.0
          %2130 = vmatpush1.msra.mxu0 %v2112
          %2131 = vmatprep.subr.mxu0 0.0
          %2132 = vmatpush1.msra.mxu0 %v2113
          %2133 = vmatprep.subr.mxu0 0.0
          %2134 = vmatpush1.msra.mxu0 %v2114
          %2135 = vmatprep.subr.mxu0 0.0
          %2136 = vmatpush1.msra.mxu0 %v2115
          %2137 = vmatprep.subr.mxu0 0.0
          %2138 = vmatpush1.msra.mxu0 0.0
          %2139 = vmatprep.subr.mxu0 0.0
          %2140 = vmatpush1.msra.mxu0 0.0
          %2141 = vmatprep.subr.mxu0 0.0
          %2142 = vmatpush1.msra.mxu0 0.0
          %2143 = vmatprep.subr.mxu0 0.0
          %2144 = vmatpush1.msra.mxu0 0.0
          %2145 = vmatprep.subr.mxu0 0.0
          %2146 = vmatpush1.msra.mxu0 0.0
          %2147 = vmatprep.subr.mxu0 0.0
          %2148 = vmatpush1.msra.mxu0 0.0
          %2149 = vmatprep.subr.mxu0 0.0
          %2150 = vmatpush1.msra.mxu0 0.0
          %2151 = vmatprep.subr.mxu0 0.0
          %2152 = vmatpush1.msra.mxu0 0.0
          %2153 = vmatprep.subr.mxu0 0.0
          %2154 = vmatpush1.msra.mxu0 0.0
          %2155 = vmatprep.subr.mxu0 0.0
          %2156 = vmatpush1.msra.mxu0 0.0
          %2157 = vmatprep.subr.mxu0 0.0
          %2158 = vmatpush1.msra.mxu0 0.0
          %2159 = vmatprep.subr.mxu0 0.0
          %2160 = vmatpush1.msra.mxu0 0.0
          %2161 = vmatprep.subr.mxu0 0.0
          %2162 = vmatpush1.msra.mxu0 0.0
          %2163 = vmatprep.subr.mxu0 0.0
          %2164 = vmatpush1.msra.mxu0 0.0
          %2165 = vmatprep.subr.mxu0 0.0
          %2166 = vmatpush1.msra.mxu0 0.0
          %2167 = vmatprep.subr.mxu0 0.0
          %2168 = vmatpush1.msra.mxu0 0.0
          %2169 = vmatprep.subr.mxu0 0.0
          %2170 = vmatpush1.msra.mxu0 0.0
          %2171 = vmatprep.subr.mxu0 0.0
          %2172 = vmatpush1.msra.mxu0 0.0
          %2173 = vmatprep.subr.mxu0 0.0
          %2174 = vmatpush1.msra.mxu0 0.0
          %2175 = vmatprep.subr.mxu0 0.0
          %2176 = vmatpush1.msra.mxu0 0.0
          %2177 = vmatprep.subr.mxu0 0.0
          %2178 = vmatpush1.msra.mxu0 0.0
          %2179 = vmatprep.subr.mxu0 0.0
          %2180 = vmatpush1.msra.mxu0 0.0
          %2181 = vmatprep.subr.mxu0 0.0
          %2182 = vmatpush1.msra.mxu0 0.0
          %2183 = vmatprep.subr.mxu0 0.0
          %2184 = vmatpush1.msra.mxu0 0.0
          %2185 = vmatprep.subr.mxu0 0.0
          %2186 = vmatpush1.msra.mxu0 0.0
          %2187 = vmatprep.subr.mxu0 0.0
          %2188 = vmatpush1.msra.mxu0 0.0
          %2189 = vmatprep.subr.mxu0 0.0
          %2190 = vmatpush1.msra.mxu0 0.0
          %2191 = vmatprep.subr.mxu0 0.0
          %2192 = vmatpush1.msra.mxu0 0.0
          %2193 = vmatprep.mubr.f32.mxu0 0.0
          %2194 = vmatmul.mubr.f32.gmra.mrb[0].mxu0 %v2124
          %v2195 = vpop.f32.mrb[0].mxu0
          %v2196 = vadd.f32 %v2121, %v2195
          %v2197 = vpop.f32.mrb[0].mxu0
          %2198 = vmatprep.mubr.f32.mxu0 0.0
          %2199 = vmatmul.mubr.f32.gmra.mrb[0].mxu0 %v2127
          %v2200 = vpop.f32.mrb[0].mxu0
          %v2201 = vadd.f32 %v2121, %v2200
          %v2202 = vpop.f32.mrb[0].mxu0
          %2203 = vdwg.mxu0
          %2204 = vmax.xlane.f32.xlu0 %v2196
          %v2205 = vpop.xlane.xlu0 %2204
          %2206 = vmax.xlane.f32.xlu0 %v2201
          %v2207 = vpop.xlane.xlu0 %2206
          %v2208 = vsub.f32 %v2196, %v2205
          %v2209 = vsub.f32 %v2201, %v2207
          %v2210 = vmul.f32 %v2208, 1.442695
          %v2211 = vpow.pop %v2210
          %v2212 = vmul.f32 %v2209, 1.442695
          %v2213 = vpow.pop %v2212
          %2214 = vadd.xlane.f32.xlu0 %v2211
          %v2215 = vpop.xlane.xlu0 %2214
          %2216 = vadd.xlane.f32.xlu0 %v2213
          %v2217 = vpop.xlane.xlu0 %2216
          %v2218 = vlog2.pop %v2215
          %v2219 = vmul.f32 %v2218, 0.6931472
          %v2220 = vlog2.pop %v2217
          %v2221 = vmul.f32 %v2220, 0.6931472
          %v2222 = vadd.f32 %v2219, %v2205
          %v2223 = vadd.f32 %v2221, %v2207
          %v2224 = vsub.f32 %v2196, %v2222
          %v2225 = vsub.f32 %v2201, %v2223
          %2226 = vst [vmem:[#allocation5] sm:$0xff] %v2224
          %2227 = vst [vmem:[#allocation5 + $0x8] sm:$0xff] %v2225
        $region104: #{soft_masked_bert_forward.5} parent=95 // pred_fallthru
          _
        // Predicated region
        $region105: #{soft_masked_bert_forward.5} parent=95 // pred_check
          %p2228 = pneg %p507
        $region106: #{soft_masked_bert_forward.5} parent=95 // pred_check_branch
          %2230 = sbr.rel (%p2228) target = $region108
        $region107: #{soft_masked_bert_forward.5} parent=95 // pred_region
          %s2232 = ssub.s32 256, 256
          %2233 = vsyncadd [#allocation6], %s2232
          %s2234 = sshll.u32 [#allocation5], 4
          %s2235 = int_to_ptr.vmem [resolvable:$true] %s2234
          %2240 = dma.vmem_to_hbm [thread:$0]  %s2235, 256, %s19, [#allocation6], 128, 128, 8
        $region108: #{soft_masked_bert_forward.5} parent=95 // pred_fallthru
          _
        // Predicated region
        $region109: #{soft_masked_bert_forward.5} parent=95 // pred_check
          %p2241 = pneg %p528
        $region110: #{soft_masked_bert_forward.5} parent=95 // pred_check_branch
          %2243 = sbr.rel (%p2241) target = $region112
        $region111: #{soft_masked_bert_forward.5} parent=95 // pred_region
          _
        $region112: #{soft_masked_bert_forward.5} parent=95 // pred_fallthru
          _
        // Predicated region
        $region113: #{soft_masked_bert_forward.5} parent=95 // pred_check
          %p2244 = pneg %p507
        $region114: #{soft_masked_bert_forward.5} parent=95 // pred_check_branch
          %2246 = sbr.rel (%p2244) target = $region116
        $region115: #{soft_masked_bert_forward.5} parent=95 // pred_region
          %2247 = dma.done [#allocation6], 256
        $region116: #{soft_masked_bert_forward.5} parent=95 // pred_fallthru
          _
        // Predicated region
        $region117: #{soft_masked_bert_forward.5} parent=95 // pred_check
          %p2248 = pneg %p528
        $region118: #{soft_masked_bert_forward.5} parent=95 // pred_check_branch
          %2250 = sbr.rel (%p2248) target = $region120
        $region119: #{soft_masked_bert_forward.5} parent=95 // pred_region
          _
        $region120: #{soft_masked_bert_forward.5} parent=95 // pred_fallthru
          _
      $region96: #{soft_masked_bert_forward.5} parent=5 // pred_fallthru
        _
      %p2251 = scmp.le.s32.totalorder 2, %s30
      // Predicated region
      $region121: #{soft_masked_bert_forward.5} parent=5 // pred_check
        %p2252 = pneg %p2251
      $region122: #{soft_masked_bert_forward.5} parent=5 // pred_check_branch
        %2254 = sbr.rel (%p2252) target = $region124
      $region123: #{soft_masked_bert_forward.5} parent=5 // pred_region
        %s2255 = ssub.s32 %s30, 2
      $region124: #{soft_masked_bert_forward.5} parent=5 // pred_fallthru
        _
    $region6: #{soft_masked_bert_forward.5} parent=1 // loop_footer
      %s34 = sadd.s32 1, %s30
    $region7: #{soft_masked_bert_forward.5} parent=1 // loop_footer_branch
      %29 = sbr.rel target = $region3
    $region8: #{soft_masked_bert_forward.5} parent=1 // loop_exit
      _
    %2256 = vsyncpa [#allocation6], 1
    %s2257 = scalar_lea.sflag [#allocation6], 1
    %2258 = vsyncpa %s2257, 1

</llo_original>
